<compile_context>
chip_gen: v5e
topology: v5e:2x2
jax: 0.10.0
libtpu: 0.0.40
codegen_flags: <defaults>
</compile_context>

<pallas_src>
import functools

import jax
import jax.numpy as jnp
from jax import lax
from jax.experimental import pallas as pl
from jax.experimental.pallas import tpu as pltpu


def sas_kernel(
    seqs_ref,                      # (TB, T, E) bf16  item_embs(seq)*sqrt(E) + pos_embs
    mask_ref,                      # (TB, T)    f32   1.0 where seq_iid != 0 else 0.0
    ln1_g_ref, ln1_b_ref,          # (1, E) attn layernorm
    wq_ref, bq_ref,                # (E, E) bf16, (1, E) f32   Q projection (pre-transposed)
    wkv_ref, bkv_ref,              # (E, 2E) bf16, (1, 2E) f32 fused K|V projection
    wo_ref, bo_ref,                # (E, E) bf16, (1, E) f32   MHA out-proj (pre-transposed)
    ln2_g_ref, ln2_b_ref,          # (1, E) ffn layernorm
    w1_ref, b1_ref,                # (E, E) bf16, (1, E) f32   conv1 (kernel=1), (in, out)
    w2_ref, b2_ref,                # (E, E) bf16, (1, E) f32   conv2 (kernel=1), (in, out)
    ln3_g_ref, ln3_b_ref,          # (1, E) last layernorm
    pos_hi_ref, neg_hi_ref,        # (TB, T, E) bf16
    out_ref,                       # (TB, 2T) f32   [pos_logits | neg_logits]
):
    f32 = jnp.float32
    bf16 = jnp.bfloat16
    TB, T, E = seqs_ref.shape
    eps = 1e-8

    def layernorm(x, g_ref, b_ref):
        mu = jnp.mean(x, axis=-1, keepdims=True)
        xc = x - mu
        var = jnp.mean(xc * xc, axis=-1, keepdims=True)
        return xc * lax.rsqrt(var + eps) * g_ref[...] + b_ref[...]

    mask = mask_ref[...][:, :, None]                      # (TB, T, 1) f32
    seqs = seqs_ref[...].astype(f32) * mask               # zero out padded positions

    # --- self attention block ---
    q_in = layernorm(seqs, ln1_g_ref, ln1_b_ref)          # query = LN1(seqs), f32

    # flatten to 2-D so the MXU sees one (TB*T, E) x (E, ·) matmul per projection
    seqs2 = seqs.reshape(TB * T, E).astype(bf16)
    qin2 = q_in.reshape(TB * T, E).astype(bf16)

    q = jnp.dot(qin2, wq_ref[...], preferred_element_type=f32) + bq_ref[...]
    kv = jnp.dot(seqs2, wkv_ref[...], preferred_element_type=f32) + bkv_ref[...]
    k = kv[:, :E]
    v = kv[:, E:]

    q3 = q.reshape(TB, T, E).astype(bf16)
    k3 = k.reshape(TB, T, E).astype(bf16)
    v3 = v.reshape(TB, T, E).astype(bf16)

    scale = f32(1.0 / (float(E) ** 0.5))                  # head_dim == E (num_heads = 1)
    scores = jnp.einsum('bqe,bke->bqk', q3, k3,
                        preferred_element_type=f32) * scale

    # causal mask (computed once per kernel invocation); scores stay f32 so -1e30 is safe
    row = lax.broadcasted_iota(jnp.int32, (T, T), 0)
    col = lax.broadcasted_iota(jnp.int32, (T, T), 1)
    causal = col <= row                                   # True = attend
    scores = jnp.where(causal[None, :, :], scores, f32(-1e30))

    m = jnp.max(scores, axis=-1, keepdims=True)
    p = jnp.exp(scores - m)                               # f32 softmax math
    inv_l = pl.reciprocal(jnp.sum(p, axis=-1, keepdims=True), approx=True)  # EUP slot
    attn_out = jnp.einsum('bqk,bke->bqe', p.astype(bf16), v3,
                          preferred_element_type=f32) * inv_l               # (TB,T,E) f32

    mha2 = jnp.dot(attn_out.reshape(TB * T, E).astype(bf16), wo_ref[...],
                   preferred_element_type=f32) + bo_ref[...]
    x = q_in + mha2.reshape(TB, T, E)                     # residual: query + mha_outputs

    # --- FFN block ---
    x = layernorm(x, ln2_g_ref, ln2_b_ref)
    x2 = x.reshape(TB * T, E)
    h = jnp.dot(x2.astype(bf16), w1_ref[...], preferred_element_type=f32) + b1_ref[...]
    h = jnp.maximum(h, 0.0)
    h = jnp.dot(h.astype(bf16), w2_ref[...], preferred_element_type=f32) + b2_ref[...]
    x = x + h.reshape(TB, T, E)                           # residual: LN2 output + conv stack

    # --- final mask + layernorm ---
    x = x * mask
    hu = layernorm(x, ln3_g_ref, ln3_b_ref)

    # --- prediction logits: (hu * hi).sum(-1), one lane-dense (TB, 2T) store ---
    pos_l = jnp.sum(hu * pos_hi_ref[...].astype(f32), axis=-1)   # (TB, T)
    neg_l = jnp.sum(hu * neg_hi_ref[...].astype(f32), axis=-1)   # (TB, T)
    out_ref[...] = jnp.concatenate([pos_l, neg_l], axis=-1)


def _weight_spec(shape):
    nd = len(shape)
    return pl.BlockSpec(shape, lambda i, _n=nd: (0,) * _n)


def _pick_batch_tile(B, want=8):
    # TB must divide B; keep TB a multiple of 8 so 2-D (TB, T) blocks stay tile-aligned.
    if B % want == 0 and want % 8 == 0:
        return want
    return B   # whole-batch fallback for tiny / odd batches


def sas_forward(params, seq, pos, neg, *, batch_tile=8):
    """seq, pos, neg: int32 (B, T).  Returns (pos_logits, neg_logits), each (B, T) f32."""
    B, T = seq.shape
    E = params['item_embs'].shape[1]
    f32 = jnp.float32
    bf16 = jnp.bfloat16

    item_embs = params['item_embs']
    # Embedding lookups + scale + positional embedding + padding mask (JAX glue).
    # TODO(synk): move these gathers into the kernel via PrefetchScalarGridSpec row
    # gathers / manual DMA to avoid the HBM write+read round-trip on three (B,T,E) arrays.
    seqs = item_embs[seq] * (float(E) ** 0.5)
    seqs = seqs + params['posn_embs'][jnp.arange(T)][None, :, :]
    seqs = seqs.astype(bf16)
    mask = (seq != 0).astype(f32)                         # (B, T) lane-dense mask
    pos_hi = item_embs[pos].astype(bf16)
    neg_hi = item_embs[neg].astype(bf16)

    # Weight prep: pre-transpose so every in-kernel contraction is x @ W; fuse K|V.
    in_w = params['in_proj_w']                            # (3E, E)
    in_b = params['in_proj_b']                            # (1, 3E)
    wq_T = in_w[:E].T.astype(bf16)                        # (E, E)
    wkv_T = jnp.concatenate([in_w[E:2 * E].T, in_w[2 * E:].T], axis=1).astype(bf16)  # (E, 2E)
    bq = in_b[:, :E]
    bkv = in_b[:, E:]                                     # (1, 2E) = [bk | bv]
    wo_T = params['out_proj_w'].T.astype(bf16)            # (E, E)

    inputs = (
        seqs, mask,
        params['ln1_g'], params['ln1_b'],
        wq_T, bq, wkv_T, bkv,
        wo_T, params['out_proj_b'],
        params['ln2_g'], params['ln2_b'],
        params['conv1_wT'].astype(bf16), params['conv1_b'],
        params['conv2_wT'].astype(bf16), params['conv2_b'],
        params['ln3_g'], params['ln3_b'],
        pos_hi, neg_hi,
    )

    TB = _pick_batch_tile(B, batch_tile)
    grid = (B // TB,)

    act3_spec = pl.BlockSpec((TB, T, E), lambda i: (i, 0, 0))
    mask_spec = pl.BlockSpec((TB, T), lambda i: (i, 0))
    out_spec = pl.BlockSpec((TB, 2 * T), lambda i: (i, 0))

    in_specs = [
        act3_spec, mask_spec,
        _weight_spec((1, E)), _weight_spec((1, E)),
        _weight_spec((E, E)), _weight_spec((1, E)),
        _weight_spec((E, 2 * E)), _weight_spec((1, 2 * E)),
        _weight_spec((E, E)), _weight_spec((1, E)),
        _weight_spec((1, E)), _weight_spec((1, E)),
        _weight_spec((E, E)), _weight_spec((1, E)),
        _weight_spec((E, E)), _weight_spec((1, E)),
        _weight_spec((1, E)), _weight_spec((1, E)),
        act3_spec, act3_spec,
    ]

    logits = pl.pallas_call(
        sas_kernel,
        grid=grid,
        in_specs=in_specs,
        out_specs=out_spec,
        out_shape=jax.ShapeDtypeStruct((B, 2 * T), f32),
        compiler_params=pltpu.CompilerParams(
            dimension_semantics=("parallel",)),   # batch tiles are independent -> megacore
    )(*inputs)

    return logits[:, :T], logits[:, T:]


def init_params(key, item_num, seq_maxlen, edim):
    ks = jax.random.split(key, 12)
    E = edim
    f32 = jnp.float32

    item_embs = 0.01 * jax.random.normal(ks[0], (item_num, E), f32)
    item_embs = item_embs.at[0].set(0.0)                  # padding_idx=0
    posn_embs = 0.01 * jax.random.normal(ks[1], (seq_maxlen, E), f32)
    posn_embs = posn_embs.at[0].set(0.0)                  # padding_idx=0

    params = dict(
        item_embs=item_embs,
        posn_embs=posn_embs,
        ln1_g=jnp.ones((1, E), f32), ln1_b=jnp.zeros((1, E), f32),
        ln2_g=jnp.ones((1, E), f32), ln2_b=jnp.zeros((1, E), f32),
        ln3_g=jnp.ones((1, E), f32), ln3_b=jnp.zeros((1, E), f32),
        in_proj_w=0.05 * jax.random.normal(ks[2], (3 * E, E), f32),
        in_proj_b=0.01 * jax.random.normal(ks[3], (1, 3 * E), f32),
        out_proj_w=0.05 * jax.random.normal(ks[4], (E, E), f32),
        out_proj_b=0.01 * jax.random.normal(ks[5], (1, E), f32),
        # Conv1d(kernel=1) weight (out, in, 1) -> stored pre-transposed as (in, out)
        conv1_wT=0.05 * jax.random.normal(ks[6], (E, E), f32),
        conv1_b=0.01 * jax.random.normal(ks[7], (1, E), f32),
        conv2_wT=0.05 * jax.random.normal(ks[8], (E, E), f32),
        conv2_b=0.01 * jax.random.normal(ks[9], (1, E), f32),
    )
    return params


if __name__ == "__main__":
    B, T, E = 16, 16, 32            # batch tile 8 -> grid=(2,), pipelined over batch
    item_num, user_num = 50, 10

    key = jax.random.PRNGKey(0)
    k_par, k_seq, k_pos, k_neg = jax.random.split(key, 4)

    params = init_params(k_par, item_num, T, E)

    seq = jax.random.randint(k_seq, (B, T), 1, item_num, dtype=jnp.int32)
    seq = seq.at[:, :2].set(0)                  # leading padding to exercise the mask
    pos = jax.random.randint(k_pos, (B, T), 1, item_num, dtype=jnp.int32)
    neg = jax.random.randint(k_neg, (B, T), 1, item_num, dtype=jnp.int32)

    fwd = jax.jit(functools.partial(sas_forward, params))
    pos_logits, neg_logits = fwd(seq, pos, neg)
    jax.block_until_ready((pos_logits, neg_logits))

    assert pos_logits.shape == (B, T) and neg_logits.shape == (B, T)
    assert jnp.all(jnp.isfinite(pos_logits)) and jnp.all(jnp.isfinite(neg_logits))
    print("KERNEL_OK")
</pallas_src>

<mosaic_0001>
module attributes {stable_mosaic.version = 11 : i64} {
  func.func @sas_kernel(%arg0: i32, %arg1: memref<8x16x32xbf16, #tpu.memory_space<vmem>>, %arg2: memref<8x16xf32, #tpu.memory_space<vmem>>, %arg3: memref<1x32xf32, #tpu.memory_space<vmem>>, %arg4: memref<1x32xf32, #tpu.memory_space<vmem>>, %arg5: memref<32x32xbf16, #tpu.memory_space<vmem>>, %arg6: memref<1x32xf32, #tpu.memory_space<vmem>>, %arg7: memref<32x64xbf16, #tpu.memory_space<vmem>>, %arg8: memref<1x64xf32, #tpu.memory_space<vmem>>, %arg9: memref<32x32xbf16, #tpu.memory_space<vmem>>, %arg10: memref<1x32xf32, #tpu.memory_space<vmem>>, %arg11: memref<1x32xf32, #tpu.memory_space<vmem>>, %arg12: memref<1x32xf32, #tpu.memory_space<vmem>>, %arg13: memref<32x32xbf16, #tpu.memory_space<vmem>>, %arg14: memref<1x32xf32, #tpu.memory_space<vmem>>, %arg15: memref<32x32xbf16, #tpu.memory_space<vmem>>, %arg16: memref<1x32xf32, #tpu.memory_space<vmem>>, %arg17: memref<1x32xf32, #tpu.memory_space<vmem>>, %arg18: memref<1x32xf32, #tpu.memory_space<vmem>>, %arg19: memref<8x16x32xbf16, #tpu.memory_space<vmem>>, %arg20: memref<8x16x32xbf16, #tpu.memory_space<vmem>>, %arg21: memref<8x32xf32, #tpu.memory_space<vmem>>) attributes {dimension_semantics = [#tpu.dimension_semantics<parallel>], iteration_bounds = array<i64: 2>, scalar_prefetch = 0 : i64, scratch_operands = 0 : i64, tpu.core_type = #tpu.core_type<tc>, window_params = [{transform_indices = @transform_0, window_bounds = array<i64: 8, 16, 32>}, {transform_indices = @transform_1, window_bounds = array<i64: 8, 16>}, {pipeline_mode = #tpu.pipeline_mode<synchronous>, transform_indices = @transform_2, window_bounds = array<i64: 1, 32>}, {pipeline_mode = #tpu.pipeline_mode<synchronous>, transform_indices = @transform_3, window_bounds = array<i64: 1, 32>}, {pipeline_mode = #tpu.pipeline_mode<synchronous>, transform_indices = @transform_4, window_bounds = array<i64: 32, 32>}, {pipeline_mode = #tpu.pipeline_mode<synchronous>, transform_indices = @transform_5, window_bounds = array<i64: 1, 32>}, {pipeline_mode = #tpu.pipeline_mode<synchronous>, transform_indices = @transform_6, window_bounds = array<i64: 32, 64>}, {pipeline_mode = #tpu.pipeline_mode<synchronous>, transform_indices = @transform_7, window_bounds = array<i64: 1, 64>}, {pipeline_mode = #tpu.pipeline_mode<synchronous>, transform_indices = @transform_8, window_bounds = array<i64: 32, 32>}, {pipeline_mode = #tpu.pipeline_mode<synchronous>, transform_indices = @transform_9, window_bounds = array<i64: 1, 32>}, {pipeline_mode = #tpu.pipeline_mode<synchronous>, transform_indices = @transform_10, window_bounds = array<i64: 1, 32>}, {pipeline_mode = #tpu.pipeline_mode<synchronous>, transform_indices = @transform_11, window_bounds = array<i64: 1, 32>}, {pipeline_mode = #tpu.pipeline_mode<synchronous>, transform_indices = @transform_12, window_bounds = array<i64: 32, 32>}, {pipeline_mode = #tpu.pipeline_mode<synchronous>, transform_indices = @transform_13, window_bounds = array<i64: 1, 32>}, {pipeline_mode = #tpu.pipeline_mode<synchronous>, transform_indices = @transform_14, window_bounds = array<i64: 32, 32>}, {pipeline_mode = #tpu.pipeline_mode<synchronous>, transform_indices = @transform_15, window_bounds = array<i64: 1, 32>}, {pipeline_mode = #tpu.pipeline_mode<synchronous>, transform_indices = @transform_16, window_bounds = array<i64: 1, 32>}, {pipeline_mode = #tpu.pipeline_mode<synchronous>, transform_indices = @transform_17, window_bounds = array<i64: 1, 32>}, {transform_indices = @transform_18, window_bounds = array<i64: 8, 16, 32>}, {transform_indices = @transform_19, window_bounds = array<i64: 8, 16, 32>}, {transform_indices = @transform_20, window_bounds = array<i64: 8, 32>}]} {
    %c0 = arith.constant 0 : index
    %c0_0 = arith.constant 0 : index
    %0 = vector.load %arg2[%c0, %c0_0] : memref<8x16xf32, #tpu.memory_space<vmem>>, vector<8x16xf32>
    %1 = vector.shape_cast %0 : vector<8x16xf32> to vector<8x16x1xf32>
    %c0_1 = arith.constant 0 : index
    %c0_2 = arith.constant 0 : index
    %c0_3 = arith.constant 0 : index
    %2 = vector.load %arg1[%c0_1, %c0_2, %c0_3] : memref<8x16x32xbf16, #tpu.memory_space<vmem>>, vector<8x16x32xbf16>
    %3 = arith.extf %2 : vector<8x16x32xbf16> to vector<8x16x32xf32>
    %4 = vector.broadcast %1 : vector<8x16x1xf32> to vector<8x16x32xf32>
    %5 = arith.mulf %3, %4 : vector<8x16x32xf32>
    %cst = arith.constant dense<0.000000e+00> : vector<8x16xf32>
    %6 = vector.multi_reduction <add>, %5, %cst [2] : vector<8x16x32xf32> to vector<8x16xf32>
    %7 = vector.shape_cast %6 : vector<8x16xf32> to vector<8x16x1xf32>
    %cst_4 = arith.constant 3.200000e+01 : f32
    %8 = vector.broadcast %cst_4 : f32 to vector<8x16x1xf32>
    %9 = arith.divf %7, %8 : vector<8x16x1xf32>
    %10 = vector.broadcast %9 : vector<8x16x1xf32> to vector<8x16x32xf32>
    %11 = arith.subf %5, %10 : vector<8x16x32xf32>
    %12 = arith.mulf %11, %11 : vector<8x16x32xf32>
    %cst_5 = arith.constant dense<0.000000e+00> : vector<8x16xf32>
    %13 = vector.multi_reduction <add>, %12, %cst_5 [2] : vector<8x16x32xf32> to vector<8x16xf32>
    %14 = vector.shape_cast %13 : vector<8x16xf32> to vector<8x16x1xf32>
    %cst_6 = arith.constant 3.200000e+01 : f32
    %15 = vector.broadcast %cst_6 : f32 to vector<8x16x1xf32>
    %16 = arith.divf %14, %15 : vector<8x16x1xf32>
    %cst_7 = arith.constant 9.99999993E-9 : f32
    %17 = vector.broadcast %cst_7 : f32 to vector<8x16x1xf32>
    %18 = arith.addf %16, %17 : vector<8x16x1xf32>
    %19 = math.rsqrt %18 : vector<8x16x1xf32>
    %20 = vector.broadcast %19 : vector<8x16x1xf32> to vector<8x16x32xf32>
    %21 = arith.mulf %11, %20 : vector<8x16x32xf32>
    %c0_8 = arith.constant 0 : index
    %c0_9 = arith.constant 0 : index
    %22 = vector.load %arg3[%c0_8, %c0_9] : memref<1x32xf32, #tpu.memory_space<vmem>>, vector<1x32xf32>
    %23 = vector.shape_cast %22 : vector<1x32xf32> to vector<1x1x32xf32>
    %24 = vector.broadcast %23 : vector<1x1x32xf32> to vector<8x16x32xf32>
    %25 = arith.mulf %21, %24 : vector<8x16x32xf32>
    %c0_10 = arith.constant 0 : index
    %c0_11 = arith.constant 0 : index
    %26 = vector.load %arg4[%c0_10, %c0_11] : memref<1x32xf32, #tpu.memory_space<vmem>>, vector<1x32xf32>
    %27 = vector.shape_cast %26 : vector<1x32xf32> to vector<1x1x32xf32>
    %28 = vector.broadcast %27 : vector<1x1x32xf32> to vector<8x16x32xf32>
    %29 = arith.addf %25, %28 : vector<8x16x32xf32>
    %30 = vector.shape_cast %5 : vector<8x16x32xf32> to vector<128x32xf32>
    %31 = arith.truncf %30 : vector<128x32xf32> to vector<128x32xbf16>
    %32 = vector.shape_cast %29 : vector<8x16x32xf32> to vector<128x32xf32>
    %33 = arith.truncf %32 : vector<128x32xf32> to vector<128x32xbf16>
    %c0_12 = arith.constant 0 : index
    %c0_13 = arith.constant 0 : index
    %34 = vector.load %arg5[%c0_12, %c0_13] : memref<32x32xbf16, #tpu.memory_space<vmem>>, vector<32x32xbf16>
    %cst_14 = arith.constant dense<0.000000e+00> : vector<128x32xf32>
    %35 = tpu.matmul %33, %34, %cst_14 {dimension_numbers = #tpu.dot_dimension_numbers<[1], [0], [0], [1], [0, 0, 1, 1], [], []>} : vector<128x32xbf16>, vector<32x32xbf16>, vector<128x32xf32> -> vector<128x32xf32>
    %c0_15 = arith.constant 0 : index
    %c0_16 = arith.constant 0 : index
    %36 = vector.load %arg6[%c0_15, %c0_16] : memref<1x32xf32, #tpu.memory_space<vmem>>, vector<1x32xf32>
    %37 = vector.broadcast %36 : vector<1x32xf32> to vector<128x32xf32>
    %38 = arith.addf %35, %37 : vector<128x32xf32>
    %c0_17 = arith.constant 0 : index
    %c0_18 = arith.constant 0 : index
    %39 = vector.load %arg7[%c0_17, %c0_18] : memref<32x64xbf16, #tpu.memory_space<vmem>>, vector<32x64xbf16>
    %cst_19 = arith.constant dense<0.000000e+00> : vector<128x64xf32>
    %40 = tpu.matmul %31, %39, %cst_19 {dimension_numbers = #tpu.dot_dimension_numbers<[1], [0], [0], [1], [0, 0, 1, 1], [], []>} : vector<128x32xbf16>, vector<32x64xbf16>, vector<128x64xf32> -> vector<128x64xf32>
    %c0_20 = arith.constant 0 : index
    %c0_21 = arith.constant 0 : index
    %41 = vector.load %arg8[%c0_20, %c0_21] : memref<1x64xf32, #tpu.memory_space<vmem>>, vector<1x64xf32>
    %42 = vector.broadcast %41 : vector<1x64xf32> to vector<128x64xf32>
    %43 = arith.addf %40, %42 : vector<128x64xf32>
    %44 = vector.extract_strided_slice %43 {offsets = [0, 0], sizes = [128, 32], strides = [1, 1]} : vector<128x64xf32> to vector<128x32xf32>
    %45 = vector.extract_strided_slice %43 {offsets = [0, 32], sizes = [128, 32], strides = [1, 1]} : vector<128x64xf32> to vector<128x32xf32>
    %46 = vector.shape_cast %38 : vector<128x32xf32> to vector<8x16x32xf32>
    %47 = arith.truncf %46 : vector<8x16x32xf32> to vector<8x16x32xbf16>
    %48 = vector.shape_cast %44 : vector<128x32xf32> to vector<8x16x32xf32>
    %49 = arith.truncf %48 : vector<8x16x32xf32> to vector<8x16x32xbf16>
    %50 = vector.shape_cast %45 : vector<128x32xf32> to vector<8x16x32xf32>
    %51 = arith.truncf %50 : vector<8x16x32xf32> to vector<8x16x32xbf16>
    "tpu.trace_start"() <{level = 10 : i32, message = "bqe,bke->bqk"}> : () -> ()
    %cst_22 = arith.constant dense<0.000000e+00> : vector<8x16x16xf32>
    %52 = tpu.matmul %47, %49, %cst_22 {dimension_numbers = #tpu.dot_dimension_numbers<[2], [2], [1], [1], [0, 0, 0, 1, 1, 1], [0], [0]>} : vector<8x16x32xbf16>, vector<8x16x32xbf16>, vector<8x16x16xf32> -> vector<8x16x16xf32>
    "tpu.trace_stop"() : () -> ()
    %cst_23 = arith.constant 0.176776692 : f32
    %53 = vector.broadcast %cst_23 : f32 to vector<8x16x16xf32>
    %54 = arith.mulf %52, %53 : vector<8x16x16xf32>
    %55 = tpu.iota {dimensions = array<i32: 0>} : vector<16x16xi32>
    %56 = tpu.iota {dimensions = array<i32: 1>} : vector<16x16xi32>
    %57 = arith.cmpi sle, %56, %55 : vector<16x16xi32>
    %58 = vector.shape_cast %57 : vector<16x16xi1> to vector<1x16x16xi1>
    %cst_24 = arith.constant -1.000000e+30 : f32
    %59 = vector.shape_cast %58 : vector<1x16x16xi1> to vector<1x16x16xi1>
    %60 = vector.broadcast %59 : vector<1x16x16xi1> to vector<8x16x16xi1>
    %61 = vector.broadcast %cst_24 : f32 to vector<8x16x16xf32>
    %62 = arith.select %60, %54, %61 : vector<8x16x16xi1>, vector<8x16x16xf32>
    %cst_25 = arith.constant dense<0xFF800000> : vector<8x16xf32>
    %63 = vector.multi_reduction <maximumf>, %62, %cst_25 [2] : vector<8x16x16xf32> to vector<8x16xf32>
    %64 = vector.shape_cast %63 : vector<8x16xf32> to vector<8x16x1xf32>
    %65 = vector.broadcast %64 : vector<8x16x1xf32> to vector<8x16x16xf32>
    %66 = arith.subf %62, %65 : vector<8x16x16xf32>
    %67 = math.exp %66 : vector<8x16x16xf32>
    %cst_26 = arith.constant dense<0.000000e+00> : vector<8x16xf32>
    %68 = vector.multi_reduction <add>, %67, %cst_26 [2] : vector<8x16x16xf32> to vector<8x16xf32>
    %69 = vector.shape_cast %68 : vector<8x16xf32> to vector<8x16x1xf32>
    %70 = tpu.reciprocal %69 {approx = true} : vector<8x16x1xf32> -> vector<8x16x1xf32>
    %71 = arith.truncf %67 : vector<8x16x16xf32> to vector<8x16x16xbf16>
    "tpu.trace_start"() <{level = 10 : i32, message = "bqk,bke->bqe"}> : () -> ()
    %cst_27 = arith.constant dense<0.000000e+00> : vector<8x16x32xf32>
    %72 = tpu.matmul %71, %51, %cst_27 {dimension_numbers = #tpu.dot_dimension_numbers<[2], [1], [1], [2], [0, 0, 0, 1, 1, 2], [0], [0]>} : vector<8x16x16xbf16>, vector<8x16x32xbf16>, vector<8x16x32xf32> -> vector<8x16x32xf32>
    "tpu.trace_stop"() : () -> ()
    %73 = vector.broadcast %70 : vector<8x16x1xf32> to vector<8x16x32xf32>
    %74 = arith.mulf %72, %73 : vector<8x16x32xf32>
    %75 = vector.shape_cast %74 : vector<8x16x32xf32> to vector<128x32xf32>
    %76 = arith.truncf %75 : vector<128x32xf32> to vector<128x32xbf16>
    %c0_28 = arith.constant 0 : index
    %c0_29 = arith.constant 0 : index
    %77 = vector.load %arg9[%c0_28, %c0_29] : memref<32x32xbf16, #tpu.memory_space<vmem>>, vector<32x32xbf16>
    %cst_30 = arith.constant dense<0.000000e+00> : vector<128x32xf32>
    %78 = tpu.matmul %76, %77, %cst_30 {dimension_numbers = #tpu.dot_dimension_numbers<[1], [0], [0], [1], [0, 0, 1, 1], [], []>} : vector<128x32xbf16>, vector<32x32xbf16>, vector<128x32xf32> -> vector<128x32xf32>
    %c0_31 = arith.constant 0 : index
    %c0_32 = arith.constant 0 : index
    %79 = vector.load %arg10[%c0_31, %c0_32] : memref<1x32xf32, #tpu.memory_space<vmem>>, vector<1x32xf32>
    %80 = vector.broadcast %79 : vector<1x32xf32> to vector<128x32xf32>
    %81 = arith.addf %78, %80 : vector<128x32xf32>
    %82 = vector.shape_cast %81 : vector<128x32xf32> to vector<8x16x32xf32>
    %83 = arith.addf %29, %82 : vector<8x16x32xf32>
    %cst_33 = arith.constant dense<0.000000e+00> : vector<8x16xf32>
    %84 = vector.multi_reduction <add>, %83, %cst_33 [2] : vector<8x16x32xf32> to vector<8x16xf32>
    %85 = vector.shape_cast %84 : vector<8x16xf32> to vector<8x16x1xf32>
    %cst_34 = arith.constant 3.200000e+01 : f32
    %86 = vector.broadcast %cst_34 : f32 to vector<8x16x1xf32>
    %87 = arith.divf %85, %86 : vector<8x16x1xf32>
    %88 = vector.broadcast %87 : vector<8x16x1xf32> to vector<8x16x32xf32>
    %89 = arith.subf %83, %88 : vector<8x16x32xf32>
    %90 = arith.mulf %89, %89 : vector<8x16x32xf32>
    %cst_35 = arith.constant dense<0.000000e+00> : vector<8x16xf32>
    %91 = vector.multi_reduction <add>, %90, %cst_35 [2] : vector<8x16x32xf32> to vector<8x16xf32>
    %92 = vector.shape_cast %91 : vector<8x16xf32> to vector<8x16x1xf32>
    %cst_36 = arith.constant 3.200000e+01 : f32
    %93 = vector.broadcast %cst_36 : f32 to vector<8x16x1xf32>
    %94 = arith.divf %92, %93 : vector<8x16x1xf32>
    %cst_37 = arith.constant 9.99999993E-9 : f32
    %95 = vector.broadcast %cst_37 : f32 to vector<8x16x1xf32>
    %96 = arith.addf %94, %95 : vector<8x16x1xf32>
    %97 = math.rsqrt %96 : vector<8x16x1xf32>
    %98 = vector.broadcast %97 : vector<8x16x1xf32> to vector<8x16x32xf32>
    %99 = arith.mulf %89, %98 : vector<8x16x32xf32>
    %c0_38 = arith.constant 0 : index
    %c0_39 = arith.constant 0 : index
    %100 = vector.load %arg11[%c0_38, %c0_39] : memref<1x32xf32, #tpu.memory_space<vmem>>, vector<1x32xf32>
    %101 = vector.shape_cast %100 : vector<1x32xf32> to vector<1x1x32xf32>
    %102 = vector.broadcast %101 : vector<1x1x32xf32> to vector<8x16x32xf32>
    %103 = arith.mulf %99, %102 : vector<8x16x32xf32>
    %c0_40 = arith.constant 0 : index
    %c0_41 = arith.constant 0 : index
    %104 = vector.load %arg12[%c0_40, %c0_41] : memref<1x32xf32, #tpu.memory_space<vmem>>, vector<1x32xf32>
    %105 = vector.shape_cast %104 : vector<1x32xf32> to vector<1x1x32xf32>
    %106 = vector.broadcast %105 : vector<1x1x32xf32> to vector<8x16x32xf32>
    %107 = arith.addf %103, %106 : vector<8x16x32xf32>
    %108 = vector.shape_cast %107 : vector<8x16x32xf32> to vector<128x32xf32>
    %109 = arith.truncf %108 : vector<128x32xf32> to vector<128x32xbf16>
    %c0_42 = arith.constant 0 : index
    %c0_43 = arith.constant 0 : index
    %110 = vector.load %arg13[%c0_42, %c0_43] : memref<32x32xbf16, #tpu.memory_space<vmem>>, vector<32x32xbf16>
    %cst_44 = arith.constant dense<0.000000e+00> : vector<128x32xf32>
    %111 = tpu.matmul %109, %110, %cst_44 {dimension_numbers = #tpu.dot_dimension_numbers<[1], [0], [0], [1], [0, 0, 1, 1], [], []>} : vector<128x32xbf16>, vector<32x32xbf16>, vector<128x32xf32> -> vector<128x32xf32>
    %c0_45 = arith.constant 0 : index
    %c0_46 = arith.constant 0 : index
    %112 = vector.load %arg14[%c0_45, %c0_46] : memref<1x32xf32, #tpu.memory_space<vmem>>, vector<1x32xf32>
    %113 = vector.broadcast %112 : vector<1x32xf32> to vector<128x32xf32>
    %114 = arith.addf %111, %113 : vector<128x32xf32>
    %cst_47 = arith.constant 0.000000e+00 : f32
    %115 = vector.broadcast %cst_47 : f32 to vector<128x32xf32>
    %116 = arith.maximumf %114, %115 : vector<128x32xf32>
    %117 = arith.truncf %116 : vector<128x32xf32> to vector<128x32xbf16>
    %c0_48 = arith.constant 0 : index
    %c0_49 = arith.constant 0 : index
    %118 = vector.load %arg15[%c0_48, %c0_49] : memref<32x32xbf16, #tpu.memory_space<vmem>>, vector<32x32xbf16>
    %cst_50 = arith.constant dense<0.000000e+00> : vector<128x32xf32>
    %119 = tpu.matmul %117, %118, %cst_50 {dimension_numbers = #tpu.dot_dimension_numbers<[1], [0], [0], [1], [0, 0, 1, 1], [], []>} : vector<128x32xbf16>, vector<32x32xbf16>, vector<128x32xf32> -> vector<128x32xf32>
    %c0_51 = arith.constant 0 : index
    %c0_52 = arith.constant 0 : index
    %120 = vector.load %arg16[%c0_51, %c0_52] : memref<1x32xf32, #tpu.memory_space<vmem>>, vector<1x32xf32>
    %121 = vector.broadcast %120 : vector<1x32xf32> to vector<128x32xf32>
    %122 = arith.addf %119, %121 : vector<128x32xf32>
    %123 = vector.shape_cast %122 : vector<128x32xf32> to vector<8x16x32xf32>
    %124 = arith.addf %107, %123 : vector<8x16x32xf32>
    %125 = vector.broadcast %1 : vector<8x16x1xf32> to vector<8x16x32xf32>
    %126 = arith.mulf %124, %125 : vector<8x16x32xf32>
    %cst_53 = arith.constant dense<0.000000e+00> : vector<8x16xf32>
    %127 = vector.multi_reduction <add>, %126, %cst_53 [2] : vector<8x16x32xf32> to vector<8x16xf32>
    %128 = vector.shape_cast %127 : vector<8x16xf32> to vector<8x16x1xf32>
    %cst_54 = arith.constant 3.200000e+01 : f32
    %129 = vector.broadcast %cst_54 : f32 to vector<8x16x1xf32>
    %130 = arith.divf %128, %129 : vector<8x16x1xf32>
    %131 = vector.broadcast %130 : vector<8x16x1xf32> to vector<8x16x32xf32>
    %132 = arith.subf %126, %131 : vector<8x16x32xf32>
    %133 = arith.mulf %132, %132 : vector<8x16x32xf32>
    %cst_55 = arith.constant dense<0.000000e+00> : vector<8x16xf32>
    %134 = vector.multi_reduction <add>, %133, %cst_55 [2] : vector<8x16x32xf32> to vector<8x16xf32>
    %135 = vector.shape_cast %134 : vector<8x16xf32> to vector<8x16x1xf32>
    %cst_56 = arith.constant 3.200000e+01 : f32
    %136 = vector.broadcast %cst_56 : f32 to vector<8x16x1xf32>
    %137 = arith.divf %135, %136 : vector<8x16x1xf32>
    %cst_57 = arith.constant 9.99999993E-9 : f32
    %138 = vector.broadcast %cst_57 : f32 to vector<8x16x1xf32>
    %139 = arith.addf %137, %138 : vector<8x16x1xf32>
    %140 = math.rsqrt %139 : vector<8x16x1xf32>
    %141 = vector.broadcast %140 : vector<8x16x1xf32> to vector<8x16x32xf32>
    %142 = arith.mulf %132, %141 : vector<8x16x32xf32>
    %c0_58 = arith.constant 0 : index
    %c0_59 = arith.constant 0 : index
    %143 = vector.load %arg17[%c0_58, %c0_59] : memref<1x32xf32, #tpu.memory_space<vmem>>, vector<1x32xf32>
    %144 = vector.shape_cast %143 : vector<1x32xf32> to vector<1x1x32xf32>
    %145 = vector.broadcast %144 : vector<1x1x32xf32> to vector<8x16x32xf32>
    %146 = arith.mulf %142, %145 : vector<8x16x32xf32>
    %c0_60 = arith.constant 0 : index
    %c0_61 = arith.constant 0 : index
    %147 = vector.load %arg18[%c0_60, %c0_61] : memref<1x32xf32, #tpu.memory_space<vmem>>, vector<1x32xf32>
    %148 = vector.shape_cast %147 : vector<1x32xf32> to vector<1x1x32xf32>
    %149 = vector.broadcast %148 : vector<1x1x32xf32> to vector<8x16x32xf32>
    %150 = arith.addf %146, %149 : vector<8x16x32xf32>
    %c0_62 = arith.constant 0 : index
    %c0_63 = arith.constant 0 : index
    %c0_64 = arith.constant 0 : index
    %151 = vector.load %arg19[%c0_62, %c0_63, %c0_64] : memref<8x16x32xbf16, #tpu.memory_space<vmem>>, vector<8x16x32xbf16>
    %152 = arith.extf %151 : vector<8x16x32xbf16> to vector<8x16x32xf32>
    %153 = arith.mulf %150, %152 : vector<8x16x32xf32>
    %cst_65 = arith.constant dense<0.000000e+00> : vector<8x16xf32>
    %154 = vector.multi_reduction <add>, %153, %cst_65 [2] : vector<8x16x32xf32> to vector<8x16xf32>
    %c0_66 = arith.constant 0 : index
    %c0_67 = arith.constant 0 : index
    %c0_68 = arith.constant 0 : index
    %155 = vector.load %arg20[%c0_66, %c0_67, %c0_68] : memref<8x16x32xbf16, #tpu.memory_space<vmem>>, vector<8x16x32xbf16>
    %156 = arith.extf %155 : vector<8x16x32xbf16> to vector<8x16x32xf32>
    %157 = arith.mulf %150, %156 : vector<8x16x32xf32>
    %cst_69 = arith.constant dense<0.000000e+00> : vector<8x16xf32>
    %158 = vector.multi_reduction <add>, %157, %cst_69 [2] : vector<8x16x32xf32> to vector<8x16xf32>
    %159 = tpu.concatenate %154, %158 in 1 : vector<8x16xf32>, vector<8x16xf32> -> vector<8x32xf32>
    %c0_70 = arith.constant 0 : index
    %c0_71 = arith.constant 0 : index
    %160 = vector.load %arg21[%c0_70, %c0_71] : memref<8x32xf32, #tpu.memory_space<vmem>>, vector<8x32xf32>
    tpu.vector_store %arg21[%c0_70, %c0_71], %159 {strides = array<i32>} : memref<8x32xf32, #tpu.memory_space<vmem>>, vector<8x32xf32>,
    return
  }
  func.func @transform_0(%arg0: i32) -> (i32, i32, i32) {
    %c0_i32 = arith.constant 0 : i32
    %c0_i32_0 = arith.constant 0 : i32
    %c0_i32_1 = arith.constant 0 : i32
    return %arg0, %c0_i32, %c0_i32_0 : i32, i32, i32
  }
  func.func @transform_1(%arg0: i32) -> (i32, i32) {
    %c0_i32 = arith.constant 0 : i32
    %c0_i32_0 = arith.constant 0 : i32
    return %arg0, %c0_i32 : i32, i32
  }
  func.func @transform_2(%arg0: i32) -> (i32, i32) {
    %c0_i32 = arith.constant 0 : i32
    %c0_i32_0 = arith.constant 0 : i32
    %c0_i32_1 = arith.constant 0 : i32
    return %c0_i32, %c0_i32_0 : i32, i32
  }
  func.func @transform_3(%arg0: i32) -> (i32, i32) {
    %c0_i32 = arith.constant 0 : i32
    %c0_i32_0 = arith.constant 0 : i32
    %c0_i32_1 = arith.constant 0 : i32
    return %c0_i32, %c0_i32_0 : i32, i32
  }
  func.func @transform_4(%arg0: i32) -> (i32, i32) {
    %c0_i32 = arith.constant 0 : i32
    %c0_i32_0 = arith.constant 0 : i32
    %c0_i32_1 = arith.constant 0 : i32
    return %c0_i32, %c0_i32_0 : i32, i32
  }
  func.func @transform_5(%arg0: i32) -> (i32, i32) {
    %c0_i32 = arith.constant 0 : i32
    %c0_i32_0 = arith.constant 0 : i32
    %c0_i32_1 = arith.constant 0 : i32
    return %c0_i32, %c0_i32_0 : i32, i32
  }
  func.func @transform_6(%arg0: i32) -> (i32, i32) {
    %c0_i32 = arith.constant 0 : i32
    %c0_i32_0 = arith.constant 0 : i32
    %c0_i32_1 = arith.constant 0 : i32
    return %c0_i32, %c0_i32_0 : i32, i32
  }
  func.func @transform_7(%arg0: i32) -> (i32, i32) {
    %c0_i32 = arith.constant 0 : i32
    %c0_i32_0 = arith.constant 0 : i32
    %c0_i32_1 = arith.constant 0 : i32
    return %c0_i32, %c0_i32_0 : i32, i32
  }
  func.func @transform_8(%arg0: i32) -> (i32, i32) {
    %c0_i32 = arith.constant 0 : i32
    %c0_i32_0 = arith.constant 0 : i32
    %c0_i32_1 = arith.constant 0 : i32
    return %c0_i32, %c0_i32_0 : i32, i32
  }
  func.func @transform_9(%arg0: i32) -> (i32, i32) {
    %c0_i32 = arith.constant 0 : i32
    %c0_i32_0 = arith.constant 0 : i32
    %c0_i32_1 = arith.constant 0 : i32
    return %c0_i32, %c0_i32_0 : i32, i32
  }
  func.func @transform_10(%arg0: i32) -> (i32, i32) {
    %c0_i32 = arith.constant 0 : i32
    %c0_i32_0 = arith.constant 0 : i32
    %c0_i32_1 = arith.constant 0 : i32
    return %c0_i32, %c0_i32_0 : i32, i32
  }
  func.func @transform_11(%arg0: i32) -> (i32, i32) {
    %c0_i32 = arith.constant 0 : i32
    %c0_i32_0 = arith.constant 0 : i32
    %c0_i32_1 = arith.constant 0 : i32
    return %c0_i32, %c0_i32_0 : i32, i32
  }
  func.func @transform_12(%arg0: i32) -> (i32, i32) {
    %c0_i32 = arith.constant 0 : i32
    %c0_i32_0 = arith.constant 0 : i32
    %c0_i32_1 = arith.constant 0 : i32
    return %c0_i32, %c0_i32_0 : i32, i32
  }
  func.func @transform_13(%arg0: i32) -> (i32, i32) {
    %c0_i32 = arith.constant 0 : i32
    %c0_i32_0 = arith.constant 0 : i32
    %c0_i32_1 = arith.constant 0 : i32
    return %c0_i32, %c0_i32_0 : i32, i32
  }
  func.func @transform_14(%arg0: i32) -> (i32, i32) {
    %c0_i32 = arith.constant 0 : i32
    %c0_i32_0 = arith.constant 0 : i32
    %c0_i32_1 = arith.constant 0 : i32
    return %c0_i32, %c0_i32_0 : i32, i32
  }
  func.func @transform_15(%arg0: i32) -> (i32, i32) {
    %c0_i32 = arith.constant 0 : i32
    %c0_i32_0 = arith.constant 0 : i32
    %c0_i32_1 = arith.constant 0 : i32
    return %c0_i32, %c0_i32_0 : i32, i32
  }
  func.func @transform_16(%arg0: i32) -> (i32, i32) {
    %c0_i32 = arith.constant 0 : i32
    %c0_i32_0 = arith.constant 0 : i32
    %c0_i32_1 = arith.constant 0 : i32
    return %c0_i32, %c0_i32_0 : i32, i32
  }
  func.func @transform_17(%arg0: i32) -> (i32, i32) {
    %c0_i32 = arith.constant 0 : i32
    %c0_i32_0 = arith.constant 0 : i32
    %c0_i32_1 = arith.constant 0 : i32
    return %c0_i32, %c0_i32_0 : i32, i32
  }
  func.func @transform_18(%arg0: i32) -> (i32, i32, i32) {
    %c0_i32 = arith.constant 0 : i32
    %c0_i32_0 = arith.constant 0 : i32
    %c0_i32_1 = arith.constant 0 : i32
    return %arg0, %c0_i32, %c0_i32_0 : i32, i32, i32
  }
  func.func @transform_19(%arg0: i32) -> (i32, i32, i32) {
    %c0_i32 = arith.constant 0 : i32
    %c0_i32_0 = arith.constant 0 : i32
    %c0_i32_1 = arith.constant 0 : i32
    return %arg0, %c0_i32, %c0_i32_0 : i32, i32, i32
  }
  func.func @transform_20(%arg0: i32) -> (i32, i32) {
    %c0_i32 = arith.constant 0 : i32
    %c0_i32_0 = arith.constant 0 : i32
    return %arg0, %c0_i32 : i32, i32
  }
}

</mosaic_0001>

<llo_original>
// kernel: sas_forward.1
$region0: #{sas_forward.1}
  #allocation0 [shape = 'u32[]', space=smem, size = 0x4, offset = 0x4, fixed_abs, tag = 'smem constant byte address 0x4 - core index']
  #allocation1 [shape = 'u32[72,128]{1,0:T(1,128)}', space=vmem, size = 0x9000, scoped, tag = 'internal scratch']
  %s0 = inlined_call_operand.vmem [shape: bf16[16,16,32], index: 0, kind: input, shape index: {}]
  %s1 = inlined_call_operand.vmem [shape: f32[16,16], index: 1, kind: input, shape index: {}]
  %s2 = inlined_call_operand.vmem [shape: f32[1,32], index: 2, kind: input, shape index: {}, may-alias: {2,10,16}]
  %s3 = inlined_call_operand.vmem [shape: f32[1,32], index: 3, kind: input, shape index: {}, may-alias: {3,11,17}]
  %s4 = inlined_call_operand.vmem [shape: bf16[32,32], index: 4, kind: input, shape index: {}]
  %s5 = inlined_call_operand.vmem [shape: f32[1,32], index: 5, kind: input, shape index: {}]
  %s6 = inlined_call_operand.vmem [shape: bf16[32,64], index: 6, kind: input, shape index: {}]
  %s7 = inlined_call_operand.vmem [shape: f32[1,64], index: 7, kind: input, shape index: {}]
  %s8 = inlined_call_operand.vmem [shape: bf16[32,32], index: 8, kind: input, shape index: {}]
  %s9 = inlined_call_operand.vmem [shape: f32[1,32], index: 9, kind: input, shape index: {}]
  %s10 = inlined_call_operand.vmem [shape: f32[1,32], index: 10, kind: input, shape index: {}, may-alias: {2,10,16}]
  %s11 = inlined_call_operand.vmem [shape: f32[1,32], index: 11, kind: input, shape index: {}, may-alias: {3,11,17}]
  %s12 = inlined_call_operand.vmem [shape: bf16[32,32], index: 12, kind: input, shape index: {}]
  %s13 = inlined_call_operand.vmem [shape: f32[1,32], index: 13, kind: input, shape index: {}]
  %s14 = inlined_call_operand.vmem [shape: bf16[32,32], index: 14, kind: input, shape index: {}]
  %s15 = inlined_call_operand.vmem [shape: f32[1,32], index: 15, kind: input, shape index: {}]
  %s16 = inlined_call_operand.vmem [shape: f32[1,32], index: 16, kind: input, shape index: {}, may-alias: {2,10,16}]
  %s17 = inlined_call_operand.vmem [shape: f32[1,32], index: 17, kind: input, shape index: {}, may-alias: {3,11,17}]
  %s18 = inlined_call_operand.vmem [shape: bf16[16,16,32], index: 18, kind: input, shape index: {}]
  %s19 = inlined_call_operand.vmem [shape: bf16[16,16,32], index: 19, kind: input, shape index: {}]
  %s20 = inlined_call_operand.vmem [shape: f32[16,32], index: 20, kind: output, shape index: {}]
  %s21 = sld [smem:[#allocation0]]
  $region113: #{sas_forward.1} parent=0
    _
  %s23 = ssub.s32 1, %s21
  %s24 = scalar_select 0, %s23, %s21
  loop: start=0, step=1, limit=4
  $region2: #{sas_forward.1} parent=0 // loop_pre_header
    _
  $region3: #{sas_forward.1} parent=0 // loop_header
    %s26 = sphi 0, %s30
    %p27 = scmp.ge.s32.totalorder %s26, 4
    %s36 = sphi 0, %s38
    %s39 = sphi 0, %s36
    %s40 = sphi 0, %s39
    %s56 = sphi 0, %s40
    %s62 = sphi 0, %s64
    %s65 = sphi 0, %s62
    %s66 = sphi 0, %s65
    %s82 = sphi 0, %s66
    %s86 = sphi 0, %s86
    %s88 = sphi 0, %s86
    %s89 = sphi 0, %s88
    %s103 = sphi 0, %s89
    %s107 = sphi 0, %s107
    %s109 = sphi 0, %s107
    %s110 = sphi 0, %s109
    %s124 = sphi 0, %s110
    %s128 = sphi 0, %s128
    %s130 = sphi 0, %s128
    %s131 = sphi 0, %s130
    %s145 = sphi 0, %s131
    %s149 = sphi 0, %s149
    %s151 = sphi 0, %s149
    %s152 = sphi 0, %s151
    %s166 = sphi 0, %s152
    %s170 = sphi 0, %s170
    %s172 = sphi 0, %s170
    %s173 = sphi 0, %s172
    %s187 = sphi 0, %s173
    %s191 = sphi 0, %s191
    %s193 = sphi 0, %s191
    %s194 = sphi 0, %s193
    %s208 = sphi 0, %s194
    %s212 = sphi 0, %s212
    %s214 = sphi 0, %s212
    %s215 = sphi 0, %s214
    %s229 = sphi 0, %s215
    %s233 = sphi 0, %s233
    %s235 = sphi 0, %s233
    %s236 = sphi 0, %s235
    %s250 = sphi 0, %s236
    %s254 = sphi 0, %s254
    %s256 = sphi 0, %s254
    %s257 = sphi 0, %s256
    %s271 = sphi 0, %s257
    %s275 = sphi 0, %s275
    %s277 = sphi 0, %s275
    %s278 = sphi 0, %s277
    %s292 = sphi 0, %s278
    %s296 = sphi 0, %s296
    %s298 = sphi 0, %s296
    %s299 = sphi 0, %s298
    %s313 = sphi 0, %s299
    %s317 = sphi 0, %s317
    %s319 = sphi 0, %s317
    %s320 = sphi 0, %s319
    %s334 = sphi 0, %s320
    %s338 = sphi 0, %s338
    %s340 = sphi 0, %s338
    %s341 = sphi 0, %s340
    %s355 = sphi 0, %s341
    %s359 = sphi 0, %s359
    %s361 = sphi 0, %s359
    %s362 = sphi 0, %s361
    %s376 = sphi 0, %s362
    %s380 = sphi 0, %s380
    %s382 = sphi 0, %s380
    %s383 = sphi 0, %s382
    %s397 = sphi 0, %s383
    %s401 = sphi 0, %s401
    %s403 = sphi 0, %s401
    %s404 = sphi 0, %s403
    %s418 = sphi 0, %s404
    %s424 = sphi 0, %s426
    %s427 = sphi 0, %s424
    %s428 = sphi 0, %s427
    %s444 = sphi 0, %s428
    %s450 = sphi 0, %s452
    %s453 = sphi 0, %s450
    %s454 = sphi 0, %s453
    %s470 = sphi 0, %s454
    %s476 = sphi 0, %s478
    %s479 = sphi 0, %s476
    %s480 = sphi 0, %s479
    %s496 = sphi 0, %s480
  $region4: #{sas_forward.1} parent=0 // loop_header_branch
    %29 = sbr.rel (%p27) target = $region8
  $region5: #{sas_forward.1} parent=0 // loop_body
    %s31 = ssub.s32 %s26, 1
    %s32 = ssub.s32 %s26, 2
    %s33 = sadd.s32 %s26, 1
    %s34 = ssub.s32 %s26, %s33
    %p35 = scmp.eq.s32.totalorder %s34, 0
    %s37 = sadd.s32 %s36, 1
    %s38 = scalar_select %p35, %s36, %s37
    %p41 = pneg %p35
    %p42 = scmp.eq.s32.totalorder %s26, 1
    %p43 = por %p41, %p42
    %p44 = scmp.ne.s32.totalorder %s36, %s39
    %p45 = scmp.eq.s32.totalorder %s26, 0
    %p46 = por %p44, %p45
    %p47 = scmp.ne.s32.totalorder %s36, %s39
    %p48 = scmp.eq.s32.totalorder %s31, 1
    %p49 = por %p47, %p48
    %p50 = scmp.ne.s32.totalorder %s39, %s40
    %p51 = scmp.eq.s32.totalorder %s31, 0
    %p52 = por %p50, %p51
    %p53 = scmp.ne.s32.totalorder %s39, %s40
    %p54 = scmp.eq.s32.totalorder %s32, 1
    %p55 = por %p53, %p54
    %p57 = scmp.ne.s32.totalorder %s40, %s56
    %p58 = scmp.eq.s32.totalorder %s32, 0
    %p59 = por %p57, %p58
    %s60 = ssub.s32 %s26, %s33
    %p61 = scmp.eq.s32.totalorder %s60, 0
    %s63 = sadd.s32 %s62, 1
    %s64 = scalar_select %p61, %s62, %s63
    %p67 = pneg %p61
    %p68 = scmp.eq.s32.totalorder %s26, 1
    %p69 = por %p67, %p68
    %p70 = scmp.ne.s32.totalorder %s62, %s65
    %p71 = scmp.eq.s32.totalorder %s26, 0
    %p72 = por %p70, %p71
    %p73 = scmp.ne.s32.totalorder %s62, %s65
    %p74 = scmp.eq.s32.totalorder %s31, 1
    %p75 = por %p73, %p74
    %p76 = scmp.ne.s32.totalorder %s65, %s66
    %p77 = scmp.eq.s32.totalorder %s31, 0
    %p78 = por %p76, %p77
    %p79 = scmp.ne.s32.totalorder %s65, %s66
    %p80 = scmp.eq.s32.totalorder %s32, 1
    %p81 = por %p79, %p80
    %p83 = scmp.ne.s32.totalorder %s66, %s82
    %p84 = scmp.eq.s32.totalorder %s32, 0
    %p85 = por %p83, %p84
    %s87 = sadd.s32 %s86, 1
    %p90 = scmp.eq.s32.totalorder %s26, 1
    %p91 = scmp.ne.s32.totalorder %s86, %s88
    %p92 = scmp.eq.s32.totalorder %s26, 0
    %p93 = por %p91, %p92
    %p94 = scmp.ne.s32.totalorder %s86, %s88
    %p95 = scmp.eq.s32.totalorder %s31, 1
    %p96 = por %p94, %p95
    %p97 = scmp.ne.s32.totalorder %s88, %s89
    %p98 = scmp.eq.s32.totalorder %s31, 0
    %p99 = por %p97, %p98
    %p100 = scmp.ne.s32.totalorder %s88, %s89
    %p101 = scmp.eq.s32.totalorder %s32, 1
    %p102 = por %p100, %p101
    %p104 = scmp.ne.s32.totalorder %s89, %s103
    %p105 = scmp.eq.s32.totalorder %s32, 0
    %p106 = por %p104, %p105
    %s108 = sadd.s32 %s107, 1
    %p111 = scmp.eq.s32.totalorder %s26, 1
    %p112 = scmp.ne.s32.totalorder %s107, %s109
    %p113 = scmp.eq.s32.totalorder %s26, 0
    %p114 = por %p112, %p113
    %p115 = scmp.ne.s32.totalorder %s107, %s109
    %p116 = scmp.eq.s32.totalorder %s31, 1
    %p117 = por %p115, %p116
    %p118 = scmp.ne.s32.totalorder %s109, %s110
    %p119 = scmp.eq.s32.totalorder %s31, 0
    %p120 = por %p118, %p119
    %p121 = scmp.ne.s32.totalorder %s109, %s110
    %p122 = scmp.eq.s32.totalorder %s32, 1
    %p123 = por %p121, %p122
    %p125 = scmp.ne.s32.totalorder %s110, %s124
    %p126 = scmp.eq.s32.totalorder %s32, 0
    %p127 = por %p125, %p126
    %s129 = sadd.s32 %s128, 1
    %p132 = scmp.eq.s32.totalorder %s26, 1
    %p133 = scmp.ne.s32.totalorder %s128, %s130
    %p134 = scmp.eq.s32.totalorder %s26, 0
    %p135 = por %p133, %p134
    %p136 = scmp.ne.s32.totalorder %s128, %s130
    %p137 = scmp.eq.s32.totalorder %s31, 1
    %p138 = por %p136, %p137
    %p139 = scmp.ne.s32.totalorder %s130, %s131
    %p140 = scmp.eq.s32.totalorder %s31, 0
    %p141 = por %p139, %p140
    %p142 = scmp.ne.s32.totalorder %s130, %s131
    %p143 = scmp.eq.s32.totalorder %s32, 1
    %p144 = por %p142, %p143
    %p146 = scmp.ne.s32.totalorder %s131, %s145
    %p147 = scmp.eq.s32.totalorder %s32, 0
    %p148 = por %p146, %p147
    %s150 = sadd.s32 %s149, 1
    %p153 = scmp.eq.s32.totalorder %s26, 1
    %p154 = scmp.ne.s32.totalorder %s149, %s151
    %p155 = scmp.eq.s32.totalorder %s26, 0
    %p156 = por %p154, %p155
    %p157 = scmp.ne.s32.totalorder %s149, %s151
    %p158 = scmp.eq.s32.totalorder %s31, 1
    %p159 = por %p157, %p158
    %p160 = scmp.ne.s32.totalorder %s151, %s152
    %p161 = scmp.eq.s32.totalorder %s31, 0
    %p162 = por %p160, %p161
    %p163 = scmp.ne.s32.totalorder %s151, %s152
    %p164 = scmp.eq.s32.totalorder %s32, 1
    %p165 = por %p163, %p164
    %p167 = scmp.ne.s32.totalorder %s152, %s166
    %p168 = scmp.eq.s32.totalorder %s32, 0
    %p169 = por %p167, %p168
    %s171 = sadd.s32 %s170, 1
    %p174 = scmp.eq.s32.totalorder %s26, 1
    %p175 = scmp.ne.s32.totalorder %s170, %s172
    %p176 = scmp.eq.s32.totalorder %s26, 0
    %p177 = por %p175, %p176
    %p178 = scmp.ne.s32.totalorder %s170, %s172
    %p179 = scmp.eq.s32.totalorder %s31, 1
    %p180 = por %p178, %p179
    %p181 = scmp.ne.s32.totalorder %s172, %s173
    %p182 = scmp.eq.s32.totalorder %s31, 0
    %p183 = por %p181, %p182
    %p184 = scmp.ne.s32.totalorder %s172, %s173
    %p185 = scmp.eq.s32.totalorder %s32, 1
    %p186 = por %p184, %p185
    %p188 = scmp.ne.s32.totalorder %s173, %s187
    %p189 = scmp.eq.s32.totalorder %s32, 0
    %p190 = por %p188, %p189
    %s192 = sadd.s32 %s191, 1
    %p195 = scmp.eq.s32.totalorder %s26, 1
    %p196 = scmp.ne.s32.totalorder %s191, %s193
    %p197 = scmp.eq.s32.totalorder %s26, 0
    %p198 = por %p196, %p197
    %p199 = scmp.ne.s32.totalorder %s191, %s193
    %p200 = scmp.eq.s32.totalorder %s31, 1
    %p201 = por %p199, %p200
    %p202 = scmp.ne.s32.totalorder %s193, %s194
    %p203 = scmp.eq.s32.totalorder %s31, 0
    %p204 = por %p202, %p203
    %p205 = scmp.ne.s32.totalorder %s193, %s194
    %p206 = scmp.eq.s32.totalorder %s32, 1
    %p207 = por %p205, %p206
    %p209 = scmp.ne.s32.totalorder %s194, %s208
    %p210 = scmp.eq.s32.totalorder %s32, 0
    %p211 = por %p209, %p210
    %s213 = sadd.s32 %s212, 1
    %p216 = scmp.eq.s32.totalorder %s26, 1
    %p217 = scmp.ne.s32.totalorder %s212, %s214
    %p218 = scmp.eq.s32.totalorder %s26, 0
    %p219 = por %p217, %p218
    %p220 = scmp.ne.s32.totalorder %s212, %s214
    %p221 = scmp.eq.s32.totalorder %s31, 1
    %p222 = por %p220, %p221
    %p223 = scmp.ne.s32.totalorder %s214, %s215
    %p224 = scmp.eq.s32.totalorder %s31, 0
    %p225 = por %p223, %p224
    %p226 = scmp.ne.s32.totalorder %s214, %s215
    %p227 = scmp.eq.s32.totalorder %s32, 1
    %p228 = por %p226, %p227
    %p230 = scmp.ne.s32.totalorder %s215, %s229
    %p231 = scmp.eq.s32.totalorder %s32, 0
    %p232 = por %p230, %p231
    %s234 = sadd.s32 %s233, 1
    %p237 = scmp.eq.s32.totalorder %s26, 1
    %p238 = scmp.ne.s32.totalorder %s233, %s235
    %p239 = scmp.eq.s32.totalorder %s26, 0
    %p240 = por %p238, %p239
    %p241 = scmp.ne.s32.totalorder %s233, %s235
    %p242 = scmp.eq.s32.totalorder %s31, 1
    %p243 = por %p241, %p242
    %p244 = scmp.ne.s32.totalorder %s235, %s236
    %p245 = scmp.eq.s32.totalorder %s31, 0
    %p246 = por %p244, %p245
    %p247 = scmp.ne.s32.totalorder %s235, %s236
    %p248 = scmp.eq.s32.totalorder %s32, 1
    %p249 = por %p247, %p248
    %p251 = scmp.ne.s32.totalorder %s236, %s250
    %p252 = scmp.eq.s32.totalorder %s32, 0
    %p253 = por %p251, %p252
    %s255 = sadd.s32 %s254, 1
    %p258 = scmp.eq.s32.totalorder %s26, 1
    %p259 = scmp.ne.s32.totalorder %s254, %s256
    %p260 = scmp.eq.s32.totalorder %s26, 0
    %p261 = por %p259, %p260
    %p262 = scmp.ne.s32.totalorder %s254, %s256
    %p263 = scmp.eq.s32.totalorder %s31, 1
    %p264 = por %p262, %p263
    %p265 = scmp.ne.s32.totalorder %s256, %s257
    %p266 = scmp.eq.s32.totalorder %s31, 0
    %p267 = por %p265, %p266
    %p268 = scmp.ne.s32.totalorder %s256, %s257
    %p269 = scmp.eq.s32.totalorder %s32, 1
    %p270 = por %p268, %p269
    %p272 = scmp.ne.s32.totalorder %s257, %s271
    %p273 = scmp.eq.s32.totalorder %s32, 0
    %p274 = por %p272, %p273
    %s276 = sadd.s32 %s275, 1
    %p279 = scmp.eq.s32.totalorder %s26, 1
    %p280 = scmp.ne.s32.totalorder %s275, %s277
    %p281 = scmp.eq.s32.totalorder %s26, 0
    %p282 = por %p280, %p281
    %p283 = scmp.ne.s32.totalorder %s275, %s277
    %p284 = scmp.eq.s32.totalorder %s31, 1
    %p285 = por %p283, %p284
    %p286 = scmp.ne.s32.totalorder %s277, %s278
    %p287 = scmp.eq.s32.totalorder %s31, 0
    %p288 = por %p286, %p287
    %p289 = scmp.ne.s32.totalorder %s277, %s278
    %p290 = scmp.eq.s32.totalorder %s32, 1
    %p291 = por %p289, %p290
    %p293 = scmp.ne.s32.totalorder %s278, %s292
    %p294 = scmp.eq.s32.totalorder %s32, 0
    %p295 = por %p293, %p294
    %s297 = sadd.s32 %s296, 1
    %p300 = scmp.eq.s32.totalorder %s26, 1
    %p301 = scmp.ne.s32.totalorder %s296, %s298
    %p302 = scmp.eq.s32.totalorder %s26, 0
    %p303 = por %p301, %p302
    %p304 = scmp.ne.s32.totalorder %s296, %s298
    %p305 = scmp.eq.s32.totalorder %s31, 1
    %p306 = por %p304, %p305
    %p307 = scmp.ne.s32.totalorder %s298, %s299
    %p308 = scmp.eq.s32.totalorder %s31, 0
    %p309 = por %p307, %p308
    %p310 = scmp.ne.s32.totalorder %s298, %s299
    %p311 = scmp.eq.s32.totalorder %s32, 1
    %p312 = por %p310, %p311
    %p314 = scmp.ne.s32.totalorder %s299, %s313
    %p315 = scmp.eq.s32.totalorder %s32, 0
    %p316 = por %p314, %p315
    %s318 = sadd.s32 %s317, 1
    %p321 = scmp.eq.s32.totalorder %s26, 1
    %p322 = scmp.ne.s32.totalorder %s317, %s319
    %p323 = scmp.eq.s32.totalorder %s26, 0
    %p324 = por %p322, %p323
    %p325 = scmp.ne.s32.totalorder %s317, %s319
    %p326 = scmp.eq.s32.totalorder %s31, 1
    %p327 = por %p325, %p326
    %p328 = scmp.ne.s32.totalorder %s319, %s320
    %p329 = scmp.eq.s32.totalorder %s31, 0
    %p330 = por %p328, %p329
    %p331 = scmp.ne.s32.totalorder %s319, %s320
    %p332 = scmp.eq.s32.totalorder %s32, 1
    %p333 = por %p331, %p332
    %p335 = scmp.ne.s32.totalorder %s320, %s334
    %p336 = scmp.eq.s32.totalorder %s32, 0
    %p337 = por %p335, %p336
    %s339 = sadd.s32 %s338, 1
    %p342 = scmp.eq.s32.totalorder %s26, 1
    %p343 = scmp.ne.s32.totalorder %s338, %s340
    %p344 = scmp.eq.s32.totalorder %s26, 0
    %p345 = por %p343, %p344
    %p346 = scmp.ne.s32.totalorder %s338, %s340
    %p347 = scmp.eq.s32.totalorder %s31, 1
    %p348 = por %p346, %p347
    %p349 = scmp.ne.s32.totalorder %s340, %s341
    %p350 = scmp.eq.s32.totalorder %s31, 0
    %p351 = por %p349, %p350
    %p352 = scmp.ne.s32.totalorder %s340, %s341
    %p353 = scmp.eq.s32.totalorder %s32, 1
    %p354 = por %p352, %p353
    %p356 = scmp.ne.s32.totalorder %s341, %s355
    %p357 = scmp.eq.s32.totalorder %s32, 0
    %p358 = por %p356, %p357
    %s360 = sadd.s32 %s359, 1
    %p363 = scmp.eq.s32.totalorder %s26, 1
    %p364 = scmp.ne.s32.totalorder %s359, %s361
    %p365 = scmp.eq.s32.totalorder %s26, 0
    %p366 = por %p364, %p365
    %p367 = scmp.ne.s32.totalorder %s359, %s361
    %p368 = scmp.eq.s32.totalorder %s31, 1
    %p369 = por %p367, %p368
    %p370 = scmp.ne.s32.totalorder %s361, %s362
    %p371 = scmp.eq.s32.totalorder %s31, 0
    %p372 = por %p370, %p371
    %p373 = scmp.ne.s32.totalorder %s361, %s362
    %p374 = scmp.eq.s32.totalorder %s32, 1
    %p375 = por %p373, %p374
    %p377 = scmp.ne.s32.totalorder %s362, %s376
    %p378 = scmp.eq.s32.totalorder %s32, 0
    %p379 = por %p377, %p378
    %s381 = sadd.s32 %s380, 1
    %p384 = scmp.eq.s32.totalorder %s26, 1
    %p385 = scmp.ne.s32.totalorder %s380, %s382
    %p386 = scmp.eq.s32.totalorder %s26, 0
    %p387 = por %p385, %p386
    %p388 = scmp.ne.s32.totalorder %s380, %s382
    %p389 = scmp.eq.s32.totalorder %s31, 1
    %p390 = por %p388, %p389
    %p391 = scmp.ne.s32.totalorder %s382, %s383
    %p392 = scmp.eq.s32.totalorder %s31, 0
    %p393 = por %p391, %p392
    %p394 = scmp.ne.s32.totalorder %s382, %s383
    %p395 = scmp.eq.s32.totalorder %s32, 1
    %p396 = por %p394, %p395
    %p398 = scmp.ne.s32.totalorder %s383, %s397
    %p399 = scmp.eq.s32.totalorder %s32, 0
    %p400 = por %p398, %p399
    %s402 = sadd.s32 %s401, 1
    %p405 = scmp.eq.s32.totalorder %s26, 1
    %p406 = scmp.ne.s32.totalorder %s401, %s403
    %p407 = scmp.eq.s32.totalorder %s26, 0
    %p408 = por %p406, %p407
    %p409 = scmp.ne.s32.totalorder %s401, %s403
    %p410 = scmp.eq.s32.totalorder %s31, 1
    %p411 = por %p409, %p410
    %p412 = scmp.ne.s32.totalorder %s403, %s404
    %p413 = scmp.eq.s32.totalorder %s31, 0
    %p414 = por %p412, %p413
    %p415 = scmp.ne.s32.totalorder %s403, %s404
    %p416 = scmp.eq.s32.totalorder %s32, 1
    %p417 = por %p415, %p416
    %p419 = scmp.ne.s32.totalorder %s404, %s418
    %p420 = scmp.eq.s32.totalorder %s32, 0
    %p421 = por %p419, %p420
    %s422 = ssub.s32 %s26, %s33
    %p423 = scmp.eq.s32.totalorder %s422, 0
    %s425 = sadd.s32 %s424, 1
    %s426 = scalar_select %p423, %s424, %s425
    %p429 = pneg %p423
    %p430 = scmp.eq.s32.totalorder %s26, 1
    %p431 = por %p429, %p430
    %p432 = scmp.ne.s32.totalorder %s424, %s427
    %p433 = scmp.eq.s32.totalorder %s26, 0
    %p434 = por %p432, %p433
    %p435 = scmp.ne.s32.totalorder %s424, %s427
    %p436 = scmp.eq.s32.totalorder %s31, 1
    %p437 = por %p435, %p436
    %p438 = scmp.ne.s32.totalorder %s427, %s428
    %p439 = scmp.eq.s32.totalorder %s31, 0
    %p440 = por %p438, %p439
    %p441 = scmp.ne.s32.totalorder %s427, %s428
    %p442 = scmp.eq.s32.totalorder %s32, 1
    %p443 = por %p441, %p442
    %p445 = scmp.ne.s32.totalorder %s428, %s444
    %p446 = scmp.eq.s32.totalorder %s32, 0
    %p447 = por %p445, %p446
    %s448 = ssub.s32 %s26, %s33
    %p449 = scmp.eq.s32.totalorder %s448, 0
    %s451 = sadd.s32 %s450, 1
    %s452 = scalar_select %p449, %s450, %s451
    %p455 = pneg %p449
    %p456 = scmp.eq.s32.totalorder %s26, 1
    %p457 = por %p455, %p456
    %p458 = scmp.ne.s32.totalorder %s450, %s453
    %p459 = scmp.eq.s32.totalorder %s26, 0
    %p460 = por %p458, %p459
    %p461 = scmp.ne.s32.totalorder %s450, %s453
    %p462 = scmp.eq.s32.totalorder %s31, 1
    %p463 = por %p461, %p462
    %p464 = scmp.ne.s32.totalorder %s453, %s454
    %p465 = scmp.eq.s32.totalorder %s31, 0
    %p466 = por %p464, %p465
    %p467 = scmp.ne.s32.totalorder %s453, %s454
    %p468 = scmp.eq.s32.totalorder %s32, 1
    %p469 = por %p467, %p468
    %p471 = scmp.ne.s32.totalorder %s454, %s470
    %p472 = scmp.eq.s32.totalorder %s32, 0
    %p473 = por %p471, %p472
    %s474 = ssub.s32 %s26, %s33
    %p475 = scmp.eq.s32.totalorder %s474, 0
    %s477 = sadd.s32 %s476, 1
    %s478 = scalar_select %p475, %s476, %s477
    %p481 = pneg %p475
    %p482 = scmp.eq.s32.totalorder %s26, 1
    %p483 = por %p481, %p482
    %p484 = scmp.ne.s32.totalorder %s476, %s479
    %p485 = scmp.eq.s32.totalorder %s26, 0
    %p486 = por %p484, %p485
    %p487 = scmp.ne.s32.totalorder %s476, %s479
    %p488 = scmp.eq.s32.totalorder %s31, 1
    %p489 = por %p487, %p488
    %p490 = scmp.ne.s32.totalorder %s479, %s480
    %p491 = scmp.eq.s32.totalorder %s31, 0
    %p492 = por %p490, %p491
    %p493 = scmp.ne.s32.totalorder %s479, %s480
    %p494 = scmp.eq.s32.totalorder %s32, 1
    %p495 = por %p493, %p494
    %p497 = scmp.ne.s32.totalorder %s480, %s496
    %p498 = scmp.eq.s32.totalorder %s32, 0
    %p499 = por %p497, %p498
    %p500 = scmp.le.s32.totalorder 1, %s26
    %p501 = scmp.lt.s32.totalorder %s26, 3
    %p502 = pnand %p500, %p501
    %p503 = pneg %p502
    // Predicated region
    $region9: #{sas_forward.1} parent=5 // pred_check
      _
    $region10: #{sas_forward.1} parent=5 // pred_check_branch
      %505 = sbr.rel (%p502) target = $region12
    $region11: #{sas_forward.1} parent=5 // pred_region
      %s506 = ssub.s32 %s26, 1
      // Predicated region
      $region13: #{sas_forward.1} parent=11 // pred_check
        %p507 = pneg %p99
      $region14: #{sas_forward.1} parent=11 // pred_check_branch
        %509 = sbr.rel (%p507) target = $region16
      $region15: #{sas_forward.1} parent=11 // pred_region
        _
      $region16: #{sas_forward.1} parent=11 // pred_fallthru
        _
      // Predicated region
      $region17: #{sas_forward.1} parent=11 // pred_check
        %p510 = pneg %p120
      $region18: #{sas_forward.1} parent=11 // pred_check_branch
        %512 = sbr.rel (%p510) target = $region20
      $region19: #{sas_forward.1} parent=11 // pred_region
        _
      $region20: #{sas_forward.1} parent=11 // pred_fallthru
        _
      // Predicated region
      $region21: #{sas_forward.1} parent=11 // pred_check
        %p513 = pneg %p141
      $region22: #{sas_forward.1} parent=11 // pred_check_branch
        %515 = sbr.rel (%p513) target = $region24
      $region23: #{sas_forward.1} parent=11 // pred_region
        _
      $region24: #{sas_forward.1} parent=11 // pred_fallthru
        _
      // Predicated region
      $region25: #{sas_forward.1} parent=11 // pred_check
        %p516 = pneg %p162
      $region26: #{sas_forward.1} parent=11 // pred_check_branch
        %518 = sbr.rel (%p516) target = $region28
      $region27: #{sas_forward.1} parent=11 // pred_region
        _
      $region28: #{sas_forward.1} parent=11 // pred_fallthru
        _
      // Predicated region
      $region29: #{sas_forward.1} parent=11 // pred_check
        %p519 = pneg %p183
      $region30: #{sas_forward.1} parent=11 // pred_check_branch
        %521 = sbr.rel (%p519) target = $region32
      $region31: #{sas_forward.1} parent=11 // pred_region
        _
      $region32: #{sas_forward.1} parent=11 // pred_fallthru
        _
      // Predicated region
      $region33: #{sas_forward.1} parent=11 // pred_check
        %p522 = pneg %p204
      $region34: #{sas_forward.1} parent=11 // pred_check_branch
        %524 = sbr.rel (%p522) target = $region36
      $region35: #{sas_forward.1} parent=11 // pred_region
        _
      $region36: #{sas_forward.1} parent=11 // pred_fallthru
        _
      // Predicated region
      $region37: #{sas_forward.1} parent=11 // pred_check
        %p525 = pneg %p225
      $region38: #{sas_forward.1} parent=11 // pred_check_branch
        %527 = sbr.rel (%p525) target = $region40
      $region39: #{sas_forward.1} parent=11 // pred_region
        _
      $region40: #{sas_forward.1} parent=11 // pred_fallthru
        _
      // Predicated region
      $region41: #{sas_forward.1} parent=11 // pred_check
        %p528 = pneg %p246
      $region42: #{sas_forward.1} parent=11 // pred_check_branch
        %530 = sbr.rel (%p528) target = $region44
      $region43: #{sas_forward.1} parent=11 // pred_region
        _
      $region44: #{sas_forward.1} parent=11 // pred_fallthru
        _
      // Predicated region
      $region45: #{sas_forward.1} parent=11 // pred_check
        %p531 = pneg %p267
      $region46: #{sas_forward.1} parent=11 // pred_check_branch
        %533 = sbr.rel (%p531) target = $region48
      $region47: #{sas_forward.1} parent=11 // pred_region
        _
      $region48: #{sas_forward.1} parent=11 // pred_fallthru
        _
      // Predicated region
      $region49: #{sas_forward.1} parent=11 // pred_check
        %p534 = pneg %p288
      $region50: #{sas_forward.1} parent=11 // pred_check_branch
        %536 = sbr.rel (%p534) target = $region52
      $region51: #{sas_forward.1} parent=11 // pred_region
        _
      $region52: #{sas_forward.1} parent=11 // pred_fallthru
        _
      // Predicated region
      $region53: #{sas_forward.1} parent=11 // pred_check
        %p537 = pneg %p309
      $region54: #{sas_forward.1} parent=11 // pred_check_branch
        %539 = sbr.rel (%p537) target = $region56
      $region55: #{sas_forward.1} parent=11 // pred_region
        _
      $region56: #{sas_forward.1} parent=11 // pred_fallthru
        _
      // Predicated region
      $region57: #{sas_forward.1} parent=11 // pred_check
        %p540 = pneg %p330
      $region58: #{sas_forward.1} parent=11 // pred_check_branch
        %542 = sbr.rel (%p540) target = $region60
      $region59: #{sas_forward.1} parent=11 // pred_region
        _
      $region60: #{sas_forward.1} parent=11 // pred_fallthru
        _
      // Predicated region
      $region61: #{sas_forward.1} parent=11 // pred_check
        %p543 = pneg %p351
      $region62: #{sas_forward.1} parent=11 // pred_check_branch
        %545 = sbr.rel (%p543) target = $region64
      $region63: #{sas_forward.1} parent=11 // pred_region
        _
      $region64: #{sas_forward.1} parent=11 // pred_fallthru
        _
      // Predicated region
      $region65: #{sas_forward.1} parent=11 // pred_check
        %p546 = pneg %p372
      $region66: #{sas_forward.1} parent=11 // pred_check_branch
        %548 = sbr.rel (%p546) target = $region68
      $region67: #{sas_forward.1} parent=11 // pred_region
        _
      $region68: #{sas_forward.1} parent=11 // pred_fallthru
        _
      // Predicated region
      $region69: #{sas_forward.1} parent=11 // pred_check
        %p549 = pneg %p393
      $region70: #{sas_forward.1} parent=11 // pred_check_branch
        %551 = sbr.rel (%p549) target = $region72
      $region71: #{sas_forward.1} parent=11 // pred_region
        _
      $region72: #{sas_forward.1} parent=11 // pred_fallthru
        _
      // Predicated region
      $region73: #{sas_forward.1} parent=11 // pred_check
        %p552 = pneg %p414
      $region74: #{sas_forward.1} parent=11 // pred_check_branch
        %554 = sbr.rel (%p552) target = $region76
      $region75: #{sas_forward.1} parent=11 // pred_region
        _
      $region76: #{sas_forward.1} parent=11 // pred_fallthru
        _
    $region12: #{sas_forward.1} parent=5 // pred_fallthru
      _
    %p555 = scmp.lt.s32.totalorder %s26, 2
    // Predicated region
    $region77: #{sas_forward.1} parent=5 // pred_check
      %p556 = pneg %p555
    $region78: #{sas_forward.1} parent=5 // pred_check_branch
      %558 = sbr.rel (%p556) target = $region80
    $region79: #{sas_forward.1} parent=5 // pred_region
      // Predicated region
      $region81: #{sas_forward.1} parent=79 // pred_check
        %p559 = pneg %p46
      $region82: #{sas_forward.1} parent=79 // pred_check_branch
        %561 = sbr.rel (%p559) target = $region84
      $region83: #{sas_forward.1} parent=79 // pred_region
        %s562 = smul.u32 8, %s26
        %p563 = scmp.lt.s32.totalorder %s562, 15
        %s564 = scalar_select %p563, %s562, 15
        %s565 = smul.addr %s564, 2
        %s566 = smul.addr %s565, 4
        %s567 = scalar_lea.vmem %s0, %s566
        %s568 = smul.u32 8, %s26
      $region84: #{sas_forward.1} parent=79 // pred_fallthru
        _
      // Predicated region
      $region85: #{sas_forward.1} parent=79 // pred_check
        %p569 = pneg %p72
      $region86: #{sas_forward.1} parent=79 // pred_check_branch
        %571 = sbr.rel (%p569) target = $region88
      $region87: #{sas_forward.1} parent=79 // pred_region
        %p572 = scmp.lt.s32.totalorder %s26, 1
        %s573 = scalar_select %p572, %s26, 1
        %s574 = smul.addr %s573, 8
        %s575 = scalar_lea.vmem %s1, %s574
      $region88: #{sas_forward.1} parent=79 // pred_fallthru
        _
      // Predicated region
      $region89: #{sas_forward.1} parent=79 // pred_check
        %p576 = pneg %p434
      $region90: #{sas_forward.1} parent=79 // pred_check_branch
        %578 = sbr.rel (%p576) target = $region92
      $region91: #{sas_forward.1} parent=79 // pred_region
        %s579 = smul.u32 8, %s26
        %p580 = scmp.lt.s32.totalorder %s579, 15
        %s581 = scalar_select %p580, %s579, 15
        %s582 = smul.addr %s581, 2
        %s583 = smul.addr %s582, 4
        %s584 = scalar_lea.vmem %s18, %s583
        %s585 = smul.u32 8, %s26
      $region92: #{sas_forward.1} parent=79 // pred_fallthru
        _
      // Predicated region
      $region93: #{sas_forward.1} parent=79 // pred_check
        %p586 = pneg %p460
      $region94: #{sas_forward.1} parent=79 // pred_check_branch
        %588 = sbr.rel (%p586) target = $region96
      $region95: #{sas_forward.1} parent=79 // pred_region
        %s589 = smul.u32 8, %s26
        %p590 = scmp.lt.s32.totalorder %s589, 15
        %s591 = scalar_select %p590, %s589, 15
        %s592 = smul.addr %s591, 2
        %s593 = smul.addr %s592, 4
        %s594 = scalar_lea.vmem %s19, %s593
        %s595 = smul.u32 8, %s26
      $region96: #{sas_forward.1} parent=79 // pred_fallthru
        _
    $region80: #{sas_forward.1} parent=5 // pred_fallthru
      _
    %p596 = scmp.le.s32.totalorder 1, %s26
    %p597 = scmp.lt.s32.totalorder %s26, 3
    %p598 = pnand %p596, %p597
    %p599 = pneg %p598
    // Predicated region
    $region97: #{sas_forward.1} parent=5 // pred_check
      _
    $region98: #{sas_forward.1} parent=5 // pred_check_branch
      %601 = sbr.rel (%p598) target = $region100
    $region99: #{sas_forward.1} parent=5 // pred_region
      %s602 = ssub.s32 %s26, 1
      %s603 = smul.u32 8, %s31
      %p604 = scmp.lt.s32.totalorder %s603, 15
      %s605 = scalar_select %p604, %s603, 15
      %s606 = smul.addr %s605, 2
      %s607 = smul.addr %s606, 4
      %s608 = scalar_lea.vmem %s0, %s607
      %p609 = pneg %p52
      %p610 = pneg %p49
      %p611 = scmp.lt.s32.totalorder %s31, 1
      %s612 = scalar_select %p611, %s31, 1
      %s613 = smul.addr %s612, 8
      %s614 = scalar_lea.vmem %s1, %s613
      %p615 = pneg %p78
      %p616 = pneg %p75
      %p617 = pneg %p99
      %p618 = pneg %p96
      %p619 = pneg %p120
      %p620 = pneg %p117
      %p621 = pneg %p141
      %p622 = pneg %p138
      %p623 = pneg %p162
      %p624 = pneg %p159
      %p625 = pneg %p183
      %p626 = pneg %p180
      %p627 = pneg %p204
      %p628 = pneg %p201
      %p629 = pneg %p225
      %p630 = pneg %p222
      %p631 = pneg %p246
      %p632 = pneg %p243
      %p633 = pneg %p267
      %p634 = pneg %p264
      %p635 = pneg %p288
      %p636 = pneg %p285
      %p637 = pneg %p309
      %p638 = pneg %p306
      %p639 = pneg %p330
      %p640 = pneg %p327
      %p641 = pneg %p351
      %p642 = pneg %p348
      %p643 = pneg %p372
      %p644 = pneg %p369
      %p645 = pneg %p393
      %p646 = pneg %p390
      %p647 = pneg %p414
      %p648 = pneg %p411
      %s649 = smul.u32 8, %s31
      %p650 = scmp.lt.s32.totalorder %s649, 15
      %s651 = scalar_select %p650, %s649, 15
      %s652 = smul.addr %s651, 2
      %s653 = smul.addr %s652, 4
      %s654 = scalar_lea.vmem %s18, %s653
      %p655 = pneg %p440
      %p656 = pneg %p437
      %s657 = smul.u32 8, %s31
      %p658 = scmp.lt.s32.totalorder %s657, 15
      %s659 = scalar_select %p658, %s657, 15
      %s660 = smul.addr %s659, 2
      %s661 = smul.addr %s660, 4
      %s662 = scalar_lea.vmem %s19, %s661
      %p663 = pneg %p466
      %p664 = pneg %p463
      %p665 = pneg %p492
      %p666 = pneg %p489
      %p667 = scmp.lt.s32.totalorder %s31, 1
      %s668 = scalar_select %p667, %s31, 1
      %s669 = smul.addr %s668, 8
      %s670 = scalar_lea.vmem %s20, %s669
      %s671 = smul.u32 8, %s31
      %p672 = scmp.lt.s32.totalorder %s671, 15
      %s673 = scalar_select %p672, %s671, 15
      %s674 = smul.addr %s673, 2
      %s675 = smul.addr %s674, 4
      %s676 = scalar_lea.vmem %s0, %s675
      %s677 = smul.u32 8, %s31
      %p678 = scmp.lt.s32.totalorder %s31, 1
      %s679 = scalar_select %p678, %s31, 1
      %s680 = smul.addr %s679, 8
      %s681 = scalar_lea.vmem %s1, %s680
      %s682 = smul.u32 8, %s31
      %p683 = scmp.lt.s32.totalorder %s682, 15
      %s684 = scalar_select %p683, %s682, 15
      %s685 = smul.addr %s684, 2
      %s686 = smul.addr %s685, 4
      %s687 = scalar_lea.vmem %s18, %s686
      %s688 = smul.u32 8, %s31
      %s689 = smul.u32 8, %s31
      %p690 = scmp.lt.s32.totalorder %s689, 15
      %s691 = scalar_select %p690, %s689, 15
      %s692 = smul.addr %s691, 2
      %s693 = smul.addr %s692, 4
      %s694 = scalar_lea.vmem %s19, %s693
      %s695 = smul.u32 8, %s31
      %p696 = scmp.lt.s32.totalorder %s31, 1
      %s697 = scalar_select %p696, %s31, 1
      %s698 = smul.addr %s697, 8
      %s699 = scalar_lea.vmem %s20, %s698
      %v701 = vld [vmem:[%s681] sm:$0xff]
      %v702 = vperm.slane %v701, 0
      %v703 = vlaneseq
      %v704 = vshrl.u32 %v703, 7
      %706 = vset.pattern.permute.xlu0 %v704
      %707 = vperm.xlu0 %706, %v702
      %v708 = vpop.permute.xlu0 %707
      %v709 = vlaneseq
      %v710 = vshrl.u32 %v709, 7
      %v711 = vadd.s32 %v710, 8
      %712 = vset.pattern.permute.xlu0 %v711
      %713 = vperm.xlu0 %712, %v702
      %v714 = vpop.permute.xlu0 %713
      %v715 = vperm.slane %v701, 1
      %v716 = vlaneseq
      %v717 = vshrl.u32 %v716, 7
      %719 = vset.pattern.permute.xlu0 %v717
      %720 = vperm.xlu0 %719, %v715
      %v721 = vpop.permute.xlu0 %720
      %v722 = vlaneseq
      %v723 = vshrl.u32 %v722, 7
      %v724 = vadd.s32 %v723, 8
      %725 = vset.pattern.permute.xlu0 %v724
      %726 = vperm.xlu0 %725, %v715
      %v727 = vpop.permute.xlu0 %726
      %v728 = vperm.slane %v701, 2
      %v729 = vlaneseq
      %v730 = vshrl.u32 %v729, 7
      %732 = vset.pattern.permute.xlu0 %v730
      %733 = vperm.xlu0 %732, %v728
      %v734 = vpop.permute.xlu0 %733
      %v735 = vlaneseq
      %v736 = vshrl.u32 %v735, 7
      %v737 = vadd.s32 %v736, 8
      %738 = vset.pattern.permute.xlu0 %v737
      %739 = vperm.xlu0 %738, %v728
      %v740 = vpop.permute.xlu0 %739
      %v741 = vperm.slane %v701, 3
      %v742 = vlaneseq
      %v743 = vshrl.u32 %v742, 7
      %745 = vset.pattern.permute.xlu0 %v743
      %746 = vperm.xlu0 %745, %v741
      %v747 = vpop.permute.xlu0 %746
      %v748 = vlaneseq
      %v749 = vshrl.u32 %v748, 7
      %v750 = vadd.s32 %v749, 8
      %751 = vset.pattern.permute.xlu0 %v750
      %752 = vperm.xlu0 %751, %v741
      %v753 = vpop.permute.xlu0 %752
      %v754 = vperm.slane %v701, 4
      %v755 = vlaneseq
      %v756 = vshrl.u32 %v755, 7
      %758 = vset.pattern.permute.xlu0 %v756
      %759 = vperm.xlu0 %758, %v754
      %v760 = vpop.permute.xlu0 %759
      %v761 = vlaneseq
      %v762 = vshrl.u32 %v761, 7
      %v763 = vadd.s32 %v762, 8
      %764 = vset.pattern.permute.xlu0 %v763
      %765 = vperm.xlu0 %764, %v754
      %v766 = vpop.permute.xlu0 %765
      %v767 = vperm.slane %v701, 5
      %v768 = vlaneseq
      %v769 = vshrl.u32 %v768, 7
      %771 = vset.pattern.permute.xlu0 %v769
      %772 = vperm.xlu0 %771, %v767
      %v773 = vpop.permute.xlu0 %772
      %v774 = vlaneseq
      %v775 = vshrl.u32 %v774, 7
      %v776 = vadd.s32 %v775, 8
      %777 = vset.pattern.permute.xlu0 %v776
      %778 = vperm.xlu0 %777, %v767
      %v779 = vpop.permute.xlu0 %778
      %v780 = vperm.slane %v701, 6
      %v781 = vlaneseq
      %v782 = vshrl.u32 %v781, 7
      %784 = vset.pattern.permute.xlu0 %v782
      %785 = vperm.xlu0 %784, %v780
      %v786 = vpop.permute.xlu0 %785
      %v787 = vlaneseq
      %v788 = vshrl.u32 %v787, 7
      %v789 = vadd.s32 %v788, 8
      %790 = vset.pattern.permute.xlu0 %v789
      %791 = vperm.xlu0 %790, %v780
      %v792 = vpop.permute.xlu0 %791
      %v793 = vperm.slane %v701, 7
      %v794 = vlaneseq
      %v795 = vshrl.u32 %v794, 7
      %797 = vset.pattern.permute.xlu0 %v795
      %798 = vperm.xlu0 %797, %v793
      %v799 = vpop.permute.xlu0 %798
      %v800 = vlaneseq
      %v801 = vshrl.u32 %v800, 7
      %v802 = vadd.s32 %v801, 8
      %803 = vset.pattern.permute.xlu0 %v802
      %804 = vperm.xlu0 %803, %v793
      %v805 = vpop.permute.xlu0 %804
      %v806 = vld [vmem:[%s676] sm:$0xf]
      %v807 = vld [vmem:[%s676 + $0x4] sm:$0xf]
      %v808 = vld [vmem:[%s676 + $0x8] sm:$0xf]
      %v809 = vld [vmem:[%s676 + $0xc] sm:$0xf]
      %v810 = vld [vmem:[%s676 + $0x10] sm:$0xf]
      %v811 = vld [vmem:[%s676 + $0x14] sm:$0xf]
      %v812 = vld [vmem:[%s676 + $0x18] sm:$0xf]
      %v813 = vld [vmem:[%s676 + $0x1c] sm:$0xf]
      %v814 = vld [vmem:[%s676 + $0x20] sm:$0xf]
      %v815 = vld [vmem:[%s676 + $0x24] sm:$0xf]
      %v816 = vld [vmem:[%s676 + $0x28] sm:$0xf]
      %v817 = vld [vmem:[%s676 + $0x2c] sm:$0xf]
      %v818 = vld [vmem:[%s676 + $0x30] sm:$0xf]
      %v819 = vld [vmem:[%s676 + $0x34] sm:$0xf]
      %v820 = vld [vmem:[%s676 + $0x38] sm:$0xf]
      %v821 = vld [vmem:[%s676 + $0x3c] sm:$0xf]
      %v822 = vunpack.c.l.bf16 %v806
      %v823 = vunpack.c.l.bf16 %v807
      %v824 = vunpack.c.l.bf16 %v808
      %v825 = vunpack.c.l.bf16 %v809
      %v826 = vunpack.c.l.bf16 %v810
      %v827 = vunpack.c.l.bf16 %v811
      %v828 = vunpack.c.l.bf16 %v812
      %v829 = vunpack.c.l.bf16 %v813
      %v830 = vunpack.c.l.bf16 %v814
      %v831 = vunpack.c.l.bf16 %v815
      %v832 = vunpack.c.l.bf16 %v816
      %v833 = vunpack.c.l.bf16 %v817
      %v834 = vunpack.c.l.bf16 %v818
      %v835 = vunpack.c.l.bf16 %v819
      %v836 = vunpack.c.l.bf16 %v820
      %v837 = vunpack.c.l.bf16 %v821
      %v838 = vmul.f32 %v822, %v708
      %v839 = vmul.f32 %v823, %v714
      %v840 = vmul.f32 %v824, %v721
      %v841 = vmul.f32 %v825, %v727
      %v842 = vmul.f32 %v826, %v734
      %v843 = vmul.f32 %v827, %v740
      %v844 = vmul.f32 %v828, %v747
      %v845 = vmul.f32 %v829, %v753
      %v846 = vmul.f32 %v830, %v760
      %v847 = vmul.f32 %v831, %v766
      %v848 = vmul.f32 %v832, %v773
      %v849 = vmul.f32 %v833, %v779
      %v850 = vmul.f32 %v834, %v786
      %v851 = vmul.f32 %v835, %v792
      %v852 = vmul.f32 %v836, %v799
      %v853 = vmul.f32 %v837, %v805
      %vm854 = vcmask 261120
      %v855 = vsel %vm854, %v838, 0.0
      %856 = vadd.xlane.f32.xlu0 %v855
      %v857 = vpop.xlane.xlu0 %856
      %v858 = vsel %vm854, %v839, 0.0
      %859 = vadd.xlane.f32.xlu0 %v858
      %v860 = vpop.xlane.xlu0 %859
      %v861 = vsel %vm854, %v840, 0.0
      %862 = vadd.xlane.f32.xlu0 %v861
      %v863 = vpop.xlane.xlu0 %862
      %v864 = vsel %vm854, %v841, 0.0
      %865 = vadd.xlane.f32.xlu0 %v864
      %v866 = vpop.xlane.xlu0 %865
      %v867 = vsel %vm854, %v842, 0.0
      %868 = vadd.xlane.f32.xlu0 %v867
      %v869 = vpop.xlane.xlu0 %868
      %v870 = vsel %vm854, %v843, 0.0
      %871 = vadd.xlane.f32.xlu0 %v870
      %v872 = vpop.xlane.xlu0 %871
      %v873 = vsel %vm854, %v844, 0.0
      %874 = vadd.xlane.f32.xlu0 %v873
      %v875 = vpop.xlane.xlu0 %874
      %v876 = vsel %vm854, %v845, 0.0
      %877 = vadd.xlane.f32.xlu0 %v876
      %v878 = vpop.xlane.xlu0 %877
      %v879 = vsel %vm854, %v846, 0.0
      %880 = vadd.xlane.f32.xlu0 %v879
      %v881 = vpop.xlane.xlu0 %880
      %v882 = vsel %vm854, %v847, 0.0
      %883 = vadd.xlane.f32.xlu0 %v882
      %v884 = vpop.xlane.xlu0 %883
      %v885 = vsel %vm854, %v848, 0.0
      %886 = vadd.xlane.f32.xlu0 %v885
      %v887 = vpop.xlane.xlu0 %886
      %v888 = vsel %vm854, %v849, 0.0
      %889 = vadd.xlane.f32.xlu0 %v888
      %v890 = vpop.xlane.xlu0 %889
      %v891 = vsel %vm854, %v850, 0.0
      %892 = vadd.xlane.f32.xlu0 %v891
      %v893 = vpop.xlane.xlu0 %892
      %v894 = vsel %vm854, %v851, 0.0
      %895 = vadd.xlane.f32.xlu0 %v894
      %v896 = vpop.xlane.xlu0 %895
      %v897 = vsel %vm854, %v852, 0.0
      %898 = vadd.xlane.f32.xlu0 %v897
      %v899 = vpop.xlane.xlu0 %898
      %v900 = vsel %vm854, %v853, 0.0
      %901 = vadd.xlane.f32.xlu0 %v900
      %v902 = vpop.xlane.xlu0 %901
      %v903 = vrcp.pop 32.0
      %v904 = vmul.f32 32.0, %v903
      %v905 = vsub.f32 1.0, %v904
      %v906 = vmul.f32 %v903, %v905
      %v907 = vadd.f32 %v903, %v906
      %vm908 = vweird.f32 %v903
      %v909 = vsel %vm908, %v903, %v907
      %v910 = vmul.f32 %v857, %v909
      %v911 = vmul.f32 %v860, %v909
      %v912 = vmul.f32 %v863, %v909
      %v913 = vmul.f32 %v866, %v909
      %v914 = vmul.f32 %v869, %v909
      %v915 = vmul.f32 %v872, %v909
      %v916 = vmul.f32 %v875, %v909
      %v917 = vmul.f32 %v878, %v909
      %v918 = vmul.f32 %v881, %v909
      %v919 = vmul.f32 %v884, %v909
      %v920 = vmul.f32 %v887, %v909
      %v921 = vmul.f32 %v890, %v909
      %v922 = vmul.f32 %v893, %v909
      %v923 = vmul.f32 %v896, %v909
      %v924 = vmul.f32 %v899, %v909
      %v925 = vmul.f32 %v902, %v909
      %v926 = vsub.f32 %v838, %v910
      %v927 = vsub.f32 %v839, %v911
      %v928 = vsub.f32 %v840, %v912
      %v929 = vsub.f32 %v841, %v913
      %v930 = vsub.f32 %v842, %v914
      %v931 = vsub.f32 %v843, %v915
      %v932 = vsub.f32 %v844, %v916
      %v933 = vsub.f32 %v845, %v917
      %v934 = vsub.f32 %v846, %v918
      %v935 = vsub.f32 %v847, %v919
      %v936 = vsub.f32 %v848, %v920
      %v937 = vsub.f32 %v849, %v921
      %v938 = vsub.f32 %v850, %v922
      %v939 = vsub.f32 %v851, %v923
      %v940 = vsub.f32 %v852, %v924
      %v941 = vsub.f32 %v853, %v925
      %v942 = vmul.f32 %v926, %v926
      %v943 = vmul.f32 %v927, %v927
      %v944 = vmul.f32 %v928, %v928
      %v945 = vmul.f32 %v929, %v929
      %v946 = vmul.f32 %v930, %v930
      %v947 = vmul.f32 %v931, %v931
      %v948 = vmul.f32 %v932, %v932
      %v949 = vmul.f32 %v933, %v933
      %v950 = vmul.f32 %v934, %v934
      %v951 = vmul.f32 %v935, %v935
      %v952 = vmul.f32 %v936, %v936
      %v953 = vmul.f32 %v937, %v937
      %v954 = vmul.f32 %v938, %v938
      %v955 = vmul.f32 %v939, %v939
      %v956 = vmul.f32 %v940, %v940
      %v957 = vmul.f32 %v941, %v941
      %v958 = vsel %vm854, %v942, 0.0
      %959 = vadd.xlane.f32.xlu0 %v958
      %v960 = vpop.xlane.xlu0 %959
      %v961 = vsel %vm854, %v943, 0.0
      %962 = vadd.xlane.f32.xlu0 %v961
      %v963 = vpop.xlane.xlu0 %962
      %v964 = vsel %vm854, %v944, 0.0
      %965 = vadd.xlane.f32.xlu0 %v964
      %v966 = vpop.xlane.xlu0 %965
      %v967 = vsel %vm854, %v945, 0.0
      %968 = vadd.xlane.f32.xlu0 %v967
      %v969 = vpop.xlane.xlu0 %968
      %v970 = vsel %vm854, %v946, 0.0
      %971 = vadd.xlane.f32.xlu0 %v970
      %v972 = vpop.xlane.xlu0 %971
      %v973 = vsel %vm854, %v947, 0.0
      %974 = vadd.xlane.f32.xlu0 %v973
      %v975 = vpop.xlane.xlu0 %974
      %v976 = vsel %vm854, %v948, 0.0
      %977 = vadd.xlane.f32.xlu0 %v976
      %v978 = vpop.xlane.xlu0 %977
      %v979 = vsel %vm854, %v949, 0.0
      %980 = vadd.xlane.f32.xlu0 %v979
      %v981 = vpop.xlane.xlu0 %980
      %v982 = vsel %vm854, %v950, 0.0
      %983 = vadd.xlane.f32.xlu0 %v982
      %v984 = vpop.xlane.xlu0 %983
      %v985 = vsel %vm854, %v951, 0.0
      %986 = vadd.xlane.f32.xlu0 %v985
      %v987 = vpop.xlane.xlu0 %986
      %v988 = vsel %vm854, %v952, 0.0
      %989 = vadd.xlane.f32.xlu0 %v988
      %v990 = vpop.xlane.xlu0 %989
      %v991 = vsel %vm854, %v953, 0.0
      %992 = vadd.xlane.f32.xlu0 %v991
      %v993 = vpop.xlane.xlu0 %992
      %v994 = vsel %vm854, %v954, 0.0
      %995 = vadd.xlane.f32.xlu0 %v994
      %v996 = vpop.xlane.xlu0 %995
      %v997 = vsel %vm854, %v955, 0.0
      %998 = vadd.xlane.f32.xlu0 %v997
      %v999 = vpop.xlane.xlu0 %998
      %v1000 = vsel %vm854, %v956, 0.0
      %1001 = vadd.xlane.f32.xlu0 %v1000
      %v1002 = vpop.xlane.xlu0 %1001
      %v1003 = vsel %vm854, %v957, 0.0
      %1004 = vadd.xlane.f32.xlu0 %v1003
      %v1005 = vpop.xlane.xlu0 %1004
      %v1006 = vmul.f32 %v960, %v909
      %v1007 = vmul.f32 %v963, %v909
      %v1008 = vmul.f32 %v966, %v909
      %v1009 = vmul.f32 %v969, %v909
      %v1010 = vmul.f32 %v972, %v909
      %v1011 = vmul.f32 %v975, %v909
      %v1012 = vmul.f32 %v978, %v909
      %v1013 = vmul.f32 %v981, %v909
      %v1014 = vmul.f32 %v984, %v909
      %v1015 = vmul.f32 %v987, %v909
      %v1016 = vmul.f32 %v990, %v909
      %v1017 = vmul.f32 %v993, %v909
      %v1018 = vmul.f32 %v996, %v909
      %v1019 = vmul.f32 %v999, %v909
      %v1020 = vmul.f32 %v1002, %v909
      %v1021 = vmul.f32 %v1005, %v909
      %v1022 = vadd.f32 %v1006, 1e-08
      %v1023 = vadd.f32 %v1007, 1e-08
      %v1024 = vadd.f32 %v1008, 1e-08
      %v1025 = vadd.f32 %v1009, 1e-08
      %v1026 = vadd.f32 %v1010, 1e-08
      %v1027 = vadd.f32 %v1011, 1e-08
      %v1028 = vadd.f32 %v1012, 1e-08
      %v1029 = vadd.f32 %v1013, 1e-08
      %v1030 = vadd.f32 %v1014, 1e-08
      %v1031 = vadd.f32 %v1015, 1e-08
      %v1032 = vadd.f32 %v1016, 1e-08
      %v1033 = vadd.f32 %v1017, 1e-08
      %v1034 = vadd.f32 %v1018, 1e-08
      %v1035 = vadd.f32 %v1019, 1e-08
      %v1036 = vadd.f32 %v1020, 1e-08
      %v1037 = vadd.f32 %v1021, 1e-08
      %v1038 = vrsqrt.pop %v1022
      %v1039 = vmul.f32 %v1038, %v1022
      %v1040 = vmul.f32 %v1039, %v1038
      %v1041 = vmul.f32 0.5, %v1040
      %v1042 = vsub.f32 1.5, %v1041
      %v1043 = vmul.f32 %v1038, %v1042
      %vm1044 = vweird.f32 %v1022
      %vm1045 = vweird.f32 %v1038
      %vm1046 = vmor %vm1044, %vm1045
      %v1047 = vsel %vm1046, %v1038, %v1043
      %v1048 = vrsqrt.pop %v1023
      %v1049 = vmul.f32 %v1048, %v1023
      %v1050 = vmul.f32 %v1049, %v1048
      %v1051 = vmul.f32 0.5, %v1050
      %v1052 = vsub.f32 1.5, %v1051
      %v1053 = vmul.f32 %v1048, %v1052
      %vm1054 = vweird.f32 %v1023
      %vm1055 = vweird.f32 %v1048
      %vm1056 = vmor %vm1054, %vm1055
      %v1057 = vsel %vm1056, %v1048, %v1053
      %v1058 = vrsqrt.pop %v1024
      %v1059 = vmul.f32 %v1058, %v1024
      %v1060 = vmul.f32 %v1059, %v1058
      %v1061 = vmul.f32 0.5, %v1060
      %v1062 = vsub.f32 1.5, %v1061
      %v1063 = vmul.f32 %v1058, %v1062
      %vm1064 = vweird.f32 %v1024
      %vm1065 = vweird.f32 %v1058
      %vm1066 = vmor %vm1064, %vm1065
      %v1067 = vsel %vm1066, %v1058, %v1063
      %v1068 = vrsqrt.pop %v1025
      %v1069 = vmul.f32 %v1068, %v1025
      %v1070 = vmul.f32 %v1069, %v1068
      %v1071 = vmul.f32 0.5, %v1070
      %v1072 = vsub.f32 1.5, %v1071
      %v1073 = vmul.f32 %v1068, %v1072
      %vm1074 = vweird.f32 %v1025
      %vm1075 = vweird.f32 %v1068
      %vm1076 = vmor %vm1074, %vm1075
      %v1077 = vsel %vm1076, %v1068, %v1073
      %v1078 = vrsqrt.pop %v1026
      %v1079 = vmul.f32 %v1078, %v1026
      %v1080 = vmul.f32 %v1079, %v1078
      %v1081 = vmul.f32 0.5, %v1080
      %v1082 = vsub.f32 1.5, %v1081
      %v1083 = vmul.f32 %v1078, %v1082
      %vm1084 = vweird.f32 %v1026
      %vm1085 = vweird.f32 %v1078
      %vm1086 = vmor %vm1084, %vm1085
      %v1087 = vsel %vm1086, %v1078, %v1083
      %v1088 = vrsqrt.pop %v1027
      %v1089 = vmul.f32 %v1088, %v1027
      %v1090 = vmul.f32 %v1089, %v1088
      %v1091 = vmul.f32 0.5, %v1090
      %v1092 = vsub.f32 1.5, %v1091
      %v1093 = vmul.f32 %v1088, %v1092
      %vm1094 = vweird.f32 %v1027
      %vm1095 = vweird.f32 %v1088
      %vm1096 = vmor %vm1094, %vm1095
      %v1097 = vsel %vm1096, %v1088, %v1093
      %v1098 = vrsqrt.pop %v1028
      %v1099 = vmul.f32 %v1098, %v1028
      %v1100 = vmul.f32 %v1099, %v1098
      %v1101 = vmul.f32 0.5, %v1100
      %v1102 = vsub.f32 1.5, %v1101
      %v1103 = vmul.f32 %v1098, %v1102
      %vm1104 = vweird.f32 %v1028
      %vm1105 = vweird.f32 %v1098
      %vm1106 = vmor %vm1104, %vm1105
      %v1107 = vsel %vm1106, %v1098, %v1103
      %v1108 = vrsqrt.pop %v1029
      %v1109 = vmul.f32 %v1108, %v1029
      %v1110 = vmul.f32 %v1109, %v1108
      %v1111 = vmul.f32 0.5, %v1110
      %v1112 = vsub.f32 1.5, %v1111
      %v1113 = vmul.f32 %v1108, %v1112
      %vm1114 = vweird.f32 %v1029
      %vm1115 = vweird.f32 %v1108
      %vm1116 = vmor %vm1114, %vm1115
      %v1117 = vsel %vm1116, %v1108, %v1113
      %v1118 = vrsqrt.pop %v1030
      %v1119 = vmul.f32 %v1118, %v1030
      %v1120 = vmul.f32 %v1119, %v1118
      %v1121 = vmul.f32 0.5, %v1120
      %v1122 = vsub.f32 1.5, %v1121
      %v1123 = vmul.f32 %v1118, %v1122
      %vm1124 = vweird.f32 %v1030
      %vm1125 = vweird.f32 %v1118
      %vm1126 = vmor %vm1124, %vm1125
      %v1127 = vsel %vm1126, %v1118, %v1123
      %v1128 = vrsqrt.pop %v1031
      %v1129 = vmul.f32 %v1128, %v1031
      %v1130 = vmul.f32 %v1129, %v1128
      %v1131 = vmul.f32 0.5, %v1130
      %v1132 = vsub.f32 1.5, %v1131
      %v1133 = vmul.f32 %v1128, %v1132
      %vm1134 = vweird.f32 %v1031
      %vm1135 = vweird.f32 %v1128
      %vm1136 = vmor %vm1134, %vm1135
      %v1137 = vsel %vm1136, %v1128, %v1133
      %v1138 = vrsqrt.pop %v1032
      %v1139 = vmul.f32 %v1138, %v1032
      %v1140 = vmul.f32 %v1139, %v1138
      %v1141 = vmul.f32 0.5, %v1140
      %v1142 = vsub.f32 1.5, %v1141
      %v1143 = vmul.f32 %v1138, %v1142
      %vm1144 = vweird.f32 %v1032
      %vm1145 = vweird.f32 %v1138
      %vm1146 = vmor %vm1144, %vm1145
      %v1147 = vsel %vm1146, %v1138, %v1143
      %v1148 = vrsqrt.pop %v1033
      %v1149 = vmul.f32 %v1148, %v1033
      %v1150 = vmul.f32 %v1149, %v1148
      %v1151 = vmul.f32 0.5, %v1150
      %v1152 = vsub.f32 1.5, %v1151
      %v1153 = vmul.f32 %v1148, %v1152
      %vm1154 = vweird.f32 %v1033
      %vm1155 = vweird.f32 %v1148
      %vm1156 = vmor %vm1154, %vm1155
      %v1157 = vsel %vm1156, %v1148, %v1153
      %v1158 = vrsqrt.pop %v1034
      %v1159 = vmul.f32 %v1158, %v1034
      %v1160 = vmul.f32 %v1159, %v1158
      %v1161 = vmul.f32 0.5, %v1160
      %v1162 = vsub.f32 1.5, %v1161
      %v1163 = vmul.f32 %v1158, %v1162
      %vm1164 = vweird.f32 %v1034
      %vm1165 = vweird.f32 %v1158
      %vm1166 = vmor %vm1164, %vm1165
      %v1167 = vsel %vm1166, %v1158, %v1163
      %v1168 = vrsqrt.pop %v1035
      %v1169 = vmul.f32 %v1168, %v1035
      %v1170 = vmul.f32 %v1169, %v1168
      %v1171 = vmul.f32 0.5, %v1170
      %v1172 = vsub.f32 1.5, %v1171
      %v1173 = vmul.f32 %v1168, %v1172
      %vm1174 = vweird.f32 %v1035
      %vm1175 = vweird.f32 %v1168
      %vm1176 = vmor %vm1174, %vm1175
      %v1177 = vsel %vm1176, %v1168, %v1173
      %v1178 = vrsqrt.pop %v1036
      %v1179 = vmul.f32 %v1178, %v1036
      %v1180 = vmul.f32 %v1179, %v1178
      %v1181 = vmul.f32 0.5, %v1180
      %v1182 = vsub.f32 1.5, %v1181
      %v1183 = vmul.f32 %v1178, %v1182
      %vm1184 = vweird.f32 %v1036
      %vm1185 = vweird.f32 %v1178
      %vm1186 = vmor %vm1184, %vm1185
      %v1187 = vsel %vm1186, %v1178, %v1183
      %v1188 = vrsqrt.pop %v1037
      %v1189 = vmul.f32 %v1188, %v1037
      %v1190 = vmul.f32 %v1189, %v1188
      %v1191 = vmul.f32 0.5, %v1190
      %v1192 = vsub.f32 1.5, %v1191
      %v1193 = vmul.f32 %v1188, %v1192
      %vm1194 = vweird.f32 %v1037
      %vm1195 = vweird.f32 %v1188
      %vm1196 = vmor %vm1194, %vm1195
      %v1197 = vsel %vm1196, %v1188, %v1193
      %v1198 = vmul.f32 %v926, %v1047
      %v1199 = vmul.f32 %v927, %v1057
      %v1200 = vmul.f32 %v928, %v1067
      %v1201 = vmul.f32 %v929, %v1077
      %v1202 = vmul.f32 %v930, %v1087
      %v1203 = vmul.f32 %v931, %v1097
      %v1204 = vmul.f32 %v932, %v1107
      %v1205 = vmul.f32 %v933, %v1117
      %v1206 = vmul.f32 %v934, %v1127
      %v1207 = vmul.f32 %v935, %v1137
      %v1208 = vmul.f32 %v936, %v1147
      %v1209 = vmul.f32 %v937, %v1157
      %v1210 = vmul.f32 %v938, %v1167
      %v1211 = vmul.f32 %v939, %v1177
      %v1212 = vmul.f32 %v940, %v1187
      %v1213 = vmul.f32 %v941, %v1197
      %v1214 = vld [vmem:[%s2] sm:$0x1]
      %v1216 = vperm.slane %v1214, 0
      %v1218 = vmul.f32 %v1198, %v1216
      %v1219 = vmul.f32 %v1199, %v1216
      %v1220 = vmul.f32 %v1200, %v1216
      %v1221 = vmul.f32 %v1201, %v1216
      %v1222 = vmul.f32 %v1202, %v1216
      %v1223 = vmul.f32 %v1203, %v1216
      %v1224 = vmul.f32 %v1204, %v1216
      %v1225 = vmul.f32 %v1205, %v1216
      %v1226 = vmul.f32 %v1206, %v1216
      %v1227 = vmul.f32 %v1207, %v1216
      %v1228 = vmul.f32 %v1208, %v1216
      %v1229 = vmul.f32 %v1209, %v1216
      %v1230 = vmul.f32 %v1210, %v1216
      %v1231 = vmul.f32 %v1211, %v1216
      %v1232 = vmul.f32 %v1212, %v1216
      %v1233 = vmul.f32 %v1213, %v1216
      %v1234 = vld [vmem:[%s3] sm:$0x1]
      %v1236 = vperm.slane %v1234, 0
      %v1238 = vadd.f32 %v1218, %v1236
      %v1239 = vadd.f32 %v1219, %v1236
      %v1240 = vadd.f32 %v1220, %v1236
      %v1241 = vadd.f32 %v1221, %v1236
      %v1242 = vadd.f32 %v1222, %v1236
      %v1243 = vadd.f32 %v1223, %v1236
      %v1244 = vadd.f32 %v1224, %v1236
      %v1245 = vadd.f32 %v1225, %v1236
      %v1246 = vadd.f32 %v1226, %v1236
      %v1247 = vadd.f32 %v1227, %v1236
      %v1248 = vadd.f32 %v1228, %v1236
      %v1249 = vadd.f32 %v1229, %v1236
      %v1250 = vadd.f32 %v1230, %v1236
      %v1251 = vadd.f32 %v1231, %v1236
      %v1252 = vadd.f32 %v1232, %v1236
      %v1253 = vadd.f32 %v1233, %v1236
      %v1254 = vpack.c.bf16 %v839, %v838
      %v1255 = vpack.c.bf16 %v841, %v840
      %v1256 = vpack.c.bf16 %v843, %v842
      %v1257 = vpack.c.bf16 %v845, %v844
      %v1258 = vpack.c.bf16 %v847, %v846
      %v1259 = vpack.c.bf16 %v849, %v848
      %v1260 = vpack.c.bf16 %v851, %v850
      %v1261 = vpack.c.bf16 %v853, %v852
      %v1262 = vpack.c.bf16 %v1239, %v1238
      %v1263 = vpack.c.bf16 %v1241, %v1240
      %v1264 = vpack.c.bf16 %v1243, %v1242
      %v1265 = vpack.c.bf16 %v1245, %v1244
      %v1266 = vpack.c.bf16 %v1247, %v1246
      %v1267 = vpack.c.bf16 %v1249, %v1248
      %v1268 = vpack.c.bf16 %v1251, %v1250
      %v1269 = vpack.c.bf16 %v1253, %v1252
      %v1270 = vld [vmem:[%s4] sm:$0xf]
      %v1271 = vld [vmem:[%s4 + $0x4] sm:$0xf]
      %v1272 = vld [vmem:[%s4 + $0x8] sm:$0xf]
      %v1273 = vld [vmem:[%s4 + $0xc] sm:$0xf]
      %v1274 = vld [vmem:[%s5] sm:$0x1]
      %v1276 = vperm.slane %v1274, 0
      %v1282 = vunpack.c.l.b16 %v1270
      %v1283 = vunpack.c.l.b16 %v1271
      %v1284 = vunpack.c.l.b16 %v1272
      %v1285 = vunpack.c.l.b16 %v1273
      %v1286 = vpack.c.b16 %v1283, %v1282
      %v1287 = vpack.c.b16 %v1285, %v1284
      %v1291 = vsel %vm854, %v1262, 0
      %v1294 = vsel %vm854, %v1263, 0
      %v1297 = vsel %vm854, %v1264, 0
      %v1300 = vsel %vm854, %v1265, 0
      %v1303 = vsel %vm854, %v1266, 0
      %v1306 = vsel %vm854, %v1267, 0
      %v1309 = vsel %vm854, %v1268, 0
      %v1312 = vsel %vm854, %v1269, 0
      %1314 = vmatpush.bf16.msra.mxu0 0
      %1315 = vmatpush.bf16.msra.mxu0 0
      %1316 = vmatpush.bf16.msra.mxu0 0
      %1317 = vmatpush.bf16.msra.mxu0 0
      %1318 = vmatpush.bf16.msra.mxu0 0
      %1319 = vmatpush.bf16.msra.mxu0 0
      %1320 = vmatpush.bf16.msra.mxu0 %v1287
      %1321 = vmatpush.bf16.msra.mxu0 %v1286
      %1322 = vmatmul.bf16.gmra.mxu0 %v1291
      %v1323 = vpop.f32.mrf.mxu0
      %v1324 = vadd.f32 %v1276, %v1323
      %v1325 = vpop.f32.mrf.mxu0
      %v1326 = vadd.f32 %v1276, %v1325
      %1327 = vmatmul.bf16.gmra.mxu0 %v1294
      %v1328 = vpop.f32.mrf.mxu0
      %v1329 = vadd.f32 %v1276, %v1328
      %v1330 = vpop.f32.mrf.mxu0
      %v1331 = vadd.f32 %v1276, %v1330
      %1332 = vmatmul.bf16.gmra.mxu0 %v1297
      %v1333 = vpop.f32.mrf.mxu0
      %v1334 = vadd.f32 %v1276, %v1333
      %v1335 = vpop.f32.mrf.mxu0
      %v1336 = vadd.f32 %v1276, %v1335
      %1337 = vmatmul.bf16.gmra.mxu0 %v1300
      %v1338 = vpop.f32.mrf.mxu0
      %v1339 = vadd.f32 %v1276, %v1338
      %v1340 = vpop.f32.mrf.mxu0
      %v1341 = vadd.f32 %v1276, %v1340
      %1342 = vmatmul.bf16.gmra.mxu0 %v1303
      %v1343 = vpop.f32.mrf.mxu0
      %v1344 = vadd.f32 %v1276, %v1343
      %v1345 = vpop.f32.mrf.mxu0
      %v1346 = vadd.f32 %v1276, %v1345
      %1347 = vmatmul.bf16.gmra.mxu0 %v1306
      %v1348 = vpop.f32.mrf.mxu0
      %v1349 = vadd.f32 %v1276, %v1348
      %v1350 = vpop.f32.mrf.mxu0
      %v1351 = vadd.f32 %v1276, %v1350
      %1352 = vmatmul.bf16.gmra.mxu0 %v1309
      %v1353 = vpop.f32.mrf.mxu0
      %v1354 = vadd.f32 %v1276, %v1353
      %v1355 = vpop.f32.mrf.mxu0
      %v1356 = vadd.f32 %v1276, %v1355
      %1357 = vmatmul.bf16.gmra.mxu0 %v1312
      %v1358 = vpop.f32.mrf.mxu0
      %v1359 = vadd.f32 %v1276, %v1358
      %v1360 = vpop.f32.mrf.mxu0
      %v1361 = vadd.f32 %v1276, %v1360
      %1362 = vdwg.mxu0
      %v1363 = vld [vmem:[%s6] sm:$0xf]
      %v1364 = vld [vmem:[%s6 + $0x4] sm:$0xf]
      %v1365 = vld [vmem:[%s6 + $0x8] sm:$0xf]
      %v1366 = vld [vmem:[%s6 + $0xc] sm:$0xf]
      %v1367 = vld [vmem:[%s7] sm:$0x1]
      %v1369 = vperm.slane %v1367, 0
      %v1375 = vunpack.c.l.b16 %v1363
      %v1376 = vunpack.c.l.b16 %v1364
      %v1377 = vunpack.c.l.b16 %v1365
      %v1378 = vunpack.c.l.b16 %v1366
      %v1379 = vpack.c.b16 %v1376, %v1375
      %v1380 = vpack.c.b16 %v1378, %v1377
      %v1384 = vsel %vm854, %v1254, 0
      %v1387 = vsel %vm854, %v1255, 0
      %v1390 = vsel %vm854, %v1256, 0
      %v1393 = vsel %vm854, %v1257, 0
      %v1396 = vsel %vm854, %v1258, 0
      %v1399 = vsel %vm854, %v1259, 0
      %v1402 = vsel %vm854, %v1260, 0
      %v1405 = vsel %vm854, %v1261, 0
      %1407 = vmatpush.bf16.msra.mxu0 0
      %1408 = vmatpush.bf16.msra.mxu0 0
      %1409 = vmatpush.bf16.msra.mxu0 0
      %1410 = vmatpush.bf16.msra.mxu0 0
      %1411 = vmatpush.bf16.msra.mxu0 0
      %1412 = vmatpush.bf16.msra.mxu0 0
      %1413 = vmatpush.bf16.msra.mxu0 %v1380
      %1414 = vmatpush.bf16.msra.mxu0 %v1379
      %1415 = vmatmul.bf16.gmra.mxu0 %v1384
      %v1416 = vpop.f32.mrf.mxu0
      %v1417 = vadd.f32 %v1369, %v1416
      %v1418 = vpop.f32.mrf.mxu0
      %v1419 = vadd.f32 %v1369, %v1418
      %1420 = vmatmul.bf16.gmra.mxu0 %v1387
      %v1421 = vpop.f32.mrf.mxu0
      %v1422 = vadd.f32 %v1369, %v1421
      %v1423 = vpop.f32.mrf.mxu0
      %v1424 = vadd.f32 %v1369, %v1423
      %1425 = vmatmul.bf16.gmra.mxu0 %v1390
      %v1426 = vpop.f32.mrf.mxu0
      %v1427 = vadd.f32 %v1369, %v1426
      %v1428 = vpop.f32.mrf.mxu0
      %v1429 = vadd.f32 %v1369, %v1428
      %1430 = vmatmul.bf16.gmra.mxu0 %v1393
      %v1431 = vpop.f32.mrf.mxu0
      %v1432 = vadd.f32 %v1369, %v1431
      %v1433 = vpop.f32.mrf.mxu0
      %v1434 = vadd.f32 %v1369, %v1433
      %1435 = vmatmul.bf16.gmra.mxu0 %v1396
      %v1436 = vpop.f32.mrf.mxu0
      %v1437 = vadd.f32 %v1369, %v1436
      %v1438 = vpop.f32.mrf.mxu0
      %v1439 = vadd.f32 %v1369, %v1438
      %1440 = vmatmul.bf16.gmra.mxu0 %v1399
      %v1441 = vpop.f32.mrf.mxu0
      %v1442 = vadd.f32 %v1369, %v1441
      %v1443 = vpop.f32.mrf.mxu0
      %v1444 = vadd.f32 %v1369, %v1443
      %1445 = vmatmul.bf16.gmra.mxu0 %v1402
      %v1446 = vpop.f32.mrf.mxu0
      %v1447 = vadd.f32 %v1369, %v1446
      %v1448 = vpop.f32.mrf.mxu0
      %v1449 = vadd.f32 %v1369, %v1448
      %1450 = vmatmul.bf16.gmra.mxu0 %v1405
      %v1451 = vpop.f32.mrf.mxu0
      %v1452 = vadd.f32 %v1369, %v1451
      %v1453 = vpop.f32.mrf.mxu0
      %v1454 = vadd.f32 %v1369, %v1453
      %1455 = vdwg.mxu0
      %v1456 = vpack.c.bf16 %v1324, %v1324
      %v1457 = vpack.c.bf16 %v1326, %v1326
      %v1458 = vpack.c.bf16 %v1329, %v1329
      %v1459 = vpack.c.bf16 %v1331, %v1331
      %v1460 = vpack.c.bf16 %v1334, %v1334
      %v1461 = vpack.c.bf16 %v1336, %v1336
      %v1462 = vpack.c.bf16 %v1339, %v1339
      %v1463 = vpack.c.bf16 %v1341, %v1341
      %v1464 = vpack.c.bf16 %v1344, %v1344
      %v1465 = vpack.c.bf16 %v1346, %v1346
      %v1466 = vpack.c.bf16 %v1349, %v1349
      %v1467 = vpack.c.bf16 %v1351, %v1351
      %v1468 = vpack.c.bf16 %v1354, %v1354
      %v1469 = vpack.c.bf16 %v1356, %v1356
      %v1470 = vpack.c.bf16 %v1359, %v1359
      %v1471 = vpack.c.bf16 %v1361, %v1361
      %v1472 = vpack.c.bf16 %v1417, %v1417
      %v1473 = vpack.c.bf16 %v1419, %v1419
      %v1474 = vpack.c.bf16 %v1422, %v1422
      %v1475 = vpack.c.bf16 %v1424, %v1424
      %v1476 = vpack.c.bf16 %v1427, %v1427
      %v1477 = vpack.c.bf16 %v1429, %v1429
      %v1478 = vpack.c.bf16 %v1432, %v1432
      %v1479 = vpack.c.bf16 %v1434, %v1434
      %v1480 = vpack.c.bf16 %v1437, %v1437
      %v1481 = vpack.c.bf16 %v1439, %v1439
      %v1482 = vpack.c.bf16 %v1442, %v1442
      %v1483 = vpack.c.bf16 %v1444, %v1444
      %v1484 = vpack.c.bf16 %v1447, %v1447
      %v1485 = vpack.c.bf16 %v1449, %v1449
      %v1486 = vpack.c.bf16 %v1452, %v1452
      %v1487 = vpack.c.bf16 %v1454, %v1454
      %v1490 = vunpack.c.l.b16 %v1456
      %v1491 = vunpack.c.l.b16 %v1457
      %v1492 = vpack.c.b16 %v1491, %v1490
      %v1495 = vunpack.c.l.b16 %v1472
      %v1496 = vunpack.c.l.b16 %v1473
      %v1497 = vpack.c.b16 %v1496, %v1495
      %v1499 = vsel %vm854, %v1492, 0
      %v1502 = vsel %vm854, %v1497, 0
      %1504 = vmatpush.bf16.xpose.msra.mxu0 0
      %1505 = vmatpush.bf16.xpose.msra.mxu0 0
      %1506 = vmatpush.bf16.xpose.msra.mxu0 0
      %1507 = vmatpush.bf16.xpose.msra.mxu0 0
      %1508 = vmatpush.bf16.xpose.msra.mxu0 0
      %1509 = vmatpush.bf16.xpose.msra.mxu0 0
      %1510 = vmatpush.bf16.xpose.msra.mxu0 0
      %1511 = vmatpush.bf16.xpose.msra.mxu0 %v1502
      %1512 = vmatmul.bf16.gmra.mxu0 %v1499
      %v1513 = vpop.f32.mrf.mxu0
      %v1514 = vadd.f32 0.0, %v1513
      %v1515 = vpop.f32.mrf.mxu0
      %v1516 = vadd.f32 0.0, %v1515
      %1517 = vdwg.mxu0
      %v1520 = vunpack.c.l.b16 %v1458
      %v1521 = vunpack.c.l.b16 %v1459
      %v1522 = vpack.c.b16 %v1521, %v1520
      %v1525 = vunpack.c.l.b16 %v1474
      %v1526 = vunpack.c.l.b16 %v1475
      %v1527 = vpack.c.b16 %v1526, %v1525
      %v1529 = vsel %vm854, %v1522, 0
      %v1532 = vsel %vm854, %v1527, 0
      %1534 = vmatpush.bf16.xpose.msra.mxu0 0
      %1535 = vmatpush.bf16.xpose.msra.mxu0 0
      %1536 = vmatpush.bf16.xpose.msra.mxu0 0
      %1537 = vmatpush.bf16.xpose.msra.mxu0 0
      %1538 = vmatpush.bf16.xpose.msra.mxu0 0
      %1539 = vmatpush.bf16.xpose.msra.mxu0 0
      %1540 = vmatpush.bf16.xpose.msra.mxu0 0
      %1541 = vmatpush.bf16.xpose.msra.mxu0 %v1532
      %1542 = vmatmul.bf16.gmra.mxu0 %v1529
      %v1543 = vpop.f32.mrf.mxu0
      %v1544 = vadd.f32 0.0, %v1543
      %v1545 = vpop.f32.mrf.mxu0
      %v1546 = vadd.f32 0.0, %v1545
      %1547 = vdwg.mxu0
      %v1550 = vunpack.c.l.b16 %v1460
      %v1551 = vunpack.c.l.b16 %v1461
      %v1552 = vpack.c.b16 %v1551, %v1550
      %v1555 = vunpack.c.l.b16 %v1476
      %v1556 = vunpack.c.l.b16 %v1477
      %v1557 = vpack.c.b16 %v1556, %v1555
      %v1559 = vsel %vm854, %v1552, 0
      %v1562 = vsel %vm854, %v1557, 0
      %1564 = vmatpush.bf16.xpose.msra.mxu0 0
      %1565 = vmatpush.bf16.xpose.msra.mxu0 0
      %1566 = vmatpush.bf16.xpose.msra.mxu0 0
      %1567 = vmatpush.bf16.xpose.msra.mxu0 0
      %1568 = vmatpush.bf16.xpose.msra.mxu0 0
      %1569 = vmatpush.bf16.xpose.msra.mxu0 0
      %1570 = vmatpush.bf16.xpose.msra.mxu0 0
      %1571 = vmatpush.bf16.xpose.msra.mxu0 %v1562
      %1572 = vmatmul.bf16.gmra.mxu0 %v1559
      %v1573 = vpop.f32.mrf.mxu0
      %v1574 = vadd.f32 0.0, %v1573
      %v1575 = vpop.f32.mrf.mxu0
      %v1576 = vadd.f32 0.0, %v1575
      %1577 = vdwg.mxu0
      %v1580 = vunpack.c.l.b16 %v1462
      %v1581 = vunpack.c.l.b16 %v1463
      %v1582 = vpack.c.b16 %v1581, %v1580
      %v1585 = vunpack.c.l.b16 %v1478
      %v1586 = vunpack.c.l.b16 %v1479
      %v1587 = vpack.c.b16 %v1586, %v1585
      %v1589 = vsel %vm854, %v1582, 0
      %v1592 = vsel %vm854, %v1587, 0
      %1594 = vmatpush.bf16.xpose.msra.mxu0 0
      %1595 = vmatpush.bf16.xpose.msra.mxu0 0
      %1596 = vmatpush.bf16.xpose.msra.mxu0 0
      %1597 = vmatpush.bf16.xpose.msra.mxu0 0
      %1598 = vmatpush.bf16.xpose.msra.mxu0 0
      %1599 = vmatpush.bf16.xpose.msra.mxu0 0
      %1600 = vmatpush.bf16.xpose.msra.mxu0 0
      %1601 = vmatpush.bf16.xpose.msra.mxu0 %v1592
      %1602 = vmatmul.bf16.gmra.mxu0 %v1589
      %v1603 = vpop.f32.mrf.mxu0
      %v1604 = vadd.f32 0.0, %v1603
      %v1605 = vpop.f32.mrf.mxu0
      %v1606 = vadd.f32 0.0, %v1605
      %1607 = vdwg.mxu0
      %v1610 = vunpack.c.l.b16 %v1464
      %v1611 = vunpack.c.l.b16 %v1465
      %v1612 = vpack.c.b16 %v1611, %v1610
      %v1615 = vunpack.c.l.b16 %v1480
      %v1616 = vunpack.c.l.b16 %v1481
      %v1617 = vpack.c.b16 %v1616, %v1615
      %v1619 = vsel %vm854, %v1612, 0
      %v1622 = vsel %vm854, %v1617, 0
      %1624 = vmatpush.bf16.xpose.msra.mxu0 0
      %1625 = vmatpush.bf16.xpose.msra.mxu0 0
      %1626 = vmatpush.bf16.xpose.msra.mxu0 0
      %1627 = vmatpush.bf16.xpose.msra.mxu0 0
      %1628 = vmatpush.bf16.xpose.msra.mxu0 0
      %1629 = vmatpush.bf16.xpose.msra.mxu0 0
      %1630 = vmatpush.bf16.xpose.msra.mxu0 0
      %1631 = vmatpush.bf16.xpose.msra.mxu0 %v1622
      %1632 = vmatmul.bf16.gmra.mxu0 %v1619
      %v1633 = vpop.f32.mrf.mxu0
      %v1634 = vadd.f32 0.0, %v1633
      %v1635 = vpop.f32.mrf.mxu0
      %v1636 = vadd.f32 0.0, %v1635
      %1637 = vdwg.mxu0
      %v1640 = vunpack.c.l.b16 %v1466
      %v1641 = vunpack.c.l.b16 %v1467
      %v1642 = vpack.c.b16 %v1641, %v1640
      %v1645 = vunpack.c.l.b16 %v1482
      %v1646 = vunpack.c.l.b16 %v1483
      %v1647 = vpack.c.b16 %v1646, %v1645
      %v1649 = vsel %vm854, %v1642, 0
      %v1652 = vsel %vm854, %v1647, 0
      %1654 = vmatpush.bf16.xpose.msra.mxu0 0
      %1655 = vmatpush.bf16.xpose.msra.mxu0 0
      %1656 = vmatpush.bf16.xpose.msra.mxu0 0
      %1657 = vmatpush.bf16.xpose.msra.mxu0 0
      %1658 = vmatpush.bf16.xpose.msra.mxu0 0
      %1659 = vmatpush.bf16.xpose.msra.mxu0 0
      %1660 = vmatpush.bf16.xpose.msra.mxu0 0
      %1661 = vmatpush.bf16.xpose.msra.mxu0 %v1652
      %1662 = vmatmul.bf16.gmra.mxu0 %v1649
      %v1663 = vpop.f32.mrf.mxu0
      %v1664 = vadd.f32 0.0, %v1663
      %v1665 = vpop.f32.mrf.mxu0
      %v1666 = vadd.f32 0.0, %v1665
      %1667 = vdwg.mxu0
      %v1670 = vunpack.c.l.b16 %v1468
      %v1671 = vunpack.c.l.b16 %v1469
      %v1672 = vpack.c.b16 %v1671, %v1670
      %v1675 = vunpack.c.l.b16 %v1484
      %v1676 = vunpack.c.l.b16 %v1485
      %v1677 = vpack.c.b16 %v1676, %v1675
      %v1679 = vsel %vm854, %v1672, 0
      %v1682 = vsel %vm854, %v1677, 0
      %1684 = vmatpush.bf16.xpose.msra.mxu0 0
      %1685 = vmatpush.bf16.xpose.msra.mxu0 0
      %1686 = vmatpush.bf16.xpose.msra.mxu0 0
      %1687 = vmatpush.bf16.xpose.msra.mxu0 0
      %1688 = vmatpush.bf16.xpose.msra.mxu0 0
      %1689 = vmatpush.bf16.xpose.msra.mxu0 0
      %1690 = vmatpush.bf16.xpose.msra.mxu0 0
      %1691 = vmatpush.bf16.xpose.msra.mxu0 %v1682
      %1692 = vmatmul.bf16.gmra.mxu0 %v1679
      %v1693 = vpop.f32.mrf.mxu0
      %v1694 = vadd.f32 0.0, %v1693
      %v1695 = vpop.f32.mrf.mxu0
      %v1696 = vadd.f32 0.0, %v1695
      %1697 = vdwg.mxu0
      %v1700 = vunpack.c.l.b16 %v1470
      %v1701 = vunpack.c.l.b16 %v1471
      %v1702 = vpack.c.b16 %v1701, %v1700
      %v1705 = vunpack.c.l.b16 %v1486
      %v1706 = vunpack.c.l.b16 %v1487
      %v1707 = vpack.c.b16 %v1706, %v1705
      %v1709 = vsel %vm854, %v1702, 0
      %v1712 = vsel %vm854, %v1707, 0
      %1714 = vmatpush.bf16.xpose.msra.mxu0 0
      %1715 = vmatpush.bf16.xpose.msra.mxu0 0
      %1716 = vmatpush.bf16.xpose.msra.mxu0 0
      %1717 = vmatpush.bf16.xpose.msra.mxu0 0
      %1718 = vmatpush.bf16.xpose.msra.mxu0 0
      %1719 = vmatpush.bf16.xpose.msra.mxu0 0
      %1720 = vmatpush.bf16.xpose.msra.mxu0 0
      %1721 = vmatpush.bf16.xpose.msra.mxu0 %v1712
      %1722 = vmatmul.bf16.gmra.mxu0 %v1709
      %v1723 = vpop.f32.mrf.mxu0
      %v1724 = vadd.f32 0.0, %v1723
      %v1725 = vpop.f32.mrf.mxu0
      %v1726 = vadd.f32 0.0, %v1725
      %1727 = vdwg.mxu0
      %v1728 = vmul.f32 %v1514, 0.17677669
      %v1729 = vmul.f32 %v1516, 0.17677669
      %v1730 = vmul.f32 %v1544, 0.17677669
      %v1731 = vmul.f32 %v1546, 0.17677669
      %v1732 = vmul.f32 %v1574, 0.17677669
      %v1733 = vmul.f32 %v1576, 0.17677669
      %v1734 = vmul.f32 %v1604, 0.17677669
      %v1735 = vmul.f32 %v1606, 0.17677669
      %v1736 = vmul.f32 %v1634, 0.17677669
      %v1737 = vmul.f32 %v1636, 0.17677669
      %v1738 = vmul.f32 %v1664, 0.17677669
      %v1739 = vmul.f32 %v1666, 0.17677669
      %v1740 = vmul.f32 %v1694, 0.17677669
      %v1741 = vmul.f32 %v1696, 0.17677669
      %v1742 = vmul.f32 %v1724, 0.17677669
      %v1743 = vmul.f32 %v1726, 0.17677669
      %v1744 = vlaneseq
      %v1745 = vshrl.u32 %v1744, 7
      %v1746 = vadd.s32 %v1745, 8
      %v1747 = vlaneseq
      %v1748 = vand.u32 %v1747, 127
      %vm1749 = vcmp.le.s32.totalorder %v1748, %v1745
      %vm1750 = vcmp.le.s32.totalorder %v1748, %v1746
      %v1751 = vsel %vm1749, 1, 0
      %v1752 = vsel %vm1750, 1, 0
      %vm1753 = vcmp.eq.s32.totalorder %v1751, 1
      %vm1754 = vcmp.eq.s32.totalorder %v1752, 1
      %v1755 = vsel %vm1753, %v1728, -1e+30
      %v1756 = vsel %vm1754, %v1729, -1e+30
      %v1757 = vsel %vm1753, %v1730, -1e+30
      %v1758 = vsel %vm1754, %v1731, -1e+30
      %v1759 = vsel %vm1753, %v1732, -1e+30
      %v1760 = vsel %vm1754, %v1733, -1e+30
      %v1761 = vsel %vm1753, %v1734, -1e+30
      %v1762 = vsel %vm1754, %v1735, -1e+30
      %v1763 = vsel %vm1753, %v1736, -1e+30
      %v1764 = vsel %vm1754, %v1737, -1e+30
      %v1765 = vsel %vm1753, %v1738, -1e+30
      %v1766 = vsel %vm1754, %v1739, -1e+30
      %v1767 = vsel %vm1753, %v1740, -1e+30
      %v1768 = vsel %vm1754, %v1741, -1e+30
      %v1769 = vsel %vm1753, %v1742, -1e+30
      %v1770 = vsel %vm1754, %v1743, -1e+30
      %vm1771 = vcmask 130048
      %v1772 = vsel %vm1771, %v1755, -inf
      %1773 = vmax.xlane.f32.xlu0 %v1772
      %v1774 = vpop.xlane.xlu0 %1773
      %v1775 = vsel %vm1771, %v1756, -inf
      %1776 = vmax.xlane.f32.xlu0 %v1775
      %v1777 = vpop.xlane.xlu0 %1776
      %v1778 = vsel %vm1771, %v1757, -inf
      %1779 = vmax.xlane.f32.xlu0 %v1778
      %v1780 = vpop.xlane.xlu0 %1779
      %v1781 = vsel %vm1771, %v1758, -inf
      %1782 = vmax.xlane.f32.xlu0 %v1781
      %v1783 = vpop.xlane.xlu0 %1782
      %v1784 = vsel %vm1771, %v1759, -inf
      %1785 = vmax.xlane.f32.xlu0 %v1784
      %v1786 = vpop.xlane.xlu0 %1785
      %v1787 = vsel %vm1771, %v1760, -inf
      %1788 = vmax.xlane.f32.xlu0 %v1787
      %v1789 = vpop.xlane.xlu0 %1788
      %v1790 = vsel %vm1771, %v1761, -inf
      %1791 = vmax.xlane.f32.xlu0 %v1790
      %v1792 = vpop.xlane.xlu0 %1791
      %v1793 = vsel %vm1771, %v1762, -inf
      %1794 = vmax.xlane.f32.xlu0 %v1793
      %v1795 = vpop.xlane.xlu0 %1794
      %v1796 = vsel %vm1771, %v1763, -inf
      %1797 = vmax.xlane.f32.xlu0 %v1796
      %v1798 = vpop.xlane.xlu0 %1797
      %v1799 = vsel %vm1771, %v1764, -inf
      %1800 = vmax.xlane.f32.xlu0 %v1799
      %v1801 = vpop.xlane.xlu0 %1800
      %v1802 = vsel %vm1771, %v1765, -inf
      %1803 = vmax.xlane.f32.xlu0 %v1802
      %v1804 = vpop.xlane.xlu0 %1803
      %v1805 = vsel %vm1771, %v1766, -inf
      %1806 = vmax.xlane.f32.xlu0 %v1805
      %v1807 = vpop.xlane.xlu0 %1806
      %v1808 = vsel %vm1771, %v1767, -inf
      %1809 = vmax.xlane.f32.xlu0 %v1808
      %v1810 = vpop.xlane.xlu0 %1809
      %v1811 = vsel %vm1771, %v1768, -inf
      %1812 = vmax.xlane.f32.xlu0 %v1811
      %v1813 = vpop.xlane.xlu0 %1812
      %v1814 = vsel %vm1771, %v1769, -inf
      %1815 = vmax.xlane.f32.xlu0 %v1814
      %v1816 = vpop.xlane.xlu0 %1815
      %v1817 = vsel %vm1771, %v1770, -inf
      %1818 = vmax.xlane.f32.xlu0 %v1817
      %v1819 = vpop.xlane.xlu0 %1818
      %v1820 = vsub.f32 %v1755, %v1774
      %v1821 = vsub.f32 %v1756, %v1777
      %v1822 = vsub.f32 %v1757, %v1780
      %v1823 = vsub.f32 %v1758, %v1783
      %v1824 = vsub.f32 %v1759, %v1786
      %v1825 = vsub.f32 %v1760, %v1789
      %v1826 = vsub.f32 %v1761, %v1792
      %v1827 = vsub.f32 %v1762, %v1795
      %v1828 = vsub.f32 %v1763, %v1798
      %v1829 = vsub.f32 %v1764, %v1801
      %v1830 = vsub.f32 %v1765, %v1804
      %v1831 = vsub.f32 %v1766, %v1807
      %v1832 = vsub.f32 %v1767, %v1810
      %v1833 = vsub.f32 %v1768, %v1813
      %v1834 = vsub.f32 %v1769, %v1816
      %v1835 = vsub.f32 %v1770, %v1819
      %v1836 = vmul.f32 %v1820, 1.442695
      %v1837 = vpow.pop %v1836
      %v1838 = vmul.f32 %v1821, 1.442695
      %v1839 = vpow.pop %v1838
      %v1840 = vmul.f32 %v1822, 1.442695
      %v1841 = vpow.pop %v1840
      %v1842 = vmul.f32 %v1823, 1.442695
      %v1843 = vpow.pop %v1842
      %v1844 = vmul.f32 %v1824, 1.442695
      %v1845 = vpow.pop %v1844
      %v1846 = vmul.f32 %v1825, 1.442695
      %v1847 = vpow.pop %v1846
      %v1848 = vmul.f32 %v1826, 1.442695
      %v1849 = vpow.pop %v1848
      %v1850 = vmul.f32 %v1827, 1.442695
      %v1851 = vpow.pop %v1850
      %v1852 = vmul.f32 %v1828, 1.442695
      %v1853 = vpow.pop %v1852
      %v1854 = vmul.f32 %v1829, 1.442695
      %v1855 = vpow.pop %v1854
      %v1856 = vmul.f32 %v1830, 1.442695
      %v1857 = vpow.pop %v1856
      %v1858 = vmul.f32 %v1831, 1.442695
      %v1859 = vpow.pop %v1858
      %v1860 = vmul.f32 %v1832, 1.442695
      %v1861 = vpow.pop %v1860
      %v1862 = vmul.f32 %v1833, 1.442695
      %v1863 = vpow.pop %v1862
      %v1864 = vmul.f32 %v1834, 1.442695
      %v1865 = vpow.pop %v1864
      %v1866 = vmul.f32 %v1835, 1.442695
      %v1867 = vpow.pop %v1866
      %v1868 = vsel %vm1771, %v1837, 0.0
      %1869 = vadd.xlane.f32.xlu0 %v1868
      %v1870 = vpop.xlane.xlu0 %1869
      %v1871 = vsel %vm1771, %v1839, 0.0
      %1872 = vadd.xlane.f32.xlu0 %v1871
      %v1873 = vpop.xlane.xlu0 %1872
      %v1874 = vsel %vm1771, %v1841, 0.0
      %1875 = vadd.xlane.f32.xlu0 %v1874
      %v1876 = vpop.xlane.xlu0 %1875
      %v1877 = vsel %vm1771, %v1843, 0.0
      %1878 = vadd.xlane.f32.xlu0 %v1877
      %v1879 = vpop.xlane.xlu0 %1878
      %v1880 = vsel %vm1771, %v1845, 0.0
      %1881 = vadd.xlane.f32.xlu0 %v1880
      %v1882 = vpop.xlane.xlu0 %1881
      %v1883 = vsel %vm1771, %v1847, 0.0
      %1884 = vadd.xlane.f32.xlu0 %v1883
      %v1885 = vpop.xlane.xlu0 %1884
      %v1886 = vsel %vm1771, %v1849, 0.0
      %1887 = vadd.xlane.f32.xlu0 %v1886
      %v1888 = vpop.xlane.xlu0 %1887
      %v1889 = vsel %vm1771, %v1851, 0.0
      %1890 = vadd.xlane.f32.xlu0 %v1889
      %v1891 = vpop.xlane.xlu0 %1890
      %v1892 = vsel %vm1771, %v1853, 0.0
      %1893 = vadd.xlane.f32.xlu0 %v1892
      %v1894 = vpop.xlane.xlu0 %1893
      %v1895 = vsel %vm1771, %v1855, 0.0
      %1896 = vadd.xlane.f32.xlu0 %v1895
      %v1897 = vpop.xlane.xlu0 %1896
      %v1898 = vsel %vm1771, %v1857, 0.0
      %1899 = vadd.xlane.f32.xlu0 %v1898
      %v1900 = vpop.xlane.xlu0 %1899
      %v1901 = vsel %vm1771, %v1859, 0.0
      %1902 = vadd.xlane.f32.xlu0 %v1901
      %v1903 = vpop.xlane.xlu0 %1902
      %v1904 = vsel %vm1771, %v1861, 0.0
      %1905 = vadd.xlane.f32.xlu0 %v1904
      %v1906 = vpop.xlane.xlu0 %1905
      %v1907 = vsel %vm1771, %v1863, 0.0
      %1908 = vadd.xlane.f32.xlu0 %v1907
      %v1909 = vpop.xlane.xlu0 %1908
      %v1910 = vsel %vm1771, %v1865, 0.0
      %1911 = vadd.xlane.f32.xlu0 %v1910
      %v1912 = vpop.xlane.xlu0 %1911
      %v1913 = vsel %vm1771, %v1867, 0.0
      %1914 = vadd.xlane.f32.xlu0 %v1913
      %v1915 = vpop.xlane.xlu0 %1914
      %v1916 = vrcp.pop %v1870
      %v1917 = vrcp.pop %v1873
      %v1918 = vrcp.pop %v1876
      %v1919 = vrcp.pop %v1879
      %v1920 = vrcp.pop %v1882
      %v1921 = vrcp.pop %v1885
      %v1922 = vrcp.pop %v1888
      %v1923 = vrcp.pop %v1891
      %v1924 = vrcp.pop %v1894
      %v1925 = vrcp.pop %v1897
      %v1926 = vrcp.pop %v1900
      %v1927 = vrcp.pop %v1903
      %v1928 = vrcp.pop %v1906
      %v1929 = vrcp.pop %v1909
      %v1930 = vrcp.pop %v1912
      %v1931 = vrcp.pop %v1915
      %v1932 = vpack.c.bf16 %v1837, %v1837
      %v1933 = vpack.c.bf16 %v1839, %v1839
      %v1934 = vpack.c.bf16 %v1841, %v1841
      %v1935 = vpack.c.bf16 %v1843, %v1843
      %v1936 = vpack.c.bf16 %v1845, %v1845
      %v1937 = vpack.c.bf16 %v1847, %v1847
      %v1938 = vpack.c.bf16 %v1849, %v1849
      %v1939 = vpack.c.bf16 %v1851, %v1851
      %v1940 = vpack.c.bf16 %v1853, %v1853
      %v1941 = vpack.c.bf16 %v1855, %v1855
      %v1942 = vpack.c.bf16 %v1857, %v1857
      %v1943 = vpack.c.bf16 %v1859, %v1859
      %v1944 = vpack.c.bf16 %v1861, %v1861
      %v1945 = vpack.c.bf16 %v1863, %v1863
      %v1946 = vpack.c.bf16 %v1865, %v1865
      %v1947 = vpack.c.bf16 %v1867, %v1867
      %v1950 = vunpack.c.l.b16 %v1932
      %v1951 = vunpack.c.l.b16 %v1933
      %v1952 = vpack.c.b16 %v1951, %v1950
      %1953 = vrot.lane.b32.xlu0 %v1497, 96
      %v1954 = vpop.permute.xlu0 %1953
      %v1957 = vsel %vm1771, %v1952, 0
      %1959 = vmatpush.bf16.msra.mxu0 0
      %1960 = vmatpush.bf16.msra.mxu0 0
      %1961 = vmatpush.bf16.msra.mxu0 0
      %1962 = vmatpush.bf16.msra.mxu0 0
      %1963 = vmatpush.bf16.msra.mxu0 0
      %1964 = vmatpush.bf16.msra.mxu0 0
      %1965 = vmatpush.bf16.msra.mxu0 0
      %1966 = vmatpush.bf16.msra.mxu0 %v1954
      %1967 = vmatmul.bf16.gmra.mxu0 %v1957
      %v1968 = vpop.f32.mrf.mxu0
      %v1969 = vadd.f32 0.0, %v1968
      %v1970 = vpop.f32.mrf.mxu0
      %v1971 = vadd.f32 0.0, %v1970
      %1972 = vdwg.mxu0
      %v1975 = vunpack.c.l.b16 %v1934
      %v1976 = vunpack.c.l.b16 %v1935
      %v1977 = vpack.c.b16 %v1976, %v1975
      %1978 = vrot.lane.b32.xlu0 %v1527, 96
      %v1979 = vpop.permute.xlu0 %1978
      %v1982 = vsel %vm1771, %v1977, 0
      %1984 = vmatpush.bf16.msra.mxu0 0
      %1985 = vmatpush.bf16.msra.mxu0 0
      %1986 = vmatpush.bf16.msra.mxu0 0
      %1987 = vmatpush.bf16.msra.mxu0 0
      %1988 = vmatpush.bf16.msra.mxu0 0
      %1989 = vmatpush.bf16.msra.mxu0 0
      %1990 = vmatpush.bf16.msra.mxu0 0
      %1991 = vmatpush.bf16.msra.mxu0 %v1979
      %1992 = vmatmul.bf16.gmra.mxu0 %v1982
      %v1993 = vpop.f32.mrf.mxu0
      %v1994 = vadd.f32 0.0, %v1993
      %v1995 = vpop.f32.mrf.mxu0
      %v1996 = vadd.f32 0.0, %v1995
      %1997 = vdwg.mxu0
      %v2000 = vunpack.c.l.b16 %v1936
      %v2001 = vunpack.c.l.b16 %v1937
      %v2002 = vpack.c.b16 %v2001, %v2000
      %2003 = vrot.lane.b32.xlu0 %v1557, 96
      %v2004 = vpop.permute.xlu0 %2003
      %v2007 = vsel %vm1771, %v2002, 0
      %2009 = vmatpush.bf16.msra.mxu0 0
      %2010 = vmatpush.bf16.msra.mxu0 0
      %2011 = vmatpush.bf16.msra.mxu0 0
      %2012 = vmatpush.bf16.msra.mxu0 0
      %2013 = vmatpush.bf16.msra.mxu0 0
      %2014 = vmatpush.bf16.msra.mxu0 0
      %2015 = vmatpush.bf16.msra.mxu0 0
      %2016 = vmatpush.bf16.msra.mxu0 %v2004
      %2017 = vmatmul.bf16.gmra.mxu0 %v2007
      %v2018 = vpop.f32.mrf.mxu0
      %v2019 = vadd.f32 0.0, %v2018
      %v2020 = vpop.f32.mrf.mxu0
      %v2021 = vadd.f32 0.0, %v2020
      %2022 = vdwg.mxu0
      %v2025 = vunpack.c.l.b16 %v1938
      %v2026 = vunpack.c.l.b16 %v1939
      %v2027 = vpack.c.b16 %v2026, %v2025
      %2028 = vrot.lane.b32.xlu0 %v1587, 96
      %v2029 = vpop.permute.xlu0 %2028
      %v2032 = vsel %vm1771, %v2027, 0
      %2034 = vmatpush.bf16.msra.mxu0 0
      %2035 = vmatpush.bf16.msra.mxu0 0
      %2036 = vmatpush.bf16.msra.mxu0 0
      %2037 = vmatpush.bf16.msra.mxu0 0
      %2038 = vmatpush.bf16.msra.mxu0 0
      %2039 = vmatpush.bf16.msra.mxu0 0
      %2040 = vmatpush.bf16.msra.mxu0 0
      %2041 = vmatpush.bf16.msra.mxu0 %v2029
      %2042 = vmatmul.bf16.gmra.mxu0 %v2032
      %v2043 = vpop.f32.mrf.mxu0
      %v2044 = vadd.f32 0.0, %v2043
      %v2045 = vpop.f32.mrf.mxu0
      %v2046 = vadd.f32 0.0, %v2045
      %2047 = vdwg.mxu0
      %v2050 = vunpack.c.l.b16 %v1940
      %v2051 = vunpack.c.l.b16 %v1941
      %v2052 = vpack.c.b16 %v2051, %v2050
      %2053 = vrot.lane.b32.xlu0 %v1617, 96
      %v2054 = vpop.permute.xlu0 %2053
      %v2057 = vsel %vm1771, %v2052, 0
      %2059 = vmatpush.bf16.msra.mxu0 0
      %2060 = vmatpush.bf16.msra.mxu0 0
      %2061 = vmatpush.bf16.msra.mxu0 0
      %2062 = vmatpush.bf16.msra.mxu0 0
      %2063 = vmatpush.bf16.msra.mxu0 0
      %2064 = vmatpush.bf16.msra.mxu0 0
      %2065 = vmatpush.bf16.msra.mxu0 0
      %2066 = vmatpush.bf16.msra.mxu0 %v2054
      %2067 = vmatmul.bf16.gmra.mxu0 %v2057
      %v2068 = vpop.f32.mrf.mxu0
      %v2069 = vadd.f32 0.0, %v2068
      %v2070 = vpop.f32.mrf.mxu0
      %v2071 = vadd.f32 0.0, %v2070
      %2072 = vdwg.mxu0
      %v2075 = vunpack.c.l.b16 %v1942
      %v2076 = vunpack.c.l.b16 %v1943
      %v2077 = vpack.c.b16 %v2076, %v2075
      %2078 = vrot.lane.b32.xlu0 %v1647, 96
      %v2079 = vpop.permute.xlu0 %2078
      %v2082 = vsel %vm1771, %v2077, 0
      %2084 = vmatpush.bf16.msra.mxu0 0
      %2085 = vmatpush.bf16.msra.mxu0 0
      %2086 = vmatpush.bf16.msra.mxu0 0
      %2087 = vmatpush.bf16.msra.mxu0 0
      %2088 = vmatpush.bf16.msra.mxu0 0
      %2089 = vmatpush.bf16.msra.mxu0 0
      %2090 = vmatpush.bf16.msra.mxu0 0
      %2091 = vmatpush.bf16.msra.mxu0 %v2079
      %2092 = vmatmul.bf16.gmra.mxu0 %v2082
      %v2093 = vpop.f32.mrf.mxu0
      %v2094 = vadd.f32 0.0, %v2093
      %v2095 = vpop.f32.mrf.mxu0
      %v2096 = vadd.f32 0.0, %v2095
      %2097 = vdwg.mxu0
      %v2100 = vunpack.c.l.b16 %v1944
      %v2101 = vunpack.c.l.b16 %v1945
      %v2102 = vpack.c.b16 %v2101, %v2100
      %2103 = vrot.lane.b32.xlu0 %v1677, 96
      %v2104 = vpop.permute.xlu0 %2103
      %v2107 = vsel %vm1771, %v2102, 0
      %2109 = vmatpush.bf16.msra.mxu0 0
      %2110 = vmatpush.bf16.msra.mxu0 0
      %2111 = vmatpush.bf16.msra.mxu0 0
      %2112 = vmatpush.bf16.msra.mxu0 0
      %2113 = vmatpush.bf16.msra.mxu0 0
      %2114 = vmatpush.bf16.msra.mxu0 0
      %2115 = vmatpush.bf16.msra.mxu0 0
      %2116 = vmatpush.bf16.msra.mxu0 %v2104
      %2117 = vmatmul.bf16.gmra.mxu0 %v2107
      %v2118 = vpop.f32.mrf.mxu0
      %v2119 = vadd.f32 0.0, %v2118
      %v2120 = vpop.f32.mrf.mxu0
      %v2121 = vadd.f32 0.0, %v2120
      %2122 = vdwg.mxu0
      %v2125 = vunpack.c.l.b16 %v1946
      %v2126 = vunpack.c.l.b16 %v1947
      %v2127 = vpack.c.b16 %v2126, %v2125
      %2128 = vrot.lane.b32.xlu0 %v1707, 96
      %v2129 = vpop.permute.xlu0 %2128
      %v2132 = vsel %vm1771, %v2127, 0
      %2134 = vmatpush.bf16.msra.mxu0 0
      %2135 = vmatpush.bf16.msra.mxu0 0
      %2136 = vmatpush.bf16.msra.mxu0 0
      %2137 = vmatpush.bf16.msra.mxu0 0
      %2138 = vmatpush.bf16.msra.mxu0 0
      %2139 = vmatpush.bf16.msra.mxu0 0
      %2140 = vmatpush.bf16.msra.mxu0 0
      %2141 = vmatpush.bf16.msra.mxu0 %v2129
      %2142 = vmatmul.bf16.gmra.mxu0 %v2132
      %v2143 = vpop.f32.mrf.mxu0
      %v2144 = vadd.f32 0.0, %v2143
      %v2145 = vpop.f32.mrf.mxu0
      %v2146 = vadd.f32 0.0, %v2145
      %2147 = vdwg.mxu0
      %v2148 = vmul.f32 %v1969, %v1916
      %v2149 = vmul.f32 %v1971, %v1917
      %v2150 = vmul.f32 %v1994, %v1918
      %v2151 = vmul.f32 %v1996, %v1919
      %v2152 = vmul.f32 %v2019, %v1920
      %v2153 = vmul.f32 %v2021, %v1921
      %v2154 = vmul.f32 %v2044, %v1922
      %v2155 = vmul.f32 %v2046, %v1923
      %v2156 = vmul.f32 %v2069, %v1924
      %v2157 = vmul.f32 %v2071, %v1925
      %v2158 = vmul.f32 %v2094, %v1926
      %v2159 = vmul.f32 %v2096, %v1927
      %v2160 = vmul.f32 %v2119, %v1928
      %v2161 = vmul.f32 %v2121, %v1929
      %v2162 = vmul.f32 %v2144, %v1930
      %v2163 = vmul.f32 %v2146, %v1931
      %v2164 = vpack.c.bf16 %v2149, %v2148
      %v2165 = vpack.c.bf16 %v2151, %v2150
      %v2166 = vpack.c.bf16 %v2153, %v2152
      %v2167 = vpack.c.bf16 %v2155, %v2154
      %v2168 = vpack.c.bf16 %v2157, %v2156
      %v2169 = vpack.c.bf16 %v2159, %v2158
      %v2170 = vpack.c.bf16 %v2161, %v2160
      %v2171 = vpack.c.bf16 %v2163, %v2162
      %v2172 = vld [vmem:[%s8] sm:$0xf]
      %v2173 = vld [vmem:[%s8 + $0x4] sm:$0xf]
      %v2174 = vld [vmem:[%s8 + $0x8] sm:$0xf]
      %v2175 = vld [vmem:[%s8 + $0xc] sm:$0xf]
      %v2176 = vld [vmem:[%s9] sm:$0x1]
      %v2178 = vperm.slane %v2176, 0
      %v2184 = vunpack.c.l.b16 %v2172
      %v2185 = vunpack.c.l.b16 %v2173
      %v2186 = vunpack.c.l.b16 %v2174
      %v2187 = vunpack.c.l.b16 %v2175
      %v2188 = vpack.c.b16 %v2185, %v2184
      %v2189 = vpack.c.b16 %v2187, %v2186
      %v2193 = vsel %vm854, %v2164, 0
      %v2196 = vsel %vm854, %v2165, 0
      %v2199 = vsel %vm854, %v2166, 0
      %v2202 = vsel %vm854, %v2167, 0
      %v2205 = vsel %vm854, %v2168, 0
      %v2208 = vsel %vm854, %v2169, 0
      %v2211 = vsel %vm854, %v2170, 0
      %v2214 = vsel %vm854, %v2171, 0
      %2216 = vmatpush.bf16.msra.mxu0 0
      %2217 = vmatpush.bf16.msra.mxu0 0
      %2218 = vmatpush.bf16.msra.mxu0 0
      %2219 = vmatpush.bf16.msra.mxu0 0
      %2220 = vmatpush.bf16.msra.mxu0 0
      %2221 = vmatpush.bf16.msra.mxu0 0
      %2222 = vmatpush.bf16.msra.mxu0 %v2189
      %2223 = vmatpush.bf16.msra.mxu0 %v2188
      %2224 = vmatmul.bf16.gmra.mxu0 %v2193
      %v2225 = vpop.f32.mrf.mxu0
      %v2226 = vadd.f32 %v2178, %v2225
      %v2227 = vpop.f32.mrf.mxu0
      %v2228 = vadd.f32 %v2178, %v2227
      %2229 = vmatmul.bf16.gmra.mxu0 %v2196
      %v2230 = vpop.f32.mrf.mxu0
      %v2231 = vadd.f32 %v2178, %v2230
      %v2232 = vpop.f32.mrf.mxu0
      %v2233 = vadd.f32 %v2178, %v2232
      %2234 = vmatmul.bf16.gmra.mxu0 %v2199
      %v2235 = vpop.f32.mrf.mxu0
      %v2236 = vadd.f32 %v2178, %v2235
      %v2237 = vpop.f32.mrf.mxu0
      %v2238 = vadd.f32 %v2178, %v2237
      %2239 = vmatmul.bf16.gmra.mxu0 %v2202
      %v2240 = vpop.f32.mrf.mxu0
      %v2241 = vadd.f32 %v2178, %v2240
      %v2242 = vpop.f32.mrf.mxu0
      %v2243 = vadd.f32 %v2178, %v2242
      %2244 = vmatmul.bf16.gmra.mxu0 %v2205
      %v2245 = vpop.f32.mrf.mxu0
      %v2246 = vadd.f32 %v2178, %v2245
      %v2247 = vpop.f32.mrf.mxu0
      %v2248 = vadd.f32 %v2178, %v2247
      %2249 = vmatmul.bf16.gmra.mxu0 %v2208
      %v2250 = vpop.f32.mrf.mxu0
      %v2251 = vadd.f32 %v2178, %v2250
      %v2252 = vpop.f32.mrf.mxu0
      %v2253 = vadd.f32 %v2178, %v2252
      %2254 = vmatmul.bf16.gmra.mxu0 %v2211
      %v2255 = vpop.f32.mrf.mxu0
      %v2256 = vadd.f32 %v2178, %v2255
      %v2257 = vpop.f32.mrf.mxu0
      %v2258 = vadd.f32 %v2178, %v2257
      %2259 = vmatmul.bf16.gmra.mxu0 %v2214
      %v2260 = vpop.f32.mrf.mxu0
      %v2261 = vadd.f32 %v2178, %v2260
      %v2262 = vpop.f32.mrf.mxu0
      %v2263 = vadd.f32 %v2178, %v2262
      %2264 = vdwg.mxu0
      %v2265 = vadd.f32 %v1238, %v2226
      %v2266 = vadd.f32 %v1239, %v2228
      %v2267 = vadd.f32 %v1240, %v2231
      %v2268 = vadd.f32 %v1241, %v2233
      %v2269 = vadd.f32 %v1242, %v2236
      %v2270 = vadd.f32 %v1243, %v2238
      %v2271 = vadd.f32 %v1244, %v2241
      %v2272 = vadd.f32 %v1245, %v2243
      %v2273 = vadd.f32 %v1246, %v2246
      %v2274 = vadd.f32 %v1247, %v2248
      %v2275 = vadd.f32 %v1248, %v2251
      %v2276 = vadd.f32 %v1249, %v2253
      %v2277 = vadd.f32 %v1250, %v2256
      %v2278 = vadd.f32 %v1251, %v2258
      %v2279 = vadd.f32 %v1252, %v2261
      %v2280 = vadd.f32 %v1253, %v2263
      %v2281 = vsel %vm854, %v2265, 0.0
      %2282 = vadd.xlane.f32.xlu0 %v2281
      %v2283 = vpop.xlane.xlu0 %2282
      %v2284 = vsel %vm854, %v2266, 0.0
      %2285 = vadd.xlane.f32.xlu0 %v2284
      %v2286 = vpop.xlane.xlu0 %2285
      %v2287 = vsel %vm854, %v2267, 0.0
      %2288 = vadd.xlane.f32.xlu0 %v2287
      %v2289 = vpop.xlane.xlu0 %2288
      %v2290 = vsel %vm854, %v2268, 0.0
      %2291 = vadd.xlane.f32.xlu0 %v2290
      %v2292 = vpop.xlane.xlu0 %2291
      %v2293 = vsel %vm854, %v2269, 0.0
      %2294 = vadd.xlane.f32.xlu0 %v2293
      %v2295 = vpop.xlane.xlu0 %2294
      %v2296 = vsel %vm854, %v2270, 0.0
      %2297 = vadd.xlane.f32.xlu0 %v2296
      %v2298 = vpop.xlane.xlu0 %2297
      %v2299 = vsel %vm854, %v2271, 0.0
      %2300 = vadd.xlane.f32.xlu0 %v2299
      %v2301 = vpop.xlane.xlu0 %2300
      %v2302 = vsel %vm854, %v2272, 0.0
      %2303 = vadd.xlane.f32.xlu0 %v2302
      %v2304 = vpop.xlane.xlu0 %2303
      %v2305 = vsel %vm854, %v2273, 0.0
      %2306 = vadd.xlane.f32.xlu0 %v2305
      %v2307 = vpop.xlane.xlu0 %2306
      %v2308 = vsel %vm854, %v2274, 0.0
      %2309 = vadd.xlane.f32.xlu0 %v2308
      %v2310 = vpop.xlane.xlu0 %2309
      %v2311 = vsel %vm854, %v2275, 0.0
      %2312 = vadd.xlane.f32.xlu0 %v2311
      %v2313 = vpop.xlane.xlu0 %2312
      %v2314 = vsel %vm854, %v2276, 0.0
      %2315 = vadd.xlane.f32.xlu0 %v2314
      %v2316 = vpop.xlane.xlu0 %2315
      %v2317 = vsel %vm854, %v2277, 0.0
      %2318 = vadd.xlane.f32.xlu0 %v2317
      %v2319 = vpop.xlane.xlu0 %2318
      %v2320 = vsel %vm854, %v2278, 0.0
      %2321 = vadd.xlane.f32.xlu0 %v2320
      %v2322 = vpop.xlane.xlu0 %2321
      %v2323 = vsel %vm854, %v2279, 0.0
      %2324 = vadd.xlane.f32.xlu0 %v2323
      %v2325 = vpop.xlane.xlu0 %2324
      %v2326 = vsel %vm854, %v2280, 0.0
      %2327 = vadd.xlane.f32.xlu0 %v2326
      %v2328 = vpop.xlane.xlu0 %2327
      %v2329 = vmul.f32 %v2283, %v909
      %v2330 = vmul.f32 %v2286, %v909
      %v2331 = vmul.f32 %v2289, %v909
      %v2332 = vmul.f32 %v2292, %v909
      %v2333 = vmul.f32 %v2295, %v909
      %v2334 = vmul.f32 %v2298, %v909
      %v2335 = vmul.f32 %v2301, %v909
      %v2336 = vmul.f32 %v2304, %v909
      %v2337 = vmul.f32 %v2307, %v909
      %v2338 = vmul.f32 %v2310, %v909
      %v2339 = vmul.f32 %v2313, %v909
      %v2340 = vmul.f32 %v2316, %v909
      %v2341 = vmul.f32 %v2319, %v909
      %v2342 = vmul.f32 %v2322, %v909
      %v2343 = vmul.f32 %v2325, %v909
      %v2344 = vmul.f32 %v2328, %v909
      %v2345 = vsub.f32 %v2265, %v2329
      %v2346 = vsub.f32 %v2266, %v2330
      %v2347 = vsub.f32 %v2267, %v2331
      %v2348 = vsub.f32 %v2268, %v2332
      %v2349 = vsub.f32 %v2269, %v2333
      %v2350 = vsub.f32 %v2270, %v2334
      %v2351 = vsub.f32 %v2271, %v2335
      %v2352 = vsub.f32 %v2272, %v2336
      %v2353 = vsub.f32 %v2273, %v2337
      %v2354 = vsub.f32 %v2274, %v2338
      %v2355 = vsub.f32 %v2275, %v2339
      %v2356 = vsub.f32 %v2276, %v2340
      %v2357 = vsub.f32 %v2277, %v2341
      %v2358 = vsub.f32 %v2278, %v2342
      %v2359 = vsub.f32 %v2279, %v2343
      %v2360 = vsub.f32 %v2280, %v2344
      %v2361 = vmul.f32 %v2345, %v2345
      %v2362 = vmul.f32 %v2346, %v2346
      %v2363 = vmul.f32 %v2347, %v2347
      %v2364 = vmul.f32 %v2348, %v2348
      %v2365 = vmul.f32 %v2349, %v2349
      %v2366 = vmul.f32 %v2350, %v2350
      %v2367 = vmul.f32 %v2351, %v2351
      %v2368 = vmul.f32 %v2352, %v2352
      %v2369 = vmul.f32 %v2353, %v2353
      %v2370 = vmul.f32 %v2354, %v2354
      %v2371 = vmul.f32 %v2355, %v2355
      %v2372 = vmul.f32 %v2356, %v2356
      %v2373 = vmul.f32 %v2357, %v2357
      %v2374 = vmul.f32 %v2358, %v2358
      %v2375 = vmul.f32 %v2359, %v2359
      %v2376 = vmul.f32 %v2360, %v2360
      %v2377 = vsel %vm854, %v2361, 0.0
      %2378 = vadd.xlane.f32.xlu0 %v2377
      %v2379 = vpop.xlane.xlu0 %2378
      %v2380 = vsel %vm854, %v2362, 0.0
      %2381 = vadd.xlane.f32.xlu0 %v2380
      %v2382 = vpop.xlane.xlu0 %2381
      %v2383 = vsel %vm854, %v2363, 0.0
      %2384 = vadd.xlane.f32.xlu0 %v2383
      %v2385 = vpop.xlane.xlu0 %2384
      %v2386 = vsel %vm854, %v2364, 0.0
      %2387 = vadd.xlane.f32.xlu0 %v2386
      %v2388 = vpop.xlane.xlu0 %2387
      %v2389 = vsel %vm854, %v2365, 0.0
      %2390 = vadd.xlane.f32.xlu0 %v2389
      %v2391 = vpop.xlane.xlu0 %2390
      %v2392 = vsel %vm854, %v2366, 0.0
      %2393 = vadd.xlane.f32.xlu0 %v2392
      %v2394 = vpop.xlane.xlu0 %2393
      %v2395 = vsel %vm854, %v2367, 0.0
      %2396 = vadd.xlane.f32.xlu0 %v2395
      %v2397 = vpop.xlane.xlu0 %2396
      %v2398 = vsel %vm854, %v2368, 0.0
      %2399 = vadd.xlane.f32.xlu0 %v2398
      %v2400 = vpop.xlane.xlu0 %2399
      %v2401 = vsel %vm854, %v2369, 0.0
      %2402 = vadd.xlane.f32.xlu0 %v2401
      %v2403 = vpop.xlane.xlu0 %2402
      %v2404 = vsel %vm854, %v2370, 0.0
      %2405 = vadd.xlane.f32.xlu0 %v2404
      %v2406 = vpop.xlane.xlu0 %2405
      %v2407 = vsel %vm854, %v2371, 0.0
      %2408 = vadd.xlane.f32.xlu0 %v2407
      %v2409 = vpop.xlane.xlu0 %2408
      %v2410 = vsel %vm854, %v2372, 0.0
      %2411 = vadd.xlane.f32.xlu0 %v2410
      %v2412 = vpop.xlane.xlu0 %2411
      %v2413 = vsel %vm854, %v2373, 0.0
      %2414 = vadd.xlane.f32.xlu0 %v2413
      %v2415 = vpop.xlane.xlu0 %2414
      %v2416 = vsel %vm854, %v2374, 0.0
      %2417 = vadd.xlane.f32.xlu0 %v2416
      %v2418 = vpop.xlane.xlu0 %2417
      %v2419 = vsel %vm854, %v2375, 0.0
      %2420 = vadd.xlane.f32.xlu0 %v2419
      %v2421 = vpop.xlane.xlu0 %2420
      %v2422 = vsel %vm854, %v2376, 0.0
      %2423 = vadd.xlane.f32.xlu0 %v2422
      %v2424 = vpop.xlane.xlu0 %2423
      %v2425 = vmul.f32 %v2379, %v909
      %v2426 = vmul.f32 %v2382, %v909
      %v2427 = vmul.f32 %v2385, %v909
      %v2428 = vmul.f32 %v2388, %v909
      %v2429 = vmul.f32 %v2391, %v909
      %v2430 = vmul.f32 %v2394, %v909
      %v2431 = vmul.f32 %v2397, %v909
      %v2432 = vmul.f32 %v2400, %v909
      %v2433 = vmul.f32 %v2403, %v909
      %v2434 = vmul.f32 %v2406, %v909
      %v2435 = vmul.f32 %v2409, %v909
      %v2436 = vmul.f32 %v2412, %v909
      %v2437 = vmul.f32 %v2415, %v909
      %v2438 = vmul.f32 %v2418, %v909
      %v2439 = vmul.f32 %v2421, %v909
      %v2440 = vmul.f32 %v2424, %v909
      %v2441 = vadd.f32 %v2425, 1e-08
      %v2442 = vadd.f32 %v2426, 1e-08
      %v2443 = vadd.f32 %v2427, 1e-08
      %v2444 = vadd.f32 %v2428, 1e-08
      %v2445 = vadd.f32 %v2429, 1e-08
      %v2446 = vadd.f32 %v2430, 1e-08
      %v2447 = vadd.f32 %v2431, 1e-08
      %v2448 = vadd.f32 %v2432, 1e-08
      %v2449 = vadd.f32 %v2433, 1e-08
      %v2450 = vadd.f32 %v2434, 1e-08
      %v2451 = vadd.f32 %v2435, 1e-08
      %v2452 = vadd.f32 %v2436, 1e-08
      %v2453 = vadd.f32 %v2437, 1e-08
      %v2454 = vadd.f32 %v2438, 1e-08
      %v2455 = vadd.f32 %v2439, 1e-08
      %v2456 = vadd.f32 %v2440, 1e-08
      %v2457 = vrsqrt.pop %v2441
      %v2458 = vmul.f32 %v2457, %v2441
      %v2459 = vmul.f32 %v2458, %v2457
      %v2460 = vmul.f32 0.5, %v2459
      %v2461 = vsub.f32 1.5, %v2460
      %v2462 = vmul.f32 %v2457, %v2461
      %vm2463 = vweird.f32 %v2441
      %vm2464 = vweird.f32 %v2457
      %vm2465 = vmor %vm2463, %vm2464
      %v2466 = vsel %vm2465, %v2457, %v2462
      %v2467 = vrsqrt.pop %v2442
      %v2468 = vmul.f32 %v2467, %v2442
      %v2469 = vmul.f32 %v2468, %v2467
      %v2470 = vmul.f32 0.5, %v2469
      %v2471 = vsub.f32 1.5, %v2470
      %v2472 = vmul.f32 %v2467, %v2471
      %vm2473 = vweird.f32 %v2442
      %vm2474 = vweird.f32 %v2467
      %vm2475 = vmor %vm2473, %vm2474
      %v2476 = vsel %vm2475, %v2467, %v2472
      %v2477 = vrsqrt.pop %v2443
      %v2478 = vmul.f32 %v2477, %v2443
      %v2479 = vmul.f32 %v2478, %v2477
      %v2480 = vmul.f32 0.5, %v2479
      %v2481 = vsub.f32 1.5, %v2480
      %v2482 = vmul.f32 %v2477, %v2481
      %vm2483 = vweird.f32 %v2443
      %vm2484 = vweird.f32 %v2477
      %vm2485 = vmor %vm2483, %vm2484
      %v2486 = vsel %vm2485, %v2477, %v2482
      %v2487 = vrsqrt.pop %v2444
      %v2488 = vmul.f32 %v2487, %v2444
      %v2489 = vmul.f32 %v2488, %v2487
      %v2490 = vmul.f32 0.5, %v2489
      %v2491 = vsub.f32 1.5, %v2490
      %v2492 = vmul.f32 %v2487, %v2491
      %vm2493 = vweird.f32 %v2444
      %vm2494 = vweird.f32 %v2487
      %vm2495 = vmor %vm2493, %vm2494
      %v2496 = vsel %vm2495, %v2487, %v2492
      %v2497 = vrsqrt.pop %v2445
      %v2498 = vmul.f32 %v2497, %v2445
      %v2499 = vmul.f32 %v2498, %v2497
      %v2500 = vmul.f32 0.5, %v2499
      %v2501 = vsub.f32 1.5, %v2500
      %v2502 = vmul.f32 %v2497, %v2501
      %vm2503 = vweird.f32 %v2445
      %vm2504 = vweird.f32 %v2497
      %vm2505 = vmor %vm2503, %vm2504
      %v2506 = vsel %vm2505, %v2497, %v2502
      %v2507 = vrsqrt.pop %v2446
      %v2508 = vmul.f32 %v2507, %v2446
      %v2509 = vmul.f32 %v2508, %v2507
      %v2510 = vmul.f32 0.5, %v2509
      %v2511 = vsub.f32 1.5, %v2510
      %v2512 = vmul.f32 %v2507, %v2511
      %vm2513 = vweird.f32 %v2446
      %vm2514 = vweird.f32 %v2507
      %vm2515 = vmor %vm2513, %vm2514
      %v2516 = vsel %vm2515, %v2507, %v2512
      %v2517 = vrsqrt.pop %v2447
      %v2518 = vmul.f32 %v2517, %v2447
      %v2519 = vmul.f32 %v2518, %v2517
      %v2520 = vmul.f32 0.5, %v2519
      %v2521 = vsub.f32 1.5, %v2520
      %v2522 = vmul.f32 %v2517, %v2521
      %vm2523 = vweird.f32 %v2447
      %vm2524 = vweird.f32 %v2517
      %vm2525 = vmor %vm2523, %vm2524
      %v2526 = vsel %vm2525, %v2517, %v2522
      %v2527 = vrsqrt.pop %v2448
      %v2528 = vmul.f32 %v2527, %v2448
      %v2529 = vmul.f32 %v2528, %v2527
      %v2530 = vmul.f32 0.5, %v2529
      %v2531 = vsub.f32 1.5, %v2530
      %v2532 = vmul.f32 %v2527, %v2531
      %vm2533 = vweird.f32 %v2448
      %vm2534 = vweird.f32 %v2527
      %vm2535 = vmor %vm2533, %vm2534
      %v2536 = vsel %vm2535, %v2527, %v2532
      %v2537 = vrsqrt.pop %v2449
      %v2538 = vmul.f32 %v2537, %v2449
      %v2539 = vmul.f32 %v2538, %v2537
      %v2540 = vmul.f32 0.5, %v2539
      %v2541 = vsub.f32 1.5, %v2540
      %v2542 = vmul.f32 %v2537, %v2541
      %vm2543 = vweird.f32 %v2449
      %vm2544 = vweird.f32 %v2537
      %vm2545 = vmor %vm2543, %vm2544
      %v2546 = vsel %vm2545, %v2537, %v2542
      %v2547 = vrsqrt.pop %v2450
      %v2548 = vmul.f32 %v2547, %v2450
      %v2549 = vmul.f32 %v2548, %v2547
      %v2550 = vmul.f32 0.5, %v2549
      %v2551 = vsub.f32 1.5, %v2550
      %v2552 = vmul.f32 %v2547, %v2551
      %vm2553 = vweird.f32 %v2450
      %vm2554 = vweird.f32 %v2547
      %vm2555 = vmor %vm2553, %vm2554
      %v2556 = vsel %vm2555, %v2547, %v2552
      %v2557 = vrsqrt.pop %v2451
      %v2558 = vmul.f32 %v2557, %v2451
      %v2559 = vmul.f32 %v2558, %v2557
      %v2560 = vmul.f32 0.5, %v2559
      %v2561 = vsub.f32 1.5, %v2560
      %v2562 = vmul.f32 %v2557, %v2561
      %vm2563 = vweird.f32 %v2451
      %vm2564 = vweird.f32 %v2557
      %vm2565 = vmor %vm2563, %vm2564
      %v2566 = vsel %vm2565, %v2557, %v2562
      %v2567 = vrsqrt.pop %v2452
      %v2568 = vmul.f32 %v2567, %v2452
      %v2569 = vmul.f32 %v2568, %v2567
      %v2570 = vmul.f32 0.5, %v2569
      %v2571 = vsub.f32 1.5, %v2570
      %v2572 = vmul.f32 %v2567, %v2571
      %vm2573 = vweird.f32 %v2452
      %vm2574 = vweird.f32 %v2567
      %vm2575 = vmor %vm2573, %vm2574
      %v2576 = vsel %vm2575, %v2567, %v2572
      %v2577 = vrsqrt.pop %v2453
      %v2578 = vmul.f32 %v2577, %v2453
      %v2579 = vmul.f32 %v2578, %v2577
      %v2580 = vmul.f32 0.5, %v2579
      %v2581 = vsub.f32 1.5, %v2580
      %v2582 = vmul.f32 %v2577, %v2581
      %vm2583 = vweird.f32 %v2453
      %vm2584 = vweird.f32 %v2577
      %vm2585 = vmor %vm2583, %vm2584
      %v2586 = vsel %vm2585, %v2577, %v2582
      %v2587 = vrsqrt.pop %v2454
      %v2588 = vmul.f32 %v2587, %v2454
      %v2589 = vmul.f32 %v2588, %v2587
      %v2590 = vmul.f32 0.5, %v2589
      %v2591 = vsub.f32 1.5, %v2590
      %v2592 = vmul.f32 %v2587, %v2591
      %vm2593 = vweird.f32 %v2454
      %vm2594 = vweird.f32 %v2587
      %vm2595 = vmor %vm2593, %vm2594
      %v2596 = vsel %vm2595, %v2587, %v2592
      %v2597 = vrsqrt.pop %v2455
      %v2598 = vmul.f32 %v2597, %v2455
      %v2599 = vmul.f32 %v2598, %v2597
      %v2600 = vmul.f32 0.5, %v2599
      %v2601 = vsub.f32 1.5, %v2600
      %v2602 = vmul.f32 %v2597, %v2601
      %vm2603 = vweird.f32 %v2455
      %vm2604 = vweird.f32 %v2597
      %vm2605 = vmor %vm2603, %vm2604
      %v2606 = vsel %vm2605, %v2597, %v2602
      %v2607 = vrsqrt.pop %v2456
      %v2608 = vmul.f32 %v2607, %v2456
      %v2609 = vmul.f32 %v2608, %v2607
      %v2610 = vmul.f32 0.5, %v2609
      %v2611 = vsub.f32 1.5, %v2610
      %v2612 = vmul.f32 %v2607, %v2611
      %vm2613 = vweird.f32 %v2456
      %vm2614 = vweird.f32 %v2607
      %vm2615 = vmor %vm2613, %vm2614
      %v2616 = vsel %vm2615, %v2607, %v2612
      %v2617 = vmul.f32 %v2345, %v2466
      %v2618 = vmul.f32 %v2346, %v2476
      %v2619 = vmul.f32 %v2347, %v2486
      %v2620 = vmul.f32 %v2348, %v2496
      %v2621 = vmul.f32 %v2349, %v2506
      %v2622 = vmul.f32 %v2350, %v2516
      %v2623 = vmul.f32 %v2351, %v2526
      %v2624 = vmul.f32 %v2352, %v2536
      %v2625 = vmul.f32 %v2353, %v2546
      %v2626 = vmul.f32 %v2354, %v2556
      %v2627 = vmul.f32 %v2355, %v2566
      %v2628 = vmul.f32 %v2356, %v2576
      %v2629 = vmul.f32 %v2357, %v2586
      %v2630 = vmul.f32 %v2358, %v2596
      %v2631 = vmul.f32 %v2359, %v2606
      %v2632 = vmul.f32 %v2360, %v2616
      %v2633 = vld [vmem:[%s10] sm:$0x1]
      %v2635 = vperm.slane %v2633, 0
      %v2637 = vmul.f32 %v2617, %v2635
      %v2638 = vmul.f32 %v2618, %v2635
      %v2639 = vmul.f32 %v2619, %v2635
      %v2640 = vmul.f32 %v2620, %v2635
      %v2641 = vmul.f32 %v2621, %v2635
      %v2642 = vmul.f32 %v2622, %v2635
      %v2643 = vmul.f32 %v2623, %v2635
      %v2644 = vmul.f32 %v2624, %v2635
      %v2645 = vmul.f32 %v2625, %v2635
      %v2646 = vmul.f32 %v2626, %v2635
      %v2647 = vmul.f32 %v2627, %v2635
      %v2648 = vmul.f32 %v2628, %v2635
      %v2649 = vmul.f32 %v2629, %v2635
      %v2650 = vmul.f32 %v2630, %v2635
      %v2651 = vmul.f32 %v2631, %v2635
      %v2652 = vmul.f32 %v2632, %v2635
      %v2653 = vld [vmem:[%s11] sm:$0x1]
      %v2655 = vperm.slane %v2653, 0
      %v2657 = vadd.f32 %v2637, %v2655
      %v2658 = vadd.f32 %v2638, %v2655
      %v2659 = vadd.f32 %v2639, %v2655
      %v2660 = vadd.f32 %v2640, %v2655
      %v2661 = vadd.f32 %v2641, %v2655
      %v2662 = vadd.f32 %v2642, %v2655
      %v2663 = vadd.f32 %v2643, %v2655
      %v2664 = vadd.f32 %v2644, %v2655
      %v2665 = vadd.f32 %v2645, %v2655
      %v2666 = vadd.f32 %v2646, %v2655
      %v2667 = vadd.f32 %v2647, %v2655
      %v2668 = vadd.f32 %v2648, %v2655
      %v2669 = vadd.f32 %v2649, %v2655
      %v2670 = vadd.f32 %v2650, %v2655
      %v2671 = vadd.f32 %v2651, %v2655
      %v2672 = vadd.f32 %v2652, %v2655
      %v2673 = vpack.c.bf16 %v2658, %v2657
      %v2674 = vpack.c.bf16 %v2660, %v2659
      %v2675 = vpack.c.bf16 %v2662, %v2661
      %v2676 = vpack.c.bf16 %v2664, %v2663
      %v2677 = vpack.c.bf16 %v2666, %v2665
      %v2678 = vpack.c.bf16 %v2668, %v2667
      %v2679 = vpack.c.bf16 %v2670, %v2669
      %v2680 = vpack.c.bf16 %v2672, %v2671
      %v2681 = vld [vmem:[%s12] sm:$0xf]
      %v2682 = vld [vmem:[%s12 + $0x4] sm:$0xf]
      %v2683 = vld [vmem:[%s12 + $0x8] sm:$0xf]
      %v2684 = vld [vmem:[%s12 + $0xc] sm:$0xf]
      %v2685 = vld [vmem:[%s13] sm:$0x1]
      %v2687 = vperm.slane %v2685, 0
      %v2693 = vunpack.c.l.b16 %v2681
      %v2694 = vunpack.c.l.b16 %v2682
      %v2695 = vunpack.c.l.b16 %v2683
      %v2696 = vunpack.c.l.b16 %v2684
      %v2697 = vpack.c.b16 %v2694, %v2693
      %v2698 = vpack.c.b16 %v2696, %v2695
      %v2702 = vsel %vm854, %v2673, 0
      %v2705 = vsel %vm854, %v2674, 0
      %v2708 = vsel %vm854, %v2675, 0
      %v2711 = vsel %vm854, %v2676, 0
      %v2714 = vsel %vm854, %v2677, 0
      %v2717 = vsel %vm854, %v2678, 0
      %v2720 = vsel %vm854, %v2679, 0
      %v2723 = vsel %vm854, %v2680, 0
      %2725 = vmatpush.bf16.msra.mxu0 0
      %2726 = vmatpush.bf16.msra.mxu0 0
      %2727 = vmatpush.bf16.msra.mxu0 0
      %2728 = vmatpush.bf16.msra.mxu0 0
      %2729 = vmatpush.bf16.msra.mxu0 0
      %2730 = vmatpush.bf16.msra.mxu0 0
      %2731 = vmatpush.bf16.msra.mxu0 %v2698
      %2732 = vmatpush.bf16.msra.mxu0 %v2697
      %2733 = vmatmul.bf16.gmra.mxu0 %v2702
      %v2734 = vpop.f32.mrf.mxu0
      %v2735 = vadd.f32 %v2687, %v2734
      %v2736 = vpop.f32.mrf.mxu0
      %v2737 = vadd.f32 %v2687, %v2736
      %2738 = vmatmul.bf16.gmra.mxu0 %v2705
      %v2739 = vpop.f32.mrf.mxu0
      %v2740 = vadd.f32 %v2687, %v2739
      %v2741 = vpop.f32.mrf.mxu0
      %v2742 = vadd.f32 %v2687, %v2741
      %2743 = vmatmul.bf16.gmra.mxu0 %v2708
      %v2744 = vpop.f32.mrf.mxu0
      %v2745 = vadd.f32 %v2687, %v2744
      %v2746 = vpop.f32.mrf.mxu0
      %v2747 = vadd.f32 %v2687, %v2746
      %2748 = vmatmul.bf16.gmra.mxu0 %v2711
      %v2749 = vpop.f32.mrf.mxu0
      %v2750 = vadd.f32 %v2687, %v2749
      %v2751 = vpop.f32.mrf.mxu0
      %v2752 = vadd.f32 %v2687, %v2751
      %2753 = vmatmul.bf16.gmra.mxu0 %v2714
      %v2754 = vpop.f32.mrf.mxu0
      %v2755 = vadd.f32 %v2687, %v2754
      %v2756 = vpop.f32.mrf.mxu0
      %v2757 = vadd.f32 %v2687, %v2756
      %2758 = vmatmul.bf16.gmra.mxu0 %v2717
      %v2759 = vpop.f32.mrf.mxu0
      %v2760 = vadd.f32 %v2687, %v2759
      %v2761 = vpop.f32.mrf.mxu0
      %v2762 = vadd.f32 %v2687, %v2761
      %2763 = vmatmul.bf16.gmra.mxu0 %v2720
      %v2764 = vpop.f32.mrf.mxu0
      %v2765 = vadd.f32 %v2687, %v2764
      %v2766 = vpop.f32.mrf.mxu0
      %v2767 = vadd.f32 %v2687, %v2766
      %2768 = vmatmul.bf16.gmra.mxu0 %v2723
      %v2769 = vpop.f32.mrf.mxu0
      %v2770 = vadd.f32 %v2687, %v2769
      %v2771 = vpop.f32.mrf.mxu0
      %v2772 = vadd.f32 %v2687, %v2771
      %2773 = vdwg.mxu0
      %v2774 = vmax.f32 %v2735, 0.0
      %v2775 = vmax.f32 %v2737, 0.0
      %v2776 = vmax.f32 %v2740, 0.0
      %v2777 = vmax.f32 %v2742, 0.0
      %v2778 = vmax.f32 %v2745, 0.0
      %v2779 = vmax.f32 %v2747, 0.0
      %v2780 = vmax.f32 %v2750, 0.0
      %v2781 = vmax.f32 %v2752, 0.0
      %v2782 = vmax.f32 %v2755, 0.0
      %v2783 = vmax.f32 %v2757, 0.0
      %v2784 = vmax.f32 %v2760, 0.0
      %v2785 = vmax.f32 %v2762, 0.0
      %v2786 = vmax.f32 %v2765, 0.0
      %v2787 = vmax.f32 %v2767, 0.0
      %v2788 = vmax.f32 %v2770, 0.0
      %v2789 = vmax.f32 %v2772, 0.0
      %v2790 = vpack.c.bf16 %v2775, %v2774
      %v2791 = vpack.c.bf16 %v2777, %v2776
      %v2792 = vpack.c.bf16 %v2779, %v2778
      %v2793 = vpack.c.bf16 %v2781, %v2780
      %v2794 = vpack.c.bf16 %v2783, %v2782
      %v2795 = vpack.c.bf16 %v2785, %v2784
      %v2796 = vpack.c.bf16 %v2787, %v2786
      %v2797 = vpack.c.bf16 %v2789, %v2788
      %v2798 = vld [vmem:[%s14] sm:$0xf]
      %v2799 = vld [vmem:[%s14 + $0x4] sm:$0xf]
      %v2800 = vld [vmem:[%s14 + $0x8] sm:$0xf]
      %v2801 = vld [vmem:[%s14 + $0xc] sm:$0xf]
      %v2802 = vld [vmem:[%s15] sm:$0x1]
      %v2804 = vperm.slane %v2802, 0
      %v2810 = vunpack.c.l.b16 %v2798
      %v2811 = vunpack.c.l.b16 %v2799
      %v2812 = vunpack.c.l.b16 %v2800
      %v2813 = vunpack.c.l.b16 %v2801
      %v2814 = vpack.c.b16 %v2811, %v2810
      %v2815 = vpack.c.b16 %v2813, %v2812
      %v2819 = vsel %vm854, %v2790, 0
      %v2822 = vsel %vm854, %v2791, 0
      %v2825 = vsel %vm854, %v2792, 0
      %v2828 = vsel %vm854, %v2793, 0
      %v2831 = vsel %vm854, %v2794, 0
      %v2834 = vsel %vm854, %v2795, 0
      %v2837 = vsel %vm854, %v2796, 0
      %v2840 = vsel %vm854, %v2797, 0
      %2842 = vmatpush.bf16.msra.mxu0 0
      %2843 = vmatpush.bf16.msra.mxu0 0
      %2844 = vmatpush.bf16.msra.mxu0 0
      %2845 = vmatpush.bf16.msra.mxu0 0
      %2846 = vmatpush.bf16.msra.mxu0 0
      %2847 = vmatpush.bf16.msra.mxu0 0
      %2848 = vmatpush.bf16.msra.mxu0 %v2815
      %2849 = vmatpush.bf16.msra.mxu0 %v2814
      %2850 = vmatmul.bf16.gmra.mxu0 %v2819
      %v2851 = vpop.f32.mrf.mxu0
      %v2852 = vadd.f32 %v2804, %v2851
      %v2853 = vpop.f32.mrf.mxu0
      %v2854 = vadd.f32 %v2804, %v2853
      %2855 = vmatmul.bf16.gmra.mxu0 %v2822
      %v2856 = vpop.f32.mrf.mxu0
      %v2857 = vadd.f32 %v2804, %v2856
      %v2858 = vpop.f32.mrf.mxu0
      %v2859 = vadd.f32 %v2804, %v2858
      %2860 = vmatmul.bf16.gmra.mxu0 %v2825
      %v2861 = vpop.f32.mrf.mxu0
      %v2862 = vadd.f32 %v2804, %v2861
      %v2863 = vpop.f32.mrf.mxu0
      %v2864 = vadd.f32 %v2804, %v2863
      %2865 = vmatmul.bf16.gmra.mxu0 %v2828
      %v2866 = vpop.f32.mrf.mxu0
      %v2867 = vadd.f32 %v2804, %v2866
      %v2868 = vpop.f32.mrf.mxu0
      %v2869 = vadd.f32 %v2804, %v2868
      %2870 = vmatmul.bf16.gmra.mxu0 %v2831
      %v2871 = vpop.f32.mrf.mxu0
      %v2872 = vadd.f32 %v2804, %v2871
      %v2873 = vpop.f32.mrf.mxu0
      %v2874 = vadd.f32 %v2804, %v2873
      %2875 = vmatmul.bf16.gmra.mxu0 %v2834
      %v2876 = vpop.f32.mrf.mxu0
      %v2877 = vadd.f32 %v2804, %v2876
      %v2878 = vpop.f32.mrf.mxu0
      %v2879 = vadd.f32 %v2804, %v2878
      %2880 = vmatmul.bf16.gmra.mxu0 %v2837
      %v2881 = vpop.f32.mrf.mxu0
      %v2882 = vadd.f32 %v2804, %v2881
      %v2883 = vpop.f32.mrf.mxu0
      %v2884 = vadd.f32 %v2804, %v2883
      %2885 = vmatmul.bf16.gmra.mxu0 %v2840
      %v2886 = vpop.f32.mrf.mxu0
      %v2887 = vadd.f32 %v2804, %v2886
      %v2888 = vpop.f32.mrf.mxu0
      %v2889 = vadd.f32 %v2804, %v2888
      %2890 = vdwg.mxu0
      %v2891 = vadd.f32 %v2657, %v2852
      %v2892 = vadd.f32 %v2658, %v2854
      %v2893 = vadd.f32 %v2659, %v2857
      %v2894 = vadd.f32 %v2660, %v2859
      %v2895 = vadd.f32 %v2661, %v2862
      %v2896 = vadd.f32 %v2662, %v2864
      %v2897 = vadd.f32 %v2663, %v2867
      %v2898 = vadd.f32 %v2664, %v2869
      %v2899 = vadd.f32 %v2665, %v2872
      %v2900 = vadd.f32 %v2666, %v2874
      %v2901 = vadd.f32 %v2667, %v2877
      %v2902 = vadd.f32 %v2668, %v2879
      %v2903 = vadd.f32 %v2669, %v2882
      %v2904 = vadd.f32 %v2670, %v2884
      %v2905 = vadd.f32 %v2671, %v2887
      %v2906 = vadd.f32 %v2672, %v2889
      %v2907 = vmul.f32 %v2891, %v708
      %v2908 = vmul.f32 %v2892, %v714
      %v2909 = vmul.f32 %v2893, %v721
      %v2910 = vmul.f32 %v2894, %v727
      %v2911 = vmul.f32 %v2895, %v734
      %v2912 = vmul.f32 %v2896, %v740
      %v2913 = vmul.f32 %v2897, %v747
      %v2914 = vmul.f32 %v2898, %v753
      %v2915 = vmul.f32 %v2899, %v760
      %v2916 = vmul.f32 %v2900, %v766
      %v2917 = vmul.f32 %v2901, %v773
      %v2918 = vmul.f32 %v2902, %v779
      %v2919 = vmul.f32 %v2903, %v786
      %v2920 = vmul.f32 %v2904, %v792
      %v2921 = vmul.f32 %v2905, %v799
      %v2922 = vmul.f32 %v2906, %v805
      %v2923 = vsel %vm854, %v2907, 0.0
      %2924 = vadd.xlane.f32.xlu0 %v2923
      %v2925 = vpop.xlane.xlu0 %2924
      %v2926 = vsel %vm854, %v2908, 0.0
      %2927 = vadd.xlane.f32.xlu0 %v2926
      %v2928 = vpop.xlane.xlu0 %2927
      %v2929 = vsel %vm854, %v2909, 0.0
      %2930 = vadd.xlane.f32.xlu0 %v2929
      %v2931 = vpop.xlane.xlu0 %2930
      %v2932 = vsel %vm854, %v2910, 0.0
      %2933 = vadd.xlane.f32.xlu0 %v2932
      %v2934 = vpop.xlane.xlu0 %2933
      %v2935 = vsel %vm854, %v2911, 0.0
      %2936 = vadd.xlane.f32.xlu0 %v2935
      %v2937 = vpop.xlane.xlu0 %2936
      %v2938 = vsel %vm854, %v2912, 0.0
      %2939 = vadd.xlane.f32.xlu0 %v2938
      %v2940 = vpop.xlane.xlu0 %2939
      %v2941 = vsel %vm854, %v2913, 0.0
      %2942 = vadd.xlane.f32.xlu0 %v2941
      %v2943 = vpop.xlane.xlu0 %2942
      %v2944 = vsel %vm854, %v2914, 0.0
      %2945 = vadd.xlane.f32.xlu0 %v2944
      %v2946 = vpop.xlane.xlu0 %2945
      %v2947 = vsel %vm854, %v2915, 0.0
      %2948 = vadd.xlane.f32.xlu0 %v2947
      %v2949 = vpop.xlane.xlu0 %2948
      %v2950 = vsel %vm854, %v2916, 0.0
      %2951 = vadd.xlane.f32.xlu0 %v2950
      %v2952 = vpop.xlane.xlu0 %2951
      %v2953 = vsel %vm854, %v2917, 0.0
      %2954 = vadd.xlane.f32.xlu0 %v2953
      %v2955 = vpop.xlane.xlu0 %2954
      %v2956 = vsel %vm854, %v2918, 0.0
      %2957 = vadd.xlane.f32.xlu0 %v2956
      %v2958 = vpop.xlane.xlu0 %2957
      %v2959 = vsel %vm854, %v2919, 0.0
      %2960 = vadd.xlane.f32.xlu0 %v2959
      %v2961 = vpop.xlane.xlu0 %2960
      %v2962 = vsel %vm854, %v2920, 0.0
      %2963 = vadd.xlane.f32.xlu0 %v2962
      %v2964 = vpop.xlane.xlu0 %2963
      %v2965 = vsel %vm854, %v2921, 0.0
      %2966 = vadd.xlane.f32.xlu0 %v2965
      %v2967 = vpop.xlane.xlu0 %2966
      %v2968 = vsel %vm854, %v2922, 0.0
      %2969 = vadd.xlane.f32.xlu0 %v2968
      %v2970 = vpop.xlane.xlu0 %2969
      %v2971 = vmul.f32 %v2925, %v909
      %v2972 = vmul.f32 %v2928, %v909
      %v2973 = vmul.f32 %v2931, %v909
      %v2974 = vmul.f32 %v2934, %v909
      %v2975 = vmul.f32 %v2937, %v909
      %v2976 = vmul.f32 %v2940, %v909
      %v2977 = vmul.f32 %v2943, %v909
      %v2978 = vmul.f32 %v2946, %v909
      %v2979 = vmul.f32 %v2949, %v909
      %v2980 = vmul.f32 %v2952, %v909
      %v2981 = vmul.f32 %v2955, %v909
      %v2982 = vmul.f32 %v2958, %v909
      %v2983 = vmul.f32 %v2961, %v909
      %v2984 = vmul.f32 %v2964, %v909
      %v2985 = vmul.f32 %v2967, %v909
      %v2986 = vmul.f32 %v2970, %v909
      %v2987 = vsub.f32 %v2907, %v2971
      %v2988 = vsub.f32 %v2908, %v2972
      %v2989 = vsub.f32 %v2909, %v2973
      %v2990 = vsub.f32 %v2910, %v2974
      %v2991 = vsub.f32 %v2911, %v2975
      %v2992 = vsub.f32 %v2912, %v2976
      %v2993 = vsub.f32 %v2913, %v2977
      %v2994 = vsub.f32 %v2914, %v2978
      %v2995 = vsub.f32 %v2915, %v2979
      %v2996 = vsub.f32 %v2916, %v2980
      %v2997 = vsub.f32 %v2917, %v2981
      %v2998 = vsub.f32 %v2918, %v2982
      %v2999 = vsub.f32 %v2919, %v2983
      %v3000 = vsub.f32 %v2920, %v2984
      %v3001 = vsub.f32 %v2921, %v2985
      %v3002 = vsub.f32 %v2922, %v2986
      %v3003 = vmul.f32 %v2987, %v2987
      %v3004 = vmul.f32 %v2988, %v2988
      %v3005 = vmul.f32 %v2989, %v2989
      %v3006 = vmul.f32 %v2990, %v2990
      %v3007 = vmul.f32 %v2991, %v2991
      %v3008 = vmul.f32 %v2992, %v2992
      %v3009 = vmul.f32 %v2993, %v2993
      %v3010 = vmul.f32 %v2994, %v2994
      %v3011 = vmul.f32 %v2995, %v2995
      %v3012 = vmul.f32 %v2996, %v2996
      %v3013 = vmul.f32 %v2997, %v2997
      %v3014 = vmul.f32 %v2998, %v2998
      %v3015 = vmul.f32 %v2999, %v2999
      %v3016 = vmul.f32 %v3000, %v3000
      %v3017 = vmul.f32 %v3001, %v3001
      %v3018 = vmul.f32 %v3002, %v3002
      %v3019 = vsel %vm854, %v3003, 0.0
      %3020 = vadd.xlane.f32.xlu0 %v3019
      %v3021 = vpop.xlane.xlu0 %3020
      %v3022 = vsel %vm854, %v3004, 0.0
      %3023 = vadd.xlane.f32.xlu0 %v3022
      %v3024 = vpop.xlane.xlu0 %3023
      %v3025 = vsel %vm854, %v3005, 0.0
      %3026 = vadd.xlane.f32.xlu0 %v3025
      %v3027 = vpop.xlane.xlu0 %3026
      %v3028 = vsel %vm854, %v3006, 0.0
      %3029 = vadd.xlane.f32.xlu0 %v3028
      %v3030 = vpop.xlane.xlu0 %3029
      %v3031 = vsel %vm854, %v3007, 0.0
      %3032 = vadd.xlane.f32.xlu0 %v3031
      %v3033 = vpop.xlane.xlu0 %3032
      %v3034 = vsel %vm854, %v3008, 0.0
      %3035 = vadd.xlane.f32.xlu0 %v3034
      %v3036 = vpop.xlane.xlu0 %3035
      %v3037 = vsel %vm854, %v3009, 0.0
      %3038 = vadd.xlane.f32.xlu0 %v3037
      %v3039 = vpop.xlane.xlu0 %3038
      %v3040 = vsel %vm854, %v3010, 0.0
      %3041 = vadd.xlane.f32.xlu0 %v3040
      %v3042 = vpop.xlane.xlu0 %3041
      %v3043 = vsel %vm854, %v3011, 0.0
      %3044 = vadd.xlane.f32.xlu0 %v3043
      %v3045 = vpop.xlane.xlu0 %3044
      %v3046 = vsel %vm854, %v3012, 0.0
      %3047 = vadd.xlane.f32.xlu0 %v3046
      %v3048 = vpop.xlane.xlu0 %3047
      %v3049 = vsel %vm854, %v3013, 0.0
      %3050 = vadd.xlane.f32.xlu0 %v3049
      %v3051 = vpop.xlane.xlu0 %3050
      %v3052 = vsel %vm854, %v3014, 0.0
      %3053 = vadd.xlane.f32.xlu0 %v3052
      %v3054 = vpop.xlane.xlu0 %3053
      %v3055 = vsel %vm854, %v3015, 0.0
      %3056 = vadd.xlane.f32.xlu0 %v3055
      %v3057 = vpop.xlane.xlu0 %3056
      %v3058 = vsel %vm854, %v3016, 0.0
      %3059 = vadd.xlane.f32.xlu0 %v3058
      %v3060 = vpop.xlane.xlu0 %3059
      %v3061 = vsel %vm854, %v3017, 0.0
      %3062 = vadd.xlane.f32.xlu0 %v3061
      %v3063 = vpop.xlane.xlu0 %3062
      %v3064 = vsel %vm854, %v3018, 0.0
      %3065 = vadd.xlane.f32.xlu0 %v3064
      %v3066 = vpop.xlane.xlu0 %3065
      %v3067 = vmul.f32 %v3021, %v909
      %v3068 = vmul.f32 %v3024, %v909
      %v3069 = vmul.f32 %v3027, %v909
      %v3070 = vmul.f32 %v3030, %v909
      %v3071 = vmul.f32 %v3033, %v909
      %v3072 = vmul.f32 %v3036, %v909
      %v3073 = vmul.f32 %v3039, %v909
      %v3074 = vmul.f32 %v3042, %v909
      %v3075 = vmul.f32 %v3045, %v909
      %v3076 = vmul.f32 %v3048, %v909
      %v3077 = vmul.f32 %v3051, %v909
      %v3078 = vmul.f32 %v3054, %v909
      %v3079 = vmul.f32 %v3057, %v909
      %v3080 = vmul.f32 %v3060, %v909
      %v3081 = vmul.f32 %v3063, %v909
      %v3082 = vmul.f32 %v3066, %v909
      %v3083 = vadd.f32 %v3067, 1e-08
      %v3084 = vadd.f32 %v3068, 1e-08
      %v3085 = vadd.f32 %v3069, 1e-08
      %v3086 = vadd.f32 %v3070, 1e-08
      %v3087 = vadd.f32 %v3071, 1e-08
      %v3088 = vadd.f32 %v3072, 1e-08
      %v3089 = vadd.f32 %v3073, 1e-08
      %v3090 = vadd.f32 %v3074, 1e-08
      %v3091 = vadd.f32 %v3075, 1e-08
      %v3092 = vadd.f32 %v3076, 1e-08
      %v3093 = vadd.f32 %v3077, 1e-08
      %v3094 = vadd.f32 %v3078, 1e-08
      %v3095 = vadd.f32 %v3079, 1e-08
      %v3096 = vadd.f32 %v3080, 1e-08
      %v3097 = vadd.f32 %v3081, 1e-08
      %v3098 = vadd.f32 %v3082, 1e-08
      %v3099 = vrsqrt.pop %v3083
      %v3100 = vmul.f32 %v3099, %v3083
      %v3101 = vmul.f32 %v3100, %v3099
      %v3102 = vmul.f32 0.5, %v3101
      %v3103 = vsub.f32 1.5, %v3102
      %v3104 = vmul.f32 %v3099, %v3103
      %vm3105 = vweird.f32 %v3083
      %vm3106 = vweird.f32 %v3099
      %vm3107 = vmor %vm3105, %vm3106
      %v3108 = vsel %vm3107, %v3099, %v3104
      %v3109 = vrsqrt.pop %v3084
      %v3110 = vmul.f32 %v3109, %v3084
      %v3111 = vmul.f32 %v3110, %v3109
      %v3112 = vmul.f32 0.5, %v3111
      %v3113 = vsub.f32 1.5, %v3112
      %v3114 = vmul.f32 %v3109, %v3113
      %vm3115 = vweird.f32 %v3084
      %vm3116 = vweird.f32 %v3109
      %vm3117 = vmor %vm3115, %vm3116
      %v3118 = vsel %vm3117, %v3109, %v3114
      %v3119 = vrsqrt.pop %v3085
      %v3120 = vmul.f32 %v3119, %v3085
      %v3121 = vmul.f32 %v3120, %v3119
      %v3122 = vmul.f32 0.5, %v3121
      %v3123 = vsub.f32 1.5, %v3122
      %v3124 = vmul.f32 %v3119, %v3123
      %vm3125 = vweird.f32 %v3085
      %vm3126 = vweird.f32 %v3119
      %vm3127 = vmor %vm3125, %vm3126
      %v3128 = vsel %vm3127, %v3119, %v3124
      %v3129 = vrsqrt.pop %v3086
      %v3130 = vmul.f32 %v3129, %v3086
      %v3131 = vmul.f32 %v3130, %v3129
      %v3132 = vmul.f32 0.5, %v3131
      %v3133 = vsub.f32 1.5, %v3132
      %v3134 = vmul.f32 %v3129, %v3133
      %vm3135 = vweird.f32 %v3086
      %vm3136 = vweird.f32 %v3129
      %vm3137 = vmor %vm3135, %vm3136
      %v3138 = vsel %vm3137, %v3129, %v3134
      %v3139 = vrsqrt.pop %v3087
      %v3140 = vmul.f32 %v3139, %v3087
      %v3141 = vmul.f32 %v3140, %v3139
      %v3142 = vmul.f32 0.5, %v3141
      %v3143 = vsub.f32 1.5, %v3142
      %v3144 = vmul.f32 %v3139, %v3143
      %vm3145 = vweird.f32 %v3087
      %vm3146 = vweird.f32 %v3139
      %vm3147 = vmor %vm3145, %vm3146
      %v3148 = vsel %vm3147, %v3139, %v3144
      %v3149 = vrsqrt.pop %v3088
      %v3150 = vmul.f32 %v3149, %v3088
      %v3151 = vmul.f32 %v3150, %v3149
      %v3152 = vmul.f32 0.5, %v3151
      %v3153 = vsub.f32 1.5, %v3152
      %v3154 = vmul.f32 %v3149, %v3153
      %vm3155 = vweird.f32 %v3088
      %vm3156 = vweird.f32 %v3149
      %vm3157 = vmor %vm3155, %vm3156
      %v3158 = vsel %vm3157, %v3149, %v3154
      %v3159 = vrsqrt.pop %v3089
      %v3160 = vmul.f32 %v3159, %v3089
      %v3161 = vmul.f32 %v3160, %v3159
      %v3162 = vmul.f32 0.5, %v3161
      %v3163 = vsub.f32 1.5, %v3162
      %v3164 = vmul.f32 %v3159, %v3163
      %vm3165 = vweird.f32 %v3089
      %vm3166 = vweird.f32 %v3159
      %vm3167 = vmor %vm3165, %vm3166
      %v3168 = vsel %vm3167, %v3159, %v3164
      %v3169 = vrsqrt.pop %v3090
      %v3170 = vmul.f32 %v3169, %v3090
      %v3171 = vmul.f32 %v3170, %v3169
      %v3172 = vmul.f32 0.5, %v3171
      %v3173 = vsub.f32 1.5, %v3172
      %v3174 = vmul.f32 %v3169, %v3173
      %vm3175 = vweird.f32 %v3090
      %vm3176 = vweird.f32 %v3169
      %vm3177 = vmor %vm3175, %vm3176
      %v3178 = vsel %vm3177, %v3169, %v3174
      %v3179 = vrsqrt.pop %v3091
      %v3180 = vmul.f32 %v3179, %v3091
      %v3181 = vmul.f32 %v3180, %v3179
      %v3182 = vmul.f32 0.5, %v3181
      %v3183 = vsub.f32 1.5, %v3182
      %v3184 = vmul.f32 %v3179, %v3183
      %vm3185 = vweird.f32 %v3091
      %vm3186 = vweird.f32 %v3179
      %vm3187 = vmor %vm3185, %vm3186
      %v3188 = vsel %vm3187, %v3179, %v3184
      %v3189 = vrsqrt.pop %v3092
      %v3190 = vmul.f32 %v3189, %v3092
      %v3191 = vmul.f32 %v3190, %v3189
      %v3192 = vmul.f32 0.5, %v3191
      %v3193 = vsub.f32 1.5, %v3192
      %v3194 = vmul.f32 %v3189, %v3193
      %vm3195 = vweird.f32 %v3092
      %vm3196 = vweird.f32 %v3189
      %vm3197 = vmor %vm3195, %vm3196
      %v3198 = vsel %vm3197, %v3189, %v3194
      %v3199 = vrsqrt.pop %v3093
      %v3200 = vmul.f32 %v3199, %v3093
      %v3201 = vmul.f32 %v3200, %v3199
      %v3202 = vmul.f32 0.5, %v3201
      %v3203 = vsub.f32 1.5, %v3202
      %v3204 = vmul.f32 %v3199, %v3203
      %vm3205 = vweird.f32 %v3093
      %vm3206 = vweird.f32 %v3199
      %vm3207 = vmor %vm3205, %vm3206
      %v3208 = vsel %vm3207, %v3199, %v3204
      %v3209 = vrsqrt.pop %v3094
      %v3210 = vmul.f32 %v3209, %v3094
      %v3211 = vmul.f32 %v3210, %v3209
      %v3212 = vmul.f32 0.5, %v3211
      %v3213 = vsub.f32 1.5, %v3212
      %v3214 = vmul.f32 %v3209, %v3213
      %vm3215 = vweird.f32 %v3094
      %vm3216 = vweird.f32 %v3209
      %vm3217 = vmor %vm3215, %vm3216
      %v3218 = vsel %vm3217, %v3209, %v3214
      %v3219 = vrsqrt.pop %v3095
      %v3220 = vmul.f32 %v3219, %v3095
      %v3221 = vmul.f32 %v3220, %v3219
      %v3222 = vmul.f32 0.5, %v3221
      %v3223 = vsub.f32 1.5, %v3222
      %v3224 = vmul.f32 %v3219, %v3223
      %vm3225 = vweird.f32 %v3095
      %vm3226 = vweird.f32 %v3219
      %vm3227 = vmor %vm3225, %vm3226
      %v3228 = vsel %vm3227, %v3219, %v3224
      %v3229 = vrsqrt.pop %v3096
      %v3230 = vmul.f32 %v3229, %v3096
      %v3231 = vmul.f32 %v3230, %v3229
      %v3232 = vmul.f32 0.5, %v3231
      %v3233 = vsub.f32 1.5, %v3232
      %v3234 = vmul.f32 %v3229, %v3233
      %vm3235 = vweird.f32 %v3096
      %vm3236 = vweird.f32 %v3229
      %vm3237 = vmor %vm3235, %vm3236
      %v3238 = vsel %vm3237, %v3229, %v3234
      %v3239 = vrsqrt.pop %v3097
      %v3240 = vmul.f32 %v3239, %v3097
      %v3241 = vmul.f32 %v3240, %v3239
      %v3242 = vmul.f32 0.5, %v3241
      %v3243 = vsub.f32 1.5, %v3242
      %v3244 = vmul.f32 %v3239, %v3243
      %vm3245 = vweird.f32 %v3097
      %vm3246 = vweird.f32 %v3239
      %vm3247 = vmor %vm3245, %vm3246
      %v3248 = vsel %vm3247, %v3239, %v3244
      %v3249 = vrsqrt.pop %v3098
      %v3250 = vmul.f32 %v3249, %v3098
      %v3251 = vmul.f32 %v3250, %v3249
      %v3252 = vmul.f32 0.5, %v3251
      %v3253 = vsub.f32 1.5, %v3252
      %v3254 = vmul.f32 %v3249, %v3253
      %vm3255 = vweird.f32 %v3098
      %vm3256 = vweird.f32 %v3249
      %vm3257 = vmor %vm3255, %vm3256
      %v3258 = vsel %vm3257, %v3249, %v3254
      %v3259 = vmul.f32 %v2987, %v3108
      %v3260 = vmul.f32 %v2988, %v3118
      %v3261 = vmul.f32 %v2989, %v3128
      %v3262 = vmul.f32 %v2990, %v3138
      %v3263 = vmul.f32 %v2991, %v3148
      %v3264 = vmul.f32 %v2992, %v3158
      %v3265 = vmul.f32 %v2993, %v3168
      %v3266 = vmul.f32 %v2994, %v3178
      %v3267 = vmul.f32 %v2995, %v3188
      %v3268 = vmul.f32 %v2996, %v3198
      %v3269 = vmul.f32 %v2997, %v3208
      %v3270 = vmul.f32 %v2998, %v3218
      %v3271 = vmul.f32 %v2999, %v3228
      %v3272 = vmul.f32 %v3000, %v3238
      %v3273 = vmul.f32 %v3001, %v3248
      %v3274 = vmul.f32 %v3002, %v3258
      %v3275 = vld [vmem:[%s16] sm:$0x1]
      %v3277 = vperm.slane %v3275, 0
      %v3279 = vmul.f32 %v3259, %v3277
      %v3280 = vmul.f32 %v3260, %v3277
      %v3281 = vmul.f32 %v3261, %v3277
      %v3282 = vmul.f32 %v3262, %v3277
      %v3283 = vmul.f32 %v3263, %v3277
      %v3284 = vmul.f32 %v3264, %v3277
      %v3285 = vmul.f32 %v3265, %v3277
      %v3286 = vmul.f32 %v3266, %v3277
      %v3287 = vmul.f32 %v3267, %v3277
      %v3288 = vmul.f32 %v3268, %v3277
      %v3289 = vmul.f32 %v3269, %v3277
      %v3290 = vmul.f32 %v3270, %v3277
      %v3291 = vmul.f32 %v3271, %v3277
      %v3292 = vmul.f32 %v3272, %v3277
      %v3293 = vmul.f32 %v3273, %v3277
      %v3294 = vmul.f32 %v3274, %v3277
      %v3295 = vld [vmem:[%s17] sm:$0x1]
      %v3297 = vperm.slane %v3295, 0
      %v3299 = vadd.f32 %v3279, %v3297
      %v3300 = vadd.f32 %v3280, %v3297
      %v3301 = vadd.f32 %v3281, %v3297
      %v3302 = vadd.f32 %v3282, %v3297
      %v3303 = vadd.f32 %v3283, %v3297
      %v3304 = vadd.f32 %v3284, %v3297
      %v3305 = vadd.f32 %v3285, %v3297
      %v3306 = vadd.f32 %v3286, %v3297
      %v3307 = vadd.f32 %v3287, %v3297
      %v3308 = vadd.f32 %v3288, %v3297
      %v3309 = vadd.f32 %v3289, %v3297
      %v3310 = vadd.f32 %v3290, %v3297
      %v3311 = vadd.f32 %v3291, %v3297
      %v3312 = vadd.f32 %v3292, %v3297
      %v3313 = vadd.f32 %v3293, %v3297
      %v3314 = vadd.f32 %v3294, %v3297
      %v3315 = vld [vmem:[%s687] sm:$0xf]
      %v3316 = vld [vmem:[%s687 + $0x4] sm:$0xf]
      %v3317 = vld [vmem:[%s687 + $0x8] sm:$0xf]
      %v3318 = vld [vmem:[%s687 + $0xc] sm:$0xf]
      %v3319 = vld [vmem:[%s687 + $0x10] sm:$0xf]
      %v3320 = vld [vmem:[%s687 + $0x14] sm:$0xf]
      %v3321 = vld [vmem:[%s687 + $0x18] sm:$0xf]
      %v3322 = vld [vmem:[%s687 + $0x1c] sm:$0xf]
      %v3323 = vld [vmem:[%s687 + $0x20] sm:$0xf]
      %v3324 = vld [vmem:[%s687 + $0x24] sm:$0xf]
      %v3325 = vld [vmem:[%s687 + $0x28] sm:$0xf]
      %v3326 = vld [vmem:[%s687 + $0x2c] sm:$0xf]
      %v3327 = vld [vmem:[%s687 + $0x30] sm:$0xf]
      %v3328 = vld [vmem:[%s687 + $0x34] sm:$0xf]
      %v3329 = vld [vmem:[%s687 + $0x38] sm:$0xf]
      %v3330 = vld [vmem:[%s687 + $0x3c] sm:$0xf]
      %v3331 = vunpack.c.l.bf16 %v3315
      %v3332 = vunpack.c.l.bf16 %v3316
      %v3333 = vunpack.c.l.bf16 %v3317
      %v3334 = vunpack.c.l.bf16 %v3318
      %v3335 = vunpack.c.l.bf16 %v3319
      %v3336 = vunpack.c.l.bf16 %v3320
      %v3337 = vunpack.c.l.bf16 %v3321
      %v3338 = vunpack.c.l.bf16 %v3322
      %v3339 = vunpack.c.l.bf16 %v3323
      %v3340 = vunpack.c.l.bf16 %v3324
      %v3341 = vunpack.c.l.bf16 %v3325
      %v3342 = vunpack.c.l.bf16 %v3326
      %v3343 = vunpack.c.l.bf16 %v3327
      %v3344 = vunpack.c.l.bf16 %v3328
      %v3345 = vunpack.c.l.bf16 %v3329
      %v3346 = vunpack.c.l.bf16 %v3330
      %v3347 = vmul.f32 %v3299, %v3331
      %v3348 = vmul.f32 %v3300, %v3332
      %v3349 = vmul.f32 %v3301, %v3333
      %v3350 = vmul.f32 %v3302, %v3334
      %v3351 = vmul.f32 %v3303, %v3335
      %v3352 = vmul.f32 %v3304, %v3336
      %v3353 = vmul.f32 %v3305, %v3337
      %v3354 = vmul.f32 %v3306, %v3338
      %v3355 = vmul.f32 %v3307, %v3339
      %v3356 = vmul.f32 %v3308, %v3340
      %v3357 = vmul.f32 %v3309, %v3341
      %v3358 = vmul.f32 %v3310, %v3342
      %v3359 = vmul.f32 %v3311, %v3343
      %v3360 = vmul.f32 %v3312, %v3344
      %v3361 = vmul.f32 %v3313, %v3345
      %v3362 = vmul.f32 %v3314, %v3346
      %v3363 = vsel %vm854, %v3347, 0.0
      %3364 = vadd.xlane.f32.xlu0 %v3363
      %v3365 = vpop.xlane.xlu0 %3364
      %v3366 = vsel %vm854, %v3348, 0.0
      %3367 = vadd.xlane.f32.xlu0 %v3366
      %v3368 = vpop.xlane.xlu0 %3367
      %v3369 = vsel %vm854, %v3349, 0.0
      %3370 = vadd.xlane.f32.xlu0 %v3369
      %v3371 = vpop.xlane.xlu0 %3370
      %v3372 = vsel %vm854, %v3350, 0.0
      %3373 = vadd.xlane.f32.xlu0 %v3372
      %v3374 = vpop.xlane.xlu0 %3373
      %v3375 = vsel %vm854, %v3351, 0.0
      %3376 = vadd.xlane.f32.xlu0 %v3375
      %v3377 = vpop.xlane.xlu0 %3376
      %v3378 = vsel %vm854, %v3352, 0.0
      %3379 = vadd.xlane.f32.xlu0 %v3378
      %v3380 = vpop.xlane.xlu0 %3379
      %v3381 = vsel %vm854, %v3353, 0.0
      %3382 = vadd.xlane.f32.xlu0 %v3381
      %v3383 = vpop.xlane.xlu0 %3382
      %v3384 = vsel %vm854, %v3354, 0.0
      %3385 = vadd.xlane.f32.xlu0 %v3384
      %v3386 = vpop.xlane.xlu0 %3385
      %v3387 = vsel %vm854, %v3355, 0.0
      %3388 = vadd.xlane.f32.xlu0 %v3387
      %v3389 = vpop.xlane.xlu0 %3388
      %v3390 = vsel %vm854, %v3356, 0.0
      %3391 = vadd.xlane.f32.xlu0 %v3390
      %v3392 = vpop.xlane.xlu0 %3391
      %v3393 = vsel %vm854, %v3357, 0.0
      %3394 = vadd.xlane.f32.xlu0 %v3393
      %v3395 = vpop.xlane.xlu0 %3394
      %v3396 = vsel %vm854, %v3358, 0.0
      %3397 = vadd.xlane.f32.xlu0 %v3396
      %v3398 = vpop.xlane.xlu0 %3397
      %v3399 = vsel %vm854, %v3359, 0.0
      %3400 = vadd.xlane.f32.xlu0 %v3399
      %v3401 = vpop.xlane.xlu0 %3400
      %v3402 = vsel %vm854, %v3360, 0.0
      %3403 = vadd.xlane.f32.xlu0 %v3402
      %v3404 = vpop.xlane.xlu0 %3403
      %v3405 = vsel %vm854, %v3361, 0.0
      %3406 = vadd.xlane.f32.xlu0 %v3405
      %v3407 = vpop.xlane.xlu0 %3406
      %v3408 = vsel %vm854, %v3362, 0.0
      %3409 = vadd.xlane.f32.xlu0 %v3408
      %v3410 = vpop.xlane.xlu0 %3409
      %v3411 = vld [vmem:[%s694] sm:$0xf]
      %v3412 = vld [vmem:[%s694 + $0x4] sm:$0xf]
      %v3413 = vld [vmem:[%s694 + $0x8] sm:$0xf]
      %v3414 = vld [vmem:[%s694 + $0xc] sm:$0xf]
      %v3415 = vld [vmem:[%s694 + $0x10] sm:$0xf]
      %v3416 = vld [vmem:[%s694 + $0x14] sm:$0xf]
      %v3417 = vld [vmem:[%s694 + $0x18] sm:$0xf]
      %v3418 = vld [vmem:[%s694 + $0x1c] sm:$0xf]
      %v3419 = vld [vmem:[%s694 + $0x20] sm:$0xf]
      %v3420 = vld [vmem:[%s694 + $0x24] sm:$0xf]
      %v3421 = vld [vmem:[%s694 + $0x28] sm:$0xf]
      %v3422 = vld [vmem:[%s694 + $0x2c] sm:$0xf]
      %v3423 = vld [vmem:[%s694 + $0x30] sm:$0xf]
      %v3424 = vld [vmem:[%s694 + $0x34] sm:$0xf]
      %v3425 = vld [vmem:[%s694 + $0x38] sm:$0xf]
      %v3426 = vld [vmem:[%s694 + $0x3c] sm:$0xf]
      %v3427 = vunpack.c.l.bf16 %v3411
      %v3428 = vunpack.c.l.bf16 %v3412
      %v3429 = vunpack.c.l.bf16 %v3413
      %v3430 = vunpack.c.l.bf16 %v3414
      %v3431 = vunpack.c.l.bf16 %v3415
      %v3432 = vunpack.c.l.bf16 %v3416
      %v3433 = vunpack.c.l.bf16 %v3417
      %v3434 = vunpack.c.l.bf16 %v3418
      %v3435 = vunpack.c.l.bf16 %v3419
      %v3436 = vunpack.c.l.bf16 %v3420
      %v3437 = vunpack.c.l.bf16 %v3421
      %v3438 = vunpack.c.l.bf16 %v3422
      %v3439 = vunpack.c.l.bf16 %v3423
      %v3440 = vunpack.c.l.bf16 %v3424
      %v3441 = vunpack.c.l.bf16 %v3425
      %v3442 = vunpack.c.l.bf16 %v3426
      %v3443 = vmul.f32 %v3299, %v3427
      %v3444 = vmul.f32 %v3300, %v3428
      %v3445 = vmul.f32 %v3301, %v3429
      %v3446 = vmul.f32 %v3302, %v3430
      %v3447 = vmul.f32 %v3303, %v3431
      %v3448 = vmul.f32 %v3304, %v3432
      %v3449 = vmul.f32 %v3305, %v3433
      %v3450 = vmul.f32 %v3306, %v3434
      %v3451 = vmul.f32 %v3307, %v3435
      %v3452 = vmul.f32 %v3308, %v3436
      %v3453 = vmul.f32 %v3309, %v3437
      %v3454 = vmul.f32 %v3310, %v3438
      %v3455 = vmul.f32 %v3311, %v3439
      %v3456 = vmul.f32 %v3312, %v3440
      %v3457 = vmul.f32 %v3313, %v3441
      %v3458 = vmul.f32 %v3314, %v3442
      %v3459 = vsel %vm854, %v3443, 0.0
      %3460 = vadd.xlane.f32.xlu0 %v3459
      %v3461 = vpop.xlane.xlu0 %3460
      %v3462 = vsel %vm854, %v3444, 0.0
      %3463 = vadd.xlane.f32.xlu0 %v3462
      %v3464 = vpop.xlane.xlu0 %3463
      %v3465 = vsel %vm854, %v3445, 0.0
      %3466 = vadd.xlane.f32.xlu0 %v3465
      %v3467 = vpop.xlane.xlu0 %3466
      %v3468 = vsel %vm854, %v3446, 0.0
      %3469 = vadd.xlane.f32.xlu0 %v3468
      %v3470 = vpop.xlane.xlu0 %3469
      %v3471 = vsel %vm854, %v3447, 0.0
      %3472 = vadd.xlane.f32.xlu0 %v3471
      %v3473 = vpop.xlane.xlu0 %3472
      %v3474 = vsel %vm854, %v3448, 0.0
      %3475 = vadd.xlane.f32.xlu0 %v3474
      %v3476 = vpop.xlane.xlu0 %3475
      %v3477 = vsel %vm854, %v3449, 0.0
      %3478 = vadd.xlane.f32.xlu0 %v3477
      %v3479 = vpop.xlane.xlu0 %3478
      %v3480 = vsel %vm854, %v3450, 0.0
      %3481 = vadd.xlane.f32.xlu0 %v3480
      %v3482 = vpop.xlane.xlu0 %3481
      %v3483 = vsel %vm854, %v3451, 0.0
      %3484 = vadd.xlane.f32.xlu0 %v3483
      %v3485 = vpop.xlane.xlu0 %3484
      %v3486 = vsel %vm854, %v3452, 0.0
      %3487 = vadd.xlane.f32.xlu0 %v3486
      %v3488 = vpop.xlane.xlu0 %3487
      %v3489 = vsel %vm854, %v3453, 0.0
      %3490 = vadd.xlane.f32.xlu0 %v3489
      %v3491 = vpop.xlane.xlu0 %3490
      %v3492 = vsel %vm854, %v3454, 0.0
      %3493 = vadd.xlane.f32.xlu0 %v3492
      %v3494 = vpop.xlane.xlu0 %3493
      %v3495 = vsel %vm854, %v3455, 0.0
      %3496 = vadd.xlane.f32.xlu0 %v3495
      %v3497 = vpop.xlane.xlu0 %3496
      %v3498 = vsel %vm854, %v3456, 0.0
      %3499 = vadd.xlane.f32.xlu0 %v3498
      %v3500 = vpop.xlane.xlu0 %3499
      %v3501 = vsel %vm854, %v3457, 0.0
      %3502 = vadd.xlane.f32.xlu0 %v3501
      %v3503 = vpop.xlane.xlu0 %3502
      %v3504 = vsel %vm854, %v3458, 0.0
      %3505 = vadd.xlane.f32.xlu0 %v3504
      %v3506 = vpop.xlane.xlu0 %3505
      %v3523 = vperm.slane %v3365, %v1748
      %v3524 = vadd.s32 %v1748, 4294967288
      %v3525 = vperm.slane %v3368, %v3524
      %vm3526 = vcmask 130112
      %v3527 = vsel %vm3526, %v3525, %v3523
      %v3528 = vperm.slane %v3371, %v1748
      %v3529 = vperm.slane %v3374, %v3524
      %v3530 = vsel %vm3526, %v3529, %v3528
      %v3531 = vperm.slane %v3377, %v1748
      %v3532 = vperm.slane %v3380, %v3524
      %v3533 = vsel %vm3526, %v3532, %v3531
      %v3534 = vperm.slane %v3383, %v1748
      %v3535 = vperm.slane %v3386, %v3524
      %v3536 = vsel %vm3526, %v3535, %v3534
      %v3537 = vperm.slane %v3389, %v1748
      %v3538 = vperm.slane %v3392, %v3524
      %v3539 = vsel %vm3526, %v3538, %v3537
      %v3540 = vperm.slane %v3395, %v1748
      %v3541 = vperm.slane %v3398, %v3524
      %v3542 = vsel %vm3526, %v3541, %v3540
      %v3543 = vperm.slane %v3401, %v1748
      %v3544 = vperm.slane %v3404, %v3524
      %v3545 = vsel %vm3526, %v3544, %v3543
      %v3546 = vperm.slane %v3407, %v1748
      %v3547 = vperm.slane %v3410, %v3524
      %v3548 = vsel %vm3526, %v3547, %v3546
      %vm3549 = vcmask 1041409
      %v3550 = vsel %vm3549, %v3530, %v3527
      %vm3551 = vcmask 1042434
      %v3552 = vsel %vm3551, %v3533, %v3550
      %vm3553 = vcmask 1043459
      %v3554 = vsel %vm3553, %v3536, %v3552
      %vm3555 = vcmask 1044484
      %v3556 = vsel %vm3555, %v3539, %v3554
      %vm3557 = vcmask 1045509
      %v3558 = vsel %vm3557, %v3542, %v3556
      %vm3559 = vcmask 1046534
      %v3560 = vsel %vm3559, %v3545, %v3558
      %vm3561 = vcmask 1047559
      %v3562 = vsel %vm3561, %v3548, %v3560
      %v3580 = vadd.s32 %v1748, 4294967280
      %v3581 = vperm.slane %v3461, %v3580
      %v3582 = vadd.s32 %v1748, 4294967272
      %v3583 = vperm.slane %v3464, %v3582
      %vm3584 = vcmask 261312
      %v3585 = vsel %vm3584, %v3583, %v3581
      %v3586 = vperm.slane %v3467, %v3580
      %v3587 = vperm.slane %v3470, %v3582
      %v3588 = vsel %vm3584, %v3587, %v3586
      %v3589 = vperm.slane %v3473, %v3580
      %v3590 = vperm.slane %v3476, %v3582
      %v3591 = vsel %vm3584, %v3590, %v3589
      %v3592 = vperm.slane %v3479, %v3580
      %v3593 = vperm.slane %v3482, %v3582
      %v3594 = vsel %vm3584, %v3593, %v3592
      %v3595 = vperm.slane %v3485, %v3580
      %v3596 = vperm.slane %v3488, %v3582
      %v3597 = vsel %vm3584, %v3596, %v3595
      %v3598 = vperm.slane %v3491, %v3580
      %v3599 = vperm.slane %v3494, %v3582
      %v3600 = vsel %vm3584, %v3599, %v3598
      %v3601 = vperm.slane %v3497, %v3580
      %v3602 = vperm.slane %v3500, %v3582
      %v3603 = vsel %vm3584, %v3602, %v3601
      %v3604 = vperm.slane %v3503, %v3580
      %v3605 = vperm.slane %v3506, %v3582
      %v3606 = vsel %vm3584, %v3605, %v3604
      %v3607 = vsel %vm3549, %v3588, %v3585
      %v3608 = vsel %vm3551, %v3591, %v3607
      %v3609 = vsel %vm3553, %v3594, %v3608
      %v3610 = vsel %vm3555, %v3597, %v3609
      %v3611 = vsel %vm3557, %v3600, %v3610
      %v3612 = vsel %vm3559, %v3603, %v3611
      %v3613 = vsel %vm3561, %v3606, %v3612
      %v3615 = vsel %vm1771, %v3562, %v3613
      %3616 = vst.msk [vmem:[%s699] sm:$0xff] %vm854, %v3615
      %p3617 = scmp.lt.s32.totalorder %s31, 1
      %s3618 = scalar_select %p3617, %s31, 1
      %s3619 = smul.addr %s3618, 8
      %s3620 = scalar_lea.vmem %s20, %s3619
      // Predicated region
      $region101: #{sas_forward.1} parent=99 // pred_check
        %p3621 = pneg %p489
      $region102: #{sas_forward.1} parent=99 // pred_check_branch
        %3623 = sbr.rel (%p3621) target = $region104
      $region103: #{sas_forward.1} parent=99 // pred_region
        _
      $region104: #{sas_forward.1} parent=99 // pred_fallthru
        _
    $region100: #{sas_forward.1} parent=5 // pred_fallthru
      _
    %p3624 = scmp.le.s32.totalorder 2, %s26
    // Predicated region
    $region105: #{sas_forward.1} parent=5 // pred_check
      %p3625 = pneg %p3624
    $region106: #{sas_forward.1} parent=5 // pred_check_branch
      %3627 = sbr.rel (%p3625) target = $region108
    $region107: #{sas_forward.1} parent=5 // pred_region
      %s3628 = ssub.s32 %s26, 2
      // Predicated region
      $region109: #{sas_forward.1} parent=107 // pred_check
        %p3629 = pneg %p495
      $region110: #{sas_forward.1} parent=107 // pred_check_branch
        %3631 = sbr.rel (%p3629) target = $region112
      $region111: #{sas_forward.1} parent=107 // pred_region
        %p3632 = scmp.lt.s32.totalorder %s32, 1
        %s3633 = scalar_select %p3632, %s32, 1
        %s3634 = smul.addr %s3633, 8
        %s3635 = scalar_lea.vmem %s20, %s3634
      $region112: #{sas_forward.1} parent=107 // pred_fallthru
        _
    $region108: #{sas_forward.1} parent=5 // pred_fallthru
      _
  $region6: #{sas_forward.1} parent=0 // loop_footer
    %s30 = sadd.s32 1, %s26
  $region7: #{sas_forward.1} parent=0 // loop_footer_branch
    %25 = sbr.rel target = $region3
  $region8: #{sas_forward.1} parent=0 // loop_exit
    _

</llo_original>
